<compile_context>
chip_gen: v5e
topology: v5e:2x2
jax: 0.10.0
libtpu: 0.0.40
codegen_flags: <defaults>
</compile_context>

<pallas_src>
import numpy as np
import jax
import jax.numpy as jnp
from jax import lax
from jax.experimental import pallas as pl
from jax.experimental.pallas import tpu as pltpu


def make_crop(height, width, height_target, width_target, batch_tile=256):
    """Returns crop(inputs[B,H,W] int, coordinates[B,2]) -> [B,Ht,Wt] int32."""
    H, W, HT, WT = height, width, height_target, width_target

    # torch: _step_to_range uses arange(-n // 2, n // 2)  (Python floor division).
    start_h = (-HT) // 2
    start_w = (-WT) // 2
    # Unnormalized sample coordinates (align_corners=True):
    #   iy[b, i] = y_b + ch + i,   ix[b, j] = x_b + cw + j
    ch = (H - 1) / 2.0 - (H // 2) + start_h
    cw = (W - 1) / 2.0 - (W // 2) + start_w

    def kernel(coords_ref, inp_ref, out_ref):
        # Blocks (batch-last / lane-dense):
        #   coords_ref: [2, tb] f32   (row 0 = x, row 1 = y)
        #   inp_ref:    [H, W, tb] int
        #   out_ref:    [HT, WT, tb] int32
        tb = inp_ref.shape[-1]
        xy = coords_ref[...]                                    # [2, tb]
        x = xy[0:1, :][None, :, :]                              # [1, 1, tb]
        y = xy[1:2, :][None, :, :]                              # [1, 1, tb]

        # iy[i, 0, b] = y_b + ch + i ;  ix[0, j, b] = x_b + cw + j
        i_idx = lax.broadcasted_iota(jnp.int32, (HT, 1, tb), 0).astype(jnp.float32)
        j_idx = lax.broadcasted_iota(jnp.int32, (1, WT, tb), 1).astype(jnp.float32)
        iy = y + (jnp.float32(ch) + i_idx)                      # [HT, 1, tb]
        ix = x + (jnp.float32(cw) + j_idx)                      # [1, WT, tb]

        zero = jnp.float32(0.0)
        one = jnp.float32(1.0)

        # Pass 1: contract over image rows h (VPU broadcast multiply-adds, batch in
        # lanes; the int->f32 cast is fused per row).
        #   tmp[i, w, b] = sum_h max(0, 1 - |iy[i,b] - h|) * img[h, w, b]
        def row_term(h):
            wy_h = jnp.maximum(zero, one - jnp.abs(iy - jnp.float32(h)))   # [HT, 1, tb]
            row = inp_ref[h].astype(jnp.float32)[None, :, :]               # [1, W, tb]
            return wy_h * row                                              # [HT, W, tb]

        tmp = row_term(0)
        for h in range(1, H):
            tmp = tmp + row_term(h)

        # Pass 2: contract over image columns w.
        #   out[i, j, b] = sum_w tmp[i, w, b] * max(0, 1 - |ix[j,b] - w|)
        def col_term(w):
            wx_w = jnp.maximum(zero, one - jnp.abs(ix - jnp.float32(w)))   # [1, WT, tb]
            return tmp[:, w:w + 1, :] * wx_w                               # [HT, WT, tb]

        acc = col_term(0)
        for w in range(1, W):
            acc = acc + col_term(w)

        # torch.round is round-half-to-even == jnp.round; do not "optimize" to floor(x+0.5).
        # TODO(synk): torch returns int64 (.long()); int32 used here, values identical.
        out_ref[...] = jnp.round(acc).astype(jnp.int32)

    def crop(inputs, coordinates):
        B, Hi, Wi = inputs.shape
        assert Hi == H and Wi == W

        # Lane-dense (batch-last) layout: one XLA transpose in, a tiny one out.
        inp_t = jnp.transpose(inputs, (1, 2, 0))                            # [H, W, B]
        coords_t = jnp.transpose(coordinates.astype(jnp.float32), (1, 0))   # [2, B]

        # Tile selection: multiple of 128 (lane width); keep >=2 grid steps when the
        # batch spans more than one lane group ("parallel" can split over v7x's 2 TCs).
        tb = max(128, (batch_tile // 128) * 128)
        bp_min = ((B + 127) // 128) * 128
        if bp_min > 128:
            tb = min(tb, max(128, ((bp_min // 2 + 127) // 128) * 128))
        tb = min(tb, bp_min)
        n_steps = pl.cdiv(bp_min, tb)
        Bp = n_steps * tb
        if Bp != B:
            inp_t = jnp.pad(inp_t, ((0, 0), (0, 0), (0, Bp - B)))
            coords_t = jnp.pad(coords_t, ((0, 0), (0, Bp - B)))

        grid_spec = pl.GridSpec(
            grid=(n_steps,),
            in_specs=[
                pl.BlockSpec((2, tb), lambda b: (0, b)),
                pl.BlockSpec((H, W, tb), lambda b: (0, 0, b)),
            ],
            out_specs=pl.BlockSpec((HT, WT, tb), lambda b: (0, 0, b)),
        )
        out = pl.pallas_call(
            kernel,
            out_shape=jax.ShapeDtypeStruct((HT, WT, Bp), jnp.int32),
            grid_spec=grid_spec,
            # Batch axis is fully independent -> "parallel" (v7x two-TC sharding).
            compiler_params=pltpu.CompilerParams(dimension_semantics=("parallel",)),
        )(coords_t, inp_t)
        return jnp.transpose(out[:, :, :B], (2, 0, 1))                      # [B, HT, WT]

    return crop


def crop_reference(inputs, coordinates, height, width, height_target, width_target):
    """Plain numpy reference: explicit bilinear grid_sample (align_corners=True, zeros pad)."""
    inputs = np.asarray(inputs, dtype=np.float32)
    coords = np.asarray(coordinates)
    B = inputs.shape[0]
    start_h = (-height_target) // 2
    start_w = (-width_target) // 2
    out = np.zeros((B, height_target, width_target), dtype=np.int32)
    for b in range(B):
        x = float(coords[b, 0])
        y = float(coords[b, 1])
        for i in range(height_target):
            iy = y + (height - 1) / 2.0 - (height // 2) + start_h + i
            for j in range(width_target):
                ix = x + (width - 1) / 2.0 - (width // 2) + start_w + j
                ix0 = int(np.floor(ix))
                iy0 = int(np.floor(iy))
                acc = 0.0
                for dy in (0, 1):
                    for dx in (0, 1):
                        hh, ww = iy0 + dy, ix0 + dx
                        if 0 <= hh < height and 0 <= ww < width:
                            wgt = (1.0 - abs(ix - ww)) * (1.0 - abs(iy - hh))
                            acc += wgt * float(inputs[b, hh, ww])
                out[b, i, j] = int(np.round(acc))
    return out


if __name__ == "__main__":
    # Small shapes consistent with the module's forward: inputs [B,H,W], coords [B,2].
    H, W = 16, 20
    HT, WT = 9, 9
    B = 200  # spans two 128-lane tiles -> exercises multi-step grid + batch padding

    key = jax.random.PRNGKey(0)
    k1, k2, k3 = jax.random.split(key, 3)
    inputs = jax.random.randint(k1, (B, H, W), 0, 64, dtype=jnp.int32)   # glyph-like ints
    xs = jax.random.randint(k2, (B,), 0, W, dtype=jnp.int32)
    ys = jax.random.randint(k3, (B,), 0, H, dtype=jnp.int32)
    coords = jnp.stack([xs, ys], axis=1)                                  # [B, 2] (x, y)

    crop = jax.jit(make_crop(H, W, HT, WT, batch_tile=128))

    # Integer coordinates (the NetHack use case).
    out = jax.block_until_ready(crop(inputs, coords))
    ref = crop_reference(np.array(inputs), np.array(coords), H, W, HT, WT)
    assert out.shape == (B, HT, WT)
    assert out.dtype == jnp.int32
    assert np.array_equal(np.array(out), ref), (np.array(out), ref)

    # Fractional coordinates exercise the true bilinear blend path (exact in f32).
    coords_f = coords.astype(jnp.float32) + 0.25
    out_f = jax.block_until_ready(crop(inputs, coords_f))
    ref_f = crop_reference(np.array(inputs), np.array(coords_f), H, W, HT, WT)
    assert np.array_equal(np.array(out_f), ref_f), (np.array(out_f), ref_f)

    print("KERNEL_OK")
</pallas_src>

<mosaic_0001>
module attributes {stable_mosaic.version = 11 : i64} {
  func.func @kernel(%arg0: i32, %arg1: memref<2x128xf32, #tpu.memory_space<vmem>>, %arg2: memref<16x20x128xi32, #tpu.memory_space<vmem>>, %arg3: memref<9x9x128xi32, #tpu.memory_space<vmem>>) attributes {dimension_semantics = [#tpu.dimension_semantics<parallel>], iteration_bounds = array<i64: 2>, scalar_prefetch = 0 : i64, scratch_operands = 0 : i64, tpu.core_type = #tpu.core_type<tc>, window_params = [{transform_indices = @transform_0, window_bounds = array<i64: 2, 128>}, {transform_indices = @transform_1, window_bounds = array<i64: 16, 20, 128>}, {transform_indices = @transform_2, window_bounds = array<i64: 9, 9, 128>}]} {
    %c0 = arith.constant 0 : index
    %c0_0 = arith.constant 0 : index
    %0 = vector.load %arg1[%c0, %c0_0] : memref<2x128xf32, #tpu.memory_space<vmem>>, vector<2x128xf32>
    %1 = vector.extract_strided_slice %0 {offsets = [0, 0], sizes = [1, 128], strides = [1, 1]} : vector<2x128xf32> to vector<1x128xf32>
    %2 = vector.shape_cast %1 : vector<1x128xf32> to vector<1x1x128xf32>
    %3 = vector.extract_strided_slice %0 {offsets = [1, 0], sizes = [1, 128], strides = [1, 1]} : vector<2x128xf32> to vector<1x128xf32>
    %4 = vector.shape_cast %3 : vector<1x128xf32> to vector<1x1x128xf32>
    %5 = tpu.iota {dimensions = array<i32: 0>} : vector<9x1x128xi32>
    %6 = arith.sitofp %5 : vector<9x1x128xi32> to vector<9x1x128xf32>
    %7 = tpu.iota {dimensions = array<i32: 1>} : vector<1x9x128xi32>
    %8 = arith.sitofp %7 : vector<1x9x128xi32> to vector<1x9x128xf32>
    %cst = arith.constant -5.500000e+00 : f32
    %9 = vector.broadcast %cst : f32 to vector<9x1x128xf32>
    %10 = arith.addf %9, %6 : vector<9x1x128xf32>
    %11 = vector.broadcast %4 : vector<1x1x128xf32> to vector<9x1x128xf32>
    %12 = arith.addf %11, %10 : vector<9x1x128xf32>
    %cst_1 = arith.constant -5.500000e+00 : f32
    %13 = vector.broadcast %cst_1 : f32 to vector<1x9x128xf32>
    %14 = arith.addf %13, %8 : vector<1x9x128xf32>
    %15 = vector.broadcast %2 : vector<1x1x128xf32> to vector<1x9x128xf32>
    %16 = arith.addf %15, %14 : vector<1x9x128xf32>
    %cst_2 = arith.constant 0.000000e+00 : f32
    %17 = vector.broadcast %cst_2 : f32 to vector<9x1x128xf32>
    %18 = arith.subf %12, %17 : vector<9x1x128xf32>
    %19 = math.absf %18 : vector<9x1x128xf32>
    %cst_3 = arith.constant 1.000000e+00 : f32
    %20 = vector.broadcast %cst_3 : f32 to vector<9x1x128xf32>
    %21 = arith.subf %20, %19 : vector<9x1x128xf32>
    %cst_4 = arith.constant 0.000000e+00 : f32
    %22 = vector.broadcast %cst_4 : f32 to vector<9x1x128xf32>
    %23 = arith.maximumf %22, %21 : vector<9x1x128xf32>
    %c0_5 = arith.constant 0 : index
    %c0_6 = arith.constant 0 : index
    %c0_7 = arith.constant 0 : index
    %24 = vector.load %arg2[%c0_5, %c0_6, %c0_7] : memref<16x20x128xi32, #tpu.memory_space<vmem>>, vector<1x20x128xi32>
    %25 = vector.shape_cast %24 : vector<1x20x128xi32> to vector<20x128xi32>
    %26 = arith.sitofp %25 : vector<20x128xi32> to vector<20x128xf32>
    %27 = vector.shape_cast %26 : vector<20x128xf32> to vector<1x20x128xf32>
    %28 = vector.broadcast %23 : vector<9x1x128xf32> to vector<9x20x128xf32>
    %29 = vector.broadcast %27 : vector<1x20x128xf32> to vector<9x20x128xf32>
    %30 = arith.mulf %28, %29 : vector<9x20x128xf32>
    %cst_8 = arith.constant 1.000000e+00 : f32
    %31 = vector.broadcast %cst_8 : f32 to vector<9x1x128xf32>
    %32 = arith.subf %12, %31 : vector<9x1x128xf32>
    %33 = math.absf %32 : vector<9x1x128xf32>
    %cst_9 = arith.constant 1.000000e+00 : f32
    %34 = vector.broadcast %cst_9 : f32 to vector<9x1x128xf32>
    %35 = arith.subf %34, %33 : vector<9x1x128xf32>
    %cst_10 = arith.constant 0.000000e+00 : f32
    %36 = vector.broadcast %cst_10 : f32 to vector<9x1x128xf32>
    %37 = arith.maximumf %36, %35 : vector<9x1x128xf32>
    %c1 = arith.constant 1 : index
    %c0_11 = arith.constant 0 : index
    %c0_12 = arith.constant 0 : index
    %38 = vector.load %arg2[%c1, %c0_11, %c0_12] : memref<16x20x128xi32, #tpu.memory_space<vmem>>, vector<1x20x128xi32>
    %39 = vector.shape_cast %38 : vector<1x20x128xi32> to vector<20x128xi32>
    %40 = arith.sitofp %39 : vector<20x128xi32> to vector<20x128xf32>
    %41 = vector.shape_cast %40 : vector<20x128xf32> to vector<1x20x128xf32>
    %42 = vector.broadcast %37 : vector<9x1x128xf32> to vector<9x20x128xf32>
    %43 = vector.broadcast %41 : vector<1x20x128xf32> to vector<9x20x128xf32>
    %44 = arith.mulf %42, %43 : vector<9x20x128xf32>
    %45 = arith.addf %30, %44 : vector<9x20x128xf32>
    %cst_13 = arith.constant 2.000000e+00 : f32
    %46 = vector.broadcast %cst_13 : f32 to vector<9x1x128xf32>
    %47 = arith.subf %12, %46 : vector<9x1x128xf32>
    %48 = math.absf %47 : vector<9x1x128xf32>
    %cst_14 = arith.constant 1.000000e+00 : f32
    %49 = vector.broadcast %cst_14 : f32 to vector<9x1x128xf32>
    %50 = arith.subf %49, %48 : vector<9x1x128xf32>
    %cst_15 = arith.constant 0.000000e+00 : f32
    %51 = vector.broadcast %cst_15 : f32 to vector<9x1x128xf32>
    %52 = arith.maximumf %51, %50 : vector<9x1x128xf32>
    %c2 = arith.constant 2 : index
    %c0_16 = arith.constant 0 : index
    %c0_17 = arith.constant 0 : index
    %53 = vector.load %arg2[%c2, %c0_16, %c0_17] : memref<16x20x128xi32, #tpu.memory_space<vmem>>, vector<1x20x128xi32>
    %54 = vector.shape_cast %53 : vector<1x20x128xi32> to vector<20x128xi32>
    %55 = arith.sitofp %54 : vector<20x128xi32> to vector<20x128xf32>
    %56 = vector.shape_cast %55 : vector<20x128xf32> to vector<1x20x128xf32>
    %57 = vector.broadcast %52 : vector<9x1x128xf32> to vector<9x20x128xf32>
    %58 = vector.broadcast %56 : vector<1x20x128xf32> to vector<9x20x128xf32>
    %59 = arith.mulf %57, %58 : vector<9x20x128xf32>
    %60 = arith.addf %45, %59 : vector<9x20x128xf32>
    %cst_18 = arith.constant 3.000000e+00 : f32
    %61 = vector.broadcast %cst_18 : f32 to vector<9x1x128xf32>
    %62 = arith.subf %12, %61 : vector<9x1x128xf32>
    %63 = math.absf %62 : vector<9x1x128xf32>
    %cst_19 = arith.constant 1.000000e+00 : f32
    %64 = vector.broadcast %cst_19 : f32 to vector<9x1x128xf32>
    %65 = arith.subf %64, %63 : vector<9x1x128xf32>
    %cst_20 = arith.constant 0.000000e+00 : f32
    %66 = vector.broadcast %cst_20 : f32 to vector<9x1x128xf32>
    %67 = arith.maximumf %66, %65 : vector<9x1x128xf32>
    %c3 = arith.constant 3 : index
    %c0_21 = arith.constant 0 : index
    %c0_22 = arith.constant 0 : index
    %68 = vector.load %arg2[%c3, %c0_21, %c0_22] : memref<16x20x128xi32, #tpu.memory_space<vmem>>, vector<1x20x128xi32>
    %69 = vector.shape_cast %68 : vector<1x20x128xi32> to vector<20x128xi32>
    %70 = arith.sitofp %69 : vector<20x128xi32> to vector<20x128xf32>
    %71 = vector.shape_cast %70 : vector<20x128xf32> to vector<1x20x128xf32>
    %72 = vector.broadcast %67 : vector<9x1x128xf32> to vector<9x20x128xf32>
    %73 = vector.broadcast %71 : vector<1x20x128xf32> to vector<9x20x128xf32>
    %74 = arith.mulf %72, %73 : vector<9x20x128xf32>
    %75 = arith.addf %60, %74 : vector<9x20x128xf32>
    %cst_23 = arith.constant 4.000000e+00 : f32
    %76 = vector.broadcast %cst_23 : f32 to vector<9x1x128xf32>
    %77 = arith.subf %12, %76 : vector<9x1x128xf32>
    %78 = math.absf %77 : vector<9x1x128xf32>
    %cst_24 = arith.constant 1.000000e+00 : f32
    %79 = vector.broadcast %cst_24 : f32 to vector<9x1x128xf32>
    %80 = arith.subf %79, %78 : vector<9x1x128xf32>
    %cst_25 = arith.constant 0.000000e+00 : f32
    %81 = vector.broadcast %cst_25 : f32 to vector<9x1x128xf32>
    %82 = arith.maximumf %81, %80 : vector<9x1x128xf32>
    %c4 = arith.constant 4 : index
    %c0_26 = arith.constant 0 : index
    %c0_27 = arith.constant 0 : index
    %83 = vector.load %arg2[%c4, %c0_26, %c0_27] : memref<16x20x128xi32, #tpu.memory_space<vmem>>, vector<1x20x128xi32>
    %84 = vector.shape_cast %83 : vector<1x20x128xi32> to vector<20x128xi32>
    %85 = arith.sitofp %84 : vector<20x128xi32> to vector<20x128xf32>
    %86 = vector.shape_cast %85 : vector<20x128xf32> to vector<1x20x128xf32>
    %87 = vector.broadcast %82 : vector<9x1x128xf32> to vector<9x20x128xf32>
    %88 = vector.broadcast %86 : vector<1x20x128xf32> to vector<9x20x128xf32>
    %89 = arith.mulf %87, %88 : vector<9x20x128xf32>
    %90 = arith.addf %75, %89 : vector<9x20x128xf32>
    %cst_28 = arith.constant 5.000000e+00 : f32
    %91 = vector.broadcast %cst_28 : f32 to vector<9x1x128xf32>
    %92 = arith.subf %12, %91 : vector<9x1x128xf32>
    %93 = math.absf %92 : vector<9x1x128xf32>
    %cst_29 = arith.constant 1.000000e+00 : f32
    %94 = vector.broadcast %cst_29 : f32 to vector<9x1x128xf32>
    %95 = arith.subf %94, %93 : vector<9x1x128xf32>
    %cst_30 = arith.constant 0.000000e+00 : f32
    %96 = vector.broadcast %cst_30 : f32 to vector<9x1x128xf32>
    %97 = arith.maximumf %96, %95 : vector<9x1x128xf32>
    %c5 = arith.constant 5 : index
    %c0_31 = arith.constant 0 : index
    %c0_32 = arith.constant 0 : index
    %98 = vector.load %arg2[%c5, %c0_31, %c0_32] : memref<16x20x128xi32, #tpu.memory_space<vmem>>, vector<1x20x128xi32>
    %99 = vector.shape_cast %98 : vector<1x20x128xi32> to vector<20x128xi32>
    %100 = arith.sitofp %99 : vector<20x128xi32> to vector<20x128xf32>
    %101 = vector.shape_cast %100 : vector<20x128xf32> to vector<1x20x128xf32>
    %102 = vector.broadcast %97 : vector<9x1x128xf32> to vector<9x20x128xf32>
    %103 = vector.broadcast %101 : vector<1x20x128xf32> to vector<9x20x128xf32>
    %104 = arith.mulf %102, %103 : vector<9x20x128xf32>
    %105 = arith.addf %90, %104 : vector<9x20x128xf32>
    %cst_33 = arith.constant 6.000000e+00 : f32
    %106 = vector.broadcast %cst_33 : f32 to vector<9x1x128xf32>
    %107 = arith.subf %12, %106 : vector<9x1x128xf32>
    %108 = math.absf %107 : vector<9x1x128xf32>
    %cst_34 = arith.constant 1.000000e+00 : f32
    %109 = vector.broadcast %cst_34 : f32 to vector<9x1x128xf32>
    %110 = arith.subf %109, %108 : vector<9x1x128xf32>
    %cst_35 = arith.constant 0.000000e+00 : f32
    %111 = vector.broadcast %cst_35 : f32 to vector<9x1x128xf32>
    %112 = arith.maximumf %111, %110 : vector<9x1x128xf32>
    %c6 = arith.constant 6 : index
    %c0_36 = arith.constant 0 : index
    %c0_37 = arith.constant 0 : index
    %113 = vector.load %arg2[%c6, %c0_36, %c0_37] : memref<16x20x128xi32, #tpu.memory_space<vmem>>, vector<1x20x128xi32>
    %114 = vector.shape_cast %113 : vector<1x20x128xi32> to vector<20x128xi32>
    %115 = arith.sitofp %114 : vector<20x128xi32> to vector<20x128xf32>
    %116 = vector.shape_cast %115 : vector<20x128xf32> to vector<1x20x128xf32>
    %117 = vector.broadcast %112 : vector<9x1x128xf32> to vector<9x20x128xf32>
    %118 = vector.broadcast %116 : vector<1x20x128xf32> to vector<9x20x128xf32>
    %119 = arith.mulf %117, %118 : vector<9x20x128xf32>
    %120 = arith.addf %105, %119 : vector<9x20x128xf32>
    %cst_38 = arith.constant 7.000000e+00 : f32
    %121 = vector.broadcast %cst_38 : f32 to vector<9x1x128xf32>
    %122 = arith.subf %12, %121 : vector<9x1x128xf32>
    %123 = math.absf %122 : vector<9x1x128xf32>
    %cst_39 = arith.constant 1.000000e+00 : f32
    %124 = vector.broadcast %cst_39 : f32 to vector<9x1x128xf32>
    %125 = arith.subf %124, %123 : vector<9x1x128xf32>
    %cst_40 = arith.constant 0.000000e+00 : f32
    %126 = vector.broadcast %cst_40 : f32 to vector<9x1x128xf32>
    %127 = arith.maximumf %126, %125 : vector<9x1x128xf32>
    %c7 = arith.constant 7 : index
    %c0_41 = arith.constant 0 : index
    %c0_42 = arith.constant 0 : index
    %128 = vector.load %arg2[%c7, %c0_41, %c0_42] : memref<16x20x128xi32, #tpu.memory_space<vmem>>, vector<1x20x128xi32>
    %129 = vector.shape_cast %128 : vector<1x20x128xi32> to vector<20x128xi32>
    %130 = arith.sitofp %129 : vector<20x128xi32> to vector<20x128xf32>
    %131 = vector.shape_cast %130 : vector<20x128xf32> to vector<1x20x128xf32>
    %132 = vector.broadcast %127 : vector<9x1x128xf32> to vector<9x20x128xf32>
    %133 = vector.broadcast %131 : vector<1x20x128xf32> to vector<9x20x128xf32>
    %134 = arith.mulf %132, %133 : vector<9x20x128xf32>
    %135 = arith.addf %120, %134 : vector<9x20x128xf32>
    %cst_43 = arith.constant 8.000000e+00 : f32
    %136 = vector.broadcast %cst_43 : f32 to vector<9x1x128xf32>
    %137 = arith.subf %12, %136 : vector<9x1x128xf32>
    %138 = math.absf %137 : vector<9x1x128xf32>
    %cst_44 = arith.constant 1.000000e+00 : f32
    %139 = vector.broadcast %cst_44 : f32 to vector<9x1x128xf32>
    %140 = arith.subf %139, %138 : vector<9x1x128xf32>
    %cst_45 = arith.constant 0.000000e+00 : f32
    %141 = vector.broadcast %cst_45 : f32 to vector<9x1x128xf32>
    %142 = arith.maximumf %141, %140 : vector<9x1x128xf32>
    %c8 = arith.constant 8 : index
    %c0_46 = arith.constant 0 : index
    %c0_47 = arith.constant 0 : index
    %143 = vector.load %arg2[%c8, %c0_46, %c0_47] : memref<16x20x128xi32, #tpu.memory_space<vmem>>, vector<1x20x128xi32>
    %144 = vector.shape_cast %143 : vector<1x20x128xi32> to vector<20x128xi32>
    %145 = arith.sitofp %144 : vector<20x128xi32> to vector<20x128xf32>
    %146 = vector.shape_cast %145 : vector<20x128xf32> to vector<1x20x128xf32>
    %147 = vector.broadcast %142 : vector<9x1x128xf32> to vector<9x20x128xf32>
    %148 = vector.broadcast %146 : vector<1x20x128xf32> to vector<9x20x128xf32>
    %149 = arith.mulf %147, %148 : vector<9x20x128xf32>
    %150 = arith.addf %135, %149 : vector<9x20x128xf32>
    %cst_48 = arith.constant 9.000000e+00 : f32
    %151 = vector.broadcast %cst_48 : f32 to vector<9x1x128xf32>
    %152 = arith.subf %12, %151 : vector<9x1x128xf32>
    %153 = math.absf %152 : vector<9x1x128xf32>
    %cst_49 = arith.constant 1.000000e+00 : f32
    %154 = vector.broadcast %cst_49 : f32 to vector<9x1x128xf32>
    %155 = arith.subf %154, %153 : vector<9x1x128xf32>
    %cst_50 = arith.constant 0.000000e+00 : f32
    %156 = vector.broadcast %cst_50 : f32 to vector<9x1x128xf32>
    %157 = arith.maximumf %156, %155 : vector<9x1x128xf32>
    %c9 = arith.constant 9 : index
    %c0_51 = arith.constant 0 : index
    %c0_52 = arith.constant 0 : index
    %158 = vector.load %arg2[%c9, %c0_51, %c0_52] : memref<16x20x128xi32, #tpu.memory_space<vmem>>, vector<1x20x128xi32>
    %159 = vector.shape_cast %158 : vector<1x20x128xi32> to vector<20x128xi32>
    %160 = arith.sitofp %159 : vector<20x128xi32> to vector<20x128xf32>
    %161 = vector.shape_cast %160 : vector<20x128xf32> to vector<1x20x128xf32>
    %162 = vector.broadcast %157 : vector<9x1x128xf32> to vector<9x20x128xf32>
    %163 = vector.broadcast %161 : vector<1x20x128xf32> to vector<9x20x128xf32>
    %164 = arith.mulf %162, %163 : vector<9x20x128xf32>
    %165 = arith.addf %150, %164 : vector<9x20x128xf32>
    %cst_53 = arith.constant 1.000000e+01 : f32
    %166 = vector.broadcast %cst_53 : f32 to vector<9x1x128xf32>
    %167 = arith.subf %12, %166 : vector<9x1x128xf32>
    %168 = math.absf %167 : vector<9x1x128xf32>
    %cst_54 = arith.constant 1.000000e+00 : f32
    %169 = vector.broadcast %cst_54 : f32 to vector<9x1x128xf32>
    %170 = arith.subf %169, %168 : vector<9x1x128xf32>
    %cst_55 = arith.constant 0.000000e+00 : f32
    %171 = vector.broadcast %cst_55 : f32 to vector<9x1x128xf32>
    %172 = arith.maximumf %171, %170 : vector<9x1x128xf32>
    %c10 = arith.constant 10 : index
    %c0_56 = arith.constant 0 : index
    %c0_57 = arith.constant 0 : index
    %173 = vector.load %arg2[%c10, %c0_56, %c0_57] : memref<16x20x128xi32, #tpu.memory_space<vmem>>, vector<1x20x128xi32>
    %174 = vector.shape_cast %173 : vector<1x20x128xi32> to vector<20x128xi32>
    %175 = arith.sitofp %174 : vector<20x128xi32> to vector<20x128xf32>
    %176 = vector.shape_cast %175 : vector<20x128xf32> to vector<1x20x128xf32>
    %177 = vector.broadcast %172 : vector<9x1x128xf32> to vector<9x20x128xf32>
    %178 = vector.broadcast %176 : vector<1x20x128xf32> to vector<9x20x128xf32>
    %179 = arith.mulf %177, %178 : vector<9x20x128xf32>
    %180 = arith.addf %165, %179 : vector<9x20x128xf32>
    %cst_58 = arith.constant 1.100000e+01 : f32
    %181 = vector.broadcast %cst_58 : f32 to vector<9x1x128xf32>
    %182 = arith.subf %12, %181 : vector<9x1x128xf32>
    %183 = math.absf %182 : vector<9x1x128xf32>
    %cst_59 = arith.constant 1.000000e+00 : f32
    %184 = vector.broadcast %cst_59 : f32 to vector<9x1x128xf32>
    %185 = arith.subf %184, %183 : vector<9x1x128xf32>
    %cst_60 = arith.constant 0.000000e+00 : f32
    %186 = vector.broadcast %cst_60 : f32 to vector<9x1x128xf32>
    %187 = arith.maximumf %186, %185 : vector<9x1x128xf32>
    %c11 = arith.constant 11 : index
    %c0_61 = arith.constant 0 : index
    %c0_62 = arith.constant 0 : index
    %188 = vector.load %arg2[%c11, %c0_61, %c0_62] : memref<16x20x128xi32, #tpu.memory_space<vmem>>, vector<1x20x128xi32>
    %189 = vector.shape_cast %188 : vector<1x20x128xi32> to vector<20x128xi32>
    %190 = arith.sitofp %189 : vector<20x128xi32> to vector<20x128xf32>
    %191 = vector.shape_cast %190 : vector<20x128xf32> to vector<1x20x128xf32>
    %192 = vector.broadcast %187 : vector<9x1x128xf32> to vector<9x20x128xf32>
    %193 = vector.broadcast %191 : vector<1x20x128xf32> to vector<9x20x128xf32>
    %194 = arith.mulf %192, %193 : vector<9x20x128xf32>
    %195 = arith.addf %180, %194 : vector<9x20x128xf32>
    %cst_63 = arith.constant 1.200000e+01 : f32
    %196 = vector.broadcast %cst_63 : f32 to vector<9x1x128xf32>
    %197 = arith.subf %12, %196 : vector<9x1x128xf32>
    %198 = math.absf %197 : vector<9x1x128xf32>
    %cst_64 = arith.constant 1.000000e+00 : f32
    %199 = vector.broadcast %cst_64 : f32 to vector<9x1x128xf32>
    %200 = arith.subf %199, %198 : vector<9x1x128xf32>
    %cst_65 = arith.constant 0.000000e+00 : f32
    %201 = vector.broadcast %cst_65 : f32 to vector<9x1x128xf32>
    %202 = arith.maximumf %201, %200 : vector<9x1x128xf32>
    %c12 = arith.constant 12 : index
    %c0_66 = arith.constant 0 : index
    %c0_67 = arith.constant 0 : index
    %203 = vector.load %arg2[%c12, %c0_66, %c0_67] : memref<16x20x128xi32, #tpu.memory_space<vmem>>, vector<1x20x128xi32>
    %204 = vector.shape_cast %203 : vector<1x20x128xi32> to vector<20x128xi32>
    %205 = arith.sitofp %204 : vector<20x128xi32> to vector<20x128xf32>
    %206 = vector.shape_cast %205 : vector<20x128xf32> to vector<1x20x128xf32>
    %207 = vector.broadcast %202 : vector<9x1x128xf32> to vector<9x20x128xf32>
    %208 = vector.broadcast %206 : vector<1x20x128xf32> to vector<9x20x128xf32>
    %209 = arith.mulf %207, %208 : vector<9x20x128xf32>
    %210 = arith.addf %195, %209 : vector<9x20x128xf32>
    %cst_68 = arith.constant 1.300000e+01 : f32
    %211 = vector.broadcast %cst_68 : f32 to vector<9x1x128xf32>
    %212 = arith.subf %12, %211 : vector<9x1x128xf32>
    %213 = math.absf %212 : vector<9x1x128xf32>
    %cst_69 = arith.constant 1.000000e+00 : f32
    %214 = vector.broadcast %cst_69 : f32 to vector<9x1x128xf32>
    %215 = arith.subf %214, %213 : vector<9x1x128xf32>
    %cst_70 = arith.constant 0.000000e+00 : f32
    %216 = vector.broadcast %cst_70 : f32 to vector<9x1x128xf32>
    %217 = arith.maximumf %216, %215 : vector<9x1x128xf32>
    %c13 = arith.constant 13 : index
    %c0_71 = arith.constant 0 : index
    %c0_72 = arith.constant 0 : index
    %218 = vector.load %arg2[%c13, %c0_71, %c0_72] : memref<16x20x128xi32, #tpu.memory_space<vmem>>, vector<1x20x128xi32>
    %219 = vector.shape_cast %218 : vector<1x20x128xi32> to vector<20x128xi32>
    %220 = arith.sitofp %219 : vector<20x128xi32> to vector<20x128xf32>
    %221 = vector.shape_cast %220 : vector<20x128xf32> to vector<1x20x128xf32>
    %222 = vector.broadcast %217 : vector<9x1x128xf32> to vector<9x20x128xf32>
    %223 = vector.broadcast %221 : vector<1x20x128xf32> to vector<9x20x128xf32>
    %224 = arith.mulf %222, %223 : vector<9x20x128xf32>
    %225 = arith.addf %210, %224 : vector<9x20x128xf32>
    %cst_73 = arith.constant 1.400000e+01 : f32
    %226 = vector.broadcast %cst_73 : f32 to vector<9x1x128xf32>
    %227 = arith.subf %12, %226 : vector<9x1x128xf32>
    %228 = math.absf %227 : vector<9x1x128xf32>
    %cst_74 = arith.constant 1.000000e+00 : f32
    %229 = vector.broadcast %cst_74 : f32 to vector<9x1x128xf32>
    %230 = arith.subf %229, %228 : vector<9x1x128xf32>
    %cst_75 = arith.constant 0.000000e+00 : f32
    %231 = vector.broadcast %cst_75 : f32 to vector<9x1x128xf32>
    %232 = arith.maximumf %231, %230 : vector<9x1x128xf32>
    %c14 = arith.constant 14 : index
    %c0_76 = arith.constant 0 : index
    %c0_77 = arith.constant 0 : index
    %233 = vector.load %arg2[%c14, %c0_76, %c0_77] : memref<16x20x128xi32, #tpu.memory_space<vmem>>, vector<1x20x128xi32>
    %234 = vector.shape_cast %233 : vector<1x20x128xi32> to vector<20x128xi32>
    %235 = arith.sitofp %234 : vector<20x128xi32> to vector<20x128xf32>
    %236 = vector.shape_cast %235 : vector<20x128xf32> to vector<1x20x128xf32>
    %237 = vector.broadcast %232 : vector<9x1x128xf32> to vector<9x20x128xf32>
    %238 = vector.broadcast %236 : vector<1x20x128xf32> to vector<9x20x128xf32>
    %239 = arith.mulf %237, %238 : vector<9x20x128xf32>
    %240 = arith.addf %225, %239 : vector<9x20x128xf32>
    %cst_78 = arith.constant 1.500000e+01 : f32
    %241 = vector.broadcast %cst_78 : f32 to vector<9x1x128xf32>
    %242 = arith.subf %12, %241 : vector<9x1x128xf32>
    %243 = math.absf %242 : vector<9x1x128xf32>
    %cst_79 = arith.constant 1.000000e+00 : f32
    %244 = vector.broadcast %cst_79 : f32 to vector<9x1x128xf32>
    %245 = arith.subf %244, %243 : vector<9x1x128xf32>
    %cst_80 = arith.constant 0.000000e+00 : f32
    %246 = vector.broadcast %cst_80 : f32 to vector<9x1x128xf32>
    %247 = arith.maximumf %246, %245 : vector<9x1x128xf32>
    %c15 = arith.constant 15 : index
    %c0_81 = arith.constant 0 : index
    %c0_82 = arith.constant 0 : index
    %248 = vector.load %arg2[%c15, %c0_81, %c0_82] : memref<16x20x128xi32, #tpu.memory_space<vmem>>, vector<1x20x128xi32>
    %249 = vector.shape_cast %248 : vector<1x20x128xi32> to vector<20x128xi32>
    %250 = arith.sitofp %249 : vector<20x128xi32> to vector<20x128xf32>
    %251 = vector.shape_cast %250 : vector<20x128xf32> to vector<1x20x128xf32>
    %252 = vector.broadcast %247 : vector<9x1x128xf32> to vector<9x20x128xf32>
    %253 = vector.broadcast %251 : vector<1x20x128xf32> to vector<9x20x128xf32>
    %254 = arith.mulf %252, %253 : vector<9x20x128xf32>
    %255 = arith.addf %240, %254 : vector<9x20x128xf32>
    %cst_83 = arith.constant 0.000000e+00 : f32
    %256 = vector.broadcast %cst_83 : f32 to vector<1x9x128xf32>
    %257 = arith.subf %16, %256 : vector<1x9x128xf32>
    %258 = math.absf %257 : vector<1x9x128xf32>
    %cst_84 = arith.constant 1.000000e+00 : f32
    %259 = vector.broadcast %cst_84 : f32 to vector<1x9x128xf32>
    %260 = arith.subf %259, %258 : vector<1x9x128xf32>
    %cst_85 = arith.constant 0.000000e+00 : f32
    %261 = vector.broadcast %cst_85 : f32 to vector<1x9x128xf32>
    %262 = arith.maximumf %261, %260 : vector<1x9x128xf32>
    %263 = vector.extract_strided_slice %255 {offsets = [0, 0, 0], sizes = [9, 1, 128], strides = [1, 1, 1]} : vector<9x20x128xf32> to vector<9x1x128xf32>
    %264 = vector.broadcast %263 : vector<9x1x128xf32> to vector<9x9x128xf32>
    %265 = vector.broadcast %262 : vector<1x9x128xf32> to vector<9x9x128xf32>
    %266 = arith.mulf %264, %265 : vector<9x9x128xf32>
    %cst_86 = arith.constant 1.000000e+00 : f32
    %267 = vector.broadcast %cst_86 : f32 to vector<1x9x128xf32>
    %268 = arith.subf %16, %267 : vector<1x9x128xf32>
    %269 = math.absf %268 : vector<1x9x128xf32>
    %cst_87 = arith.constant 1.000000e+00 : f32
    %270 = vector.broadcast %cst_87 : f32 to vector<1x9x128xf32>
    %271 = arith.subf %270, %269 : vector<1x9x128xf32>
    %cst_88 = arith.constant 0.000000e+00 : f32
    %272 = vector.broadcast %cst_88 : f32 to vector<1x9x128xf32>
    %273 = arith.maximumf %272, %271 : vector<1x9x128xf32>
    %274 = vector.extract_strided_slice %255 {offsets = [0, 1, 0], sizes = [9, 1, 128], strides = [1, 1, 1]} : vector<9x20x128xf32> to vector<9x1x128xf32>
    %275 = vector.broadcast %274 : vector<9x1x128xf32> to vector<9x9x128xf32>
    %276 = vector.broadcast %273 : vector<1x9x128xf32> to vector<9x9x128xf32>
    %277 = arith.mulf %275, %276 : vector<9x9x128xf32>
    %278 = arith.addf %266, %277 : vector<9x9x128xf32>
    %cst_89 = arith.constant 2.000000e+00 : f32
    %279 = vector.broadcast %cst_89 : f32 to vector<1x9x128xf32>
    %280 = arith.subf %16, %279 : vector<1x9x128xf32>
    %281 = math.absf %280 : vector<1x9x128xf32>
    %cst_90 = arith.constant 1.000000e+00 : f32
    %282 = vector.broadcast %cst_90 : f32 to vector<1x9x128xf32>
    %283 = arith.subf %282, %281 : vector<1x9x128xf32>
    %cst_91 = arith.constant 0.000000e+00 : f32
    %284 = vector.broadcast %cst_91 : f32 to vector<1x9x128xf32>
    %285 = arith.maximumf %284, %283 : vector<1x9x128xf32>
    %286 = vector.extract_strided_slice %255 {offsets = [0, 2, 0], sizes = [9, 1, 128], strides = [1, 1, 1]} : vector<9x20x128xf32> to vector<9x1x128xf32>
    %287 = vector.broadcast %286 : vector<9x1x128xf32> to vector<9x9x128xf32>
    %288 = vector.broadcast %285 : vector<1x9x128xf32> to vector<9x9x128xf32>
    %289 = arith.mulf %287, %288 : vector<9x9x128xf32>
    %290 = arith.addf %278, %289 : vector<9x9x128xf32>
    %cst_92 = arith.constant 3.000000e+00 : f32
    %291 = vector.broadcast %cst_92 : f32 to vector<1x9x128xf32>
    %292 = arith.subf %16, %291 : vector<1x9x128xf32>
    %293 = math.absf %292 : vector<1x9x128xf32>
    %cst_93 = arith.constant 1.000000e+00 : f32
    %294 = vector.broadcast %cst_93 : f32 to vector<1x9x128xf32>
    %295 = arith.subf %294, %293 : vector<1x9x128xf32>
    %cst_94 = arith.constant 0.000000e+00 : f32
    %296 = vector.broadcast %cst_94 : f32 to vector<1x9x128xf32>
    %297 = arith.maximumf %296, %295 : vector<1x9x128xf32>
    %298 = vector.extract_strided_slice %255 {offsets = [0, 3, 0], sizes = [9, 1, 128], strides = [1, 1, 1]} : vector<9x20x128xf32> to vector<9x1x128xf32>
    %299 = vector.broadcast %298 : vector<9x1x128xf32> to vector<9x9x128xf32>
    %300 = vector.broadcast %297 : vector<1x9x128xf32> to vector<9x9x128xf32>
    %301 = arith.mulf %299, %300 : vector<9x9x128xf32>
    %302 = arith.addf %290, %301 : vector<9x9x128xf32>
    %cst_95 = arith.constant 4.000000e+00 : f32
    %303 = vector.broadcast %cst_95 : f32 to vector<1x9x128xf32>
    %304 = arith.subf %16, %303 : vector<1x9x128xf32>
    %305 = math.absf %304 : vector<1x9x128xf32>
    %cst_96 = arith.constant 1.000000e+00 : f32
    %306 = vector.broadcast %cst_96 : f32 to vector<1x9x128xf32>
    %307 = arith.subf %306, %305 : vector<1x9x128xf32>
    %cst_97 = arith.constant 0.000000e+00 : f32
    %308 = vector.broadcast %cst_97 : f32 to vector<1x9x128xf32>
    %309 = arith.maximumf %308, %307 : vector<1x9x128xf32>
    %310 = vector.extract_strided_slice %255 {offsets = [0, 4, 0], sizes = [9, 1, 128], strides = [1, 1, 1]} : vector<9x20x128xf32> to vector<9x1x128xf32>
    %311 = vector.broadcast %310 : vector<9x1x128xf32> to vector<9x9x128xf32>
    %312 = vector.broadcast %309 : vector<1x9x128xf32> to vector<9x9x128xf32>
    %313 = arith.mulf %311, %312 : vector<9x9x128xf32>
    %314 = arith.addf %302, %313 : vector<9x9x128xf32>
    %cst_98 = arith.constant 5.000000e+00 : f32
    %315 = vector.broadcast %cst_98 : f32 to vector<1x9x128xf32>
    %316 = arith.subf %16, %315 : vector<1x9x128xf32>
    %317 = math.absf %316 : vector<1x9x128xf32>
    %cst_99 = arith.constant 1.000000e+00 : f32
    %318 = vector.broadcast %cst_99 : f32 to vector<1x9x128xf32>
    %319 = arith.subf %318, %317 : vector<1x9x128xf32>
    %cst_100 = arith.constant 0.000000e+00 : f32
    %320 = vector.broadcast %cst_100 : f32 to vector<1x9x128xf32>
    %321 = arith.maximumf %320, %319 : vector<1x9x128xf32>
    %322 = vector.extract_strided_slice %255 {offsets = [0, 5, 0], sizes = [9, 1, 128], strides = [1, 1, 1]} : vector<9x20x128xf32> to vector<9x1x128xf32>
    %323 = vector.broadcast %322 : vector<9x1x128xf32> to vector<9x9x128xf32>
    %324 = vector.broadcast %321 : vector<1x9x128xf32> to vector<9x9x128xf32>
    %325 = arith.mulf %323, %324 : vector<9x9x128xf32>
    %326 = arith.addf %314, %325 : vector<9x9x128xf32>
    %cst_101 = arith.constant 6.000000e+00 : f32
    %327 = vector.broadcast %cst_101 : f32 to vector<1x9x128xf32>
    %328 = arith.subf %16, %327 : vector<1x9x128xf32>
    %329 = math.absf %328 : vector<1x9x128xf32>
    %cst_102 = arith.constant 1.000000e+00 : f32
    %330 = vector.broadcast %cst_102 : f32 to vector<1x9x128xf32>
    %331 = arith.subf %330, %329 : vector<1x9x128xf32>
    %cst_103 = arith.constant 0.000000e+00 : f32
    %332 = vector.broadcast %cst_103 : f32 to vector<1x9x128xf32>
    %333 = arith.maximumf %332, %331 : vector<1x9x128xf32>
    %334 = vector.extract_strided_slice %255 {offsets = [0, 6, 0], sizes = [9, 1, 128], strides = [1, 1, 1]} : vector<9x20x128xf32> to vector<9x1x128xf32>
    %335 = vector.broadcast %334 : vector<9x1x128xf32> to vector<9x9x128xf32>
    %336 = vector.broadcast %333 : vector<1x9x128xf32> to vector<9x9x128xf32>
    %337 = arith.mulf %335, %336 : vector<9x9x128xf32>
    %338 = arith.addf %326, %337 : vector<9x9x128xf32>
    %cst_104 = arith.constant 7.000000e+00 : f32
    %339 = vector.broadcast %cst_104 : f32 to vector<1x9x128xf32>
    %340 = arith.subf %16, %339 : vector<1x9x128xf32>
    %341 = math.absf %340 : vector<1x9x128xf32>
    %cst_105 = arith.constant 1.000000e+00 : f32
    %342 = vector.broadcast %cst_105 : f32 to vector<1x9x128xf32>
    %343 = arith.subf %342, %341 : vector<1x9x128xf32>
    %cst_106 = arith.constant 0.000000e+00 : f32
    %344 = vector.broadcast %cst_106 : f32 to vector<1x9x128xf32>
    %345 = arith.maximumf %344, %343 : vector<1x9x128xf32>
    %346 = vector.extract_strided_slice %255 {offsets = [0, 7, 0], sizes = [9, 1, 128], strides = [1, 1, 1]} : vector<9x20x128xf32> to vector<9x1x128xf32>
    %347 = vector.broadcast %346 : vector<9x1x128xf32> to vector<9x9x128xf32>
    %348 = vector.broadcast %345 : vector<1x9x128xf32> to vector<9x9x128xf32>
    %349 = arith.mulf %347, %348 : vector<9x9x128xf32>
    %350 = arith.addf %338, %349 : vector<9x9x128xf32>
    %cst_107 = arith.constant 8.000000e+00 : f32
    %351 = vector.broadcast %cst_107 : f32 to vector<1x9x128xf32>
    %352 = arith.subf %16, %351 : vector<1x9x128xf32>
    %353 = math.absf %352 : vector<1x9x128xf32>
    %cst_108 = arith.constant 1.000000e+00 : f32
    %354 = vector.broadcast %cst_108 : f32 to vector<1x9x128xf32>
    %355 = arith.subf %354, %353 : vector<1x9x128xf32>
    %cst_109 = arith.constant 0.000000e+00 : f32
    %356 = vector.broadcast %cst_109 : f32 to vector<1x9x128xf32>
    %357 = arith.maximumf %356, %355 : vector<1x9x128xf32>
    %358 = vector.extract_strided_slice %255 {offsets = [0, 8, 0], sizes = [9, 1, 128], strides = [1, 1, 1]} : vector<9x20x128xf32> to vector<9x1x128xf32>
    %359 = vector.broadcast %358 : vector<9x1x128xf32> to vector<9x9x128xf32>
    %360 = vector.broadcast %357 : vector<1x9x128xf32> to vector<9x9x128xf32>
    %361 = arith.mulf %359, %360 : vector<9x9x128xf32>
    %362 = arith.addf %350, %361 : vector<9x9x128xf32>
    %cst_110 = arith.constant 9.000000e+00 : f32
    %363 = vector.broadcast %cst_110 : f32 to vector<1x9x128xf32>
    %364 = arith.subf %16, %363 : vector<1x9x128xf32>
    %365 = math.absf %364 : vector<1x9x128xf32>
    %cst_111 = arith.constant 1.000000e+00 : f32
    %366 = vector.broadcast %cst_111 : f32 to vector<1x9x128xf32>
    %367 = arith.subf %366, %365 : vector<1x9x128xf32>
    %cst_112 = arith.constant 0.000000e+00 : f32
    %368 = vector.broadcast %cst_112 : f32 to vector<1x9x128xf32>
    %369 = arith.maximumf %368, %367 : vector<1x9x128xf32>
    %370 = vector.extract_strided_slice %255 {offsets = [0, 9, 0], sizes = [9, 1, 128], strides = [1, 1, 1]} : vector<9x20x128xf32> to vector<9x1x128xf32>
    %371 = vector.broadcast %370 : vector<9x1x128xf32> to vector<9x9x128xf32>
    %372 = vector.broadcast %369 : vector<1x9x128xf32> to vector<9x9x128xf32>
    %373 = arith.mulf %371, %372 : vector<9x9x128xf32>
    %374 = arith.addf %362, %373 : vector<9x9x128xf32>
    %cst_113 = arith.constant 1.000000e+01 : f32
    %375 = vector.broadcast %cst_113 : f32 to vector<1x9x128xf32>
    %376 = arith.subf %16, %375 : vector<1x9x128xf32>
    %377 = math.absf %376 : vector<1x9x128xf32>
    %cst_114 = arith.constant 1.000000e+00 : f32
    %378 = vector.broadcast %cst_114 : f32 to vector<1x9x128xf32>
    %379 = arith.subf %378, %377 : vector<1x9x128xf32>
    %cst_115 = arith.constant 0.000000e+00 : f32
    %380 = vector.broadcast %cst_115 : f32 to vector<1x9x128xf32>
    %381 = arith.maximumf %380, %379 : vector<1x9x128xf32>
    %382 = vector.extract_strided_slice %255 {offsets = [0, 10, 0], sizes = [9, 1, 128], strides = [1, 1, 1]} : vector<9x20x128xf32> to vector<9x1x128xf32>
    %383 = vector.broadcast %382 : vector<9x1x128xf32> to vector<9x9x128xf32>
    %384 = vector.broadcast %381 : vector<1x9x128xf32> to vector<9x9x128xf32>
    %385 = arith.mulf %383, %384 : vector<9x9x128xf32>
    %386 = arith.addf %374, %385 : vector<9x9x128xf32>
    %cst_116 = arith.constant 1.100000e+01 : f32
    %387 = vector.broadcast %cst_116 : f32 to vector<1x9x128xf32>
    %388 = arith.subf %16, %387 : vector<1x9x128xf32>
    %389 = math.absf %388 : vector<1x9x128xf32>
    %cst_117 = arith.constant 1.000000e+00 : f32
    %390 = vector.broadcast %cst_117 : f32 to vector<1x9x128xf32>
    %391 = arith.subf %390, %389 : vector<1x9x128xf32>
    %cst_118 = arith.constant 0.000000e+00 : f32
    %392 = vector.broadcast %cst_118 : f32 to vector<1x9x128xf32>
    %393 = arith.maximumf %392, %391 : vector<1x9x128xf32>
    %394 = vector.extract_strided_slice %255 {offsets = [0, 11, 0], sizes = [9, 1, 128], strides = [1, 1, 1]} : vector<9x20x128xf32> to vector<9x1x128xf32>
    %395 = vector.broadcast %394 : vector<9x1x128xf32> to vector<9x9x128xf32>
    %396 = vector.broadcast %393 : vector<1x9x128xf32> to vector<9x9x128xf32>
    %397 = arith.mulf %395, %396 : vector<9x9x128xf32>
    %398 = arith.addf %386, %397 : vector<9x9x128xf32>
    %cst_119 = arith.constant 1.200000e+01 : f32
    %399 = vector.broadcast %cst_119 : f32 to vector<1x9x128xf32>
    %400 = arith.subf %16, %399 : vector<1x9x128xf32>
    %401 = math.absf %400 : vector<1x9x128xf32>
    %cst_120 = arith.constant 1.000000e+00 : f32
    %402 = vector.broadcast %cst_120 : f32 to vector<1x9x128xf32>
    %403 = arith.subf %402, %401 : vector<1x9x128xf32>
    %cst_121 = arith.constant 0.000000e+00 : f32
    %404 = vector.broadcast %cst_121 : f32 to vector<1x9x128xf32>
    %405 = arith.maximumf %404, %403 : vector<1x9x128xf32>
    %406 = vector.extract_strided_slice %255 {offsets = [0, 12, 0], sizes = [9, 1, 128], strides = [1, 1, 1]} : vector<9x20x128xf32> to vector<9x1x128xf32>
    %407 = vector.broadcast %406 : vector<9x1x128xf32> to vector<9x9x128xf32>
    %408 = vector.broadcast %405 : vector<1x9x128xf32> to vector<9x9x128xf32>
    %409 = arith.mulf %407, %408 : vector<9x9x128xf32>
    %410 = arith.addf %398, %409 : vector<9x9x128xf32>
    %cst_122 = arith.constant 1.300000e+01 : f32
    %411 = vector.broadcast %cst_122 : f32 to vector<1x9x128xf32>
    %412 = arith.subf %16, %411 : vector<1x9x128xf32>
    %413 = math.absf %412 : vector<1x9x128xf32>
    %cst_123 = arith.constant 1.000000e+00 : f32
    %414 = vector.broadcast %cst_123 : f32 to vector<1x9x128xf32>
    %415 = arith.subf %414, %413 : vector<1x9x128xf32>
    %cst_124 = arith.constant 0.000000e+00 : f32
    %416 = vector.broadcast %cst_124 : f32 to vector<1x9x128xf32>
    %417 = arith.maximumf %416, %415 : vector<1x9x128xf32>
    %418 = vector.extract_strided_slice %255 {offsets = [0, 13, 0], sizes = [9, 1, 128], strides = [1, 1, 1]} : vector<9x20x128xf32> to vector<9x1x128xf32>
    %419 = vector.broadcast %418 : vector<9x1x128xf32> to vector<9x9x128xf32>
    %420 = vector.broadcast %417 : vector<1x9x128xf32> to vector<9x9x128xf32>
    %421 = arith.mulf %419, %420 : vector<9x9x128xf32>
    %422 = arith.addf %410, %421 : vector<9x9x128xf32>
    %cst_125 = arith.constant 1.400000e+01 : f32
    %423 = vector.broadcast %cst_125 : f32 to vector<1x9x128xf32>
    %424 = arith.subf %16, %423 : vector<1x9x128xf32>
    %425 = math.absf %424 : vector<1x9x128xf32>
    %cst_126 = arith.constant 1.000000e+00 : f32
    %426 = vector.broadcast %cst_126 : f32 to vector<1x9x128xf32>
    %427 = arith.subf %426, %425 : vector<1x9x128xf32>
    %cst_127 = arith.constant 0.000000e+00 : f32
    %428 = vector.broadcast %cst_127 : f32 to vector<1x9x128xf32>
    %429 = arith.maximumf %428, %427 : vector<1x9x128xf32>
    %430 = vector.extract_strided_slice %255 {offsets = [0, 14, 0], sizes = [9, 1, 128], strides = [1, 1, 1]} : vector<9x20x128xf32> to vector<9x1x128xf32>
    %431 = vector.broadcast %430 : vector<9x1x128xf32> to vector<9x9x128xf32>
    %432 = vector.broadcast %429 : vector<1x9x128xf32> to vector<9x9x128xf32>
    %433 = arith.mulf %431, %432 : vector<9x9x128xf32>
    %434 = arith.addf %422, %433 : vector<9x9x128xf32>
    %cst_128 = arith.constant 1.500000e+01 : f32
    %435 = vector.broadcast %cst_128 : f32 to vector<1x9x128xf32>
    %436 = arith.subf %16, %435 : vector<1x9x128xf32>
    %437 = math.absf %436 : vector<1x9x128xf32>
    %cst_129 = arith.constant 1.000000e+00 : f32
    %438 = vector.broadcast %cst_129 : f32 to vector<1x9x128xf32>
    %439 = arith.subf %438, %437 : vector<1x9x128xf32>
    %cst_130 = arith.constant 0.000000e+00 : f32
    %440 = vector.broadcast %cst_130 : f32 to vector<1x9x128xf32>
    %441 = arith.maximumf %440, %439 : vector<1x9x128xf32>
    %442 = vector.extract_strided_slice %255 {offsets = [0, 15, 0], sizes = [9, 1, 128], strides = [1, 1, 1]} : vector<9x20x128xf32> to vector<9x1x128xf32>
    %443 = vector.broadcast %442 : vector<9x1x128xf32> to vector<9x9x128xf32>
    %444 = vector.broadcast %441 : vector<1x9x128xf32> to vector<9x9x128xf32>
    %445 = arith.mulf %443, %444 : vector<9x9x128xf32>
    %446 = arith.addf %434, %445 : vector<9x9x128xf32>
    %cst_131 = arith.constant 1.600000e+01 : f32
    %447 = vector.broadcast %cst_131 : f32 to vector<1x9x128xf32>
    %448 = arith.subf %16, %447 : vector<1x9x128xf32>
    %449 = math.absf %448 : vector<1x9x128xf32>
    %cst_132 = arith.constant 1.000000e+00 : f32
    %450 = vector.broadcast %cst_132 : f32 to vector<1x9x128xf32>
    %451 = arith.subf %450, %449 : vector<1x9x128xf32>
    %cst_133 = arith.constant 0.000000e+00 : f32
    %452 = vector.broadcast %cst_133 : f32 to vector<1x9x128xf32>
    %453 = arith.maximumf %452, %451 : vector<1x9x128xf32>
    %454 = vector.extract_strided_slice %255 {offsets = [0, 16, 0], sizes = [9, 1, 128], strides = [1, 1, 1]} : vector<9x20x128xf32> to vector<9x1x128xf32>
    %455 = vector.broadcast %454 : vector<9x1x128xf32> to vector<9x9x128xf32>
    %456 = vector.broadcast %453 : vector<1x9x128xf32> to vector<9x9x128xf32>
    %457 = arith.mulf %455, %456 : vector<9x9x128xf32>
    %458 = arith.addf %446, %457 : vector<9x9x128xf32>
    %cst_134 = arith.constant 1.700000e+01 : f32
    %459 = vector.broadcast %cst_134 : f32 to vector<1x9x128xf32>
    %460 = arith.subf %16, %459 : vector<1x9x128xf32>
    %461 = math.absf %460 : vector<1x9x128xf32>
    %cst_135 = arith.constant 1.000000e+00 : f32
    %462 = vector.broadcast %cst_135 : f32 to vector<1x9x128xf32>
    %463 = arith.subf %462, %461 : vector<1x9x128xf32>
    %cst_136 = arith.constant 0.000000e+00 : f32
    %464 = vector.broadcast %cst_136 : f32 to vector<1x9x128xf32>
    %465 = arith.maximumf %464, %463 : vector<1x9x128xf32>
    %466 = vector.extract_strided_slice %255 {offsets = [0, 17, 0], sizes = [9, 1, 128], strides = [1, 1, 1]} : vector<9x20x128xf32> to vector<9x1x128xf32>
    %467 = vector.broadcast %466 : vector<9x1x128xf32> to vector<9x9x128xf32>
    %468 = vector.broadcast %465 : vector<1x9x128xf32> to vector<9x9x128xf32>
    %469 = arith.mulf %467, %468 : vector<9x9x128xf32>
    %470 = arith.addf %458, %469 : vector<9x9x128xf32>
    %cst_137 = arith.constant 1.800000e+01 : f32
    %471 = vector.broadcast %cst_137 : f32 to vector<1x9x128xf32>
    %472 = arith.subf %16, %471 : vector<1x9x128xf32>
    %473 = math.absf %472 : vector<1x9x128xf32>
    %cst_138 = arith.constant 1.000000e+00 : f32
    %474 = vector.broadcast %cst_138 : f32 to vector<1x9x128xf32>
    %475 = arith.subf %474, %473 : vector<1x9x128xf32>
    %cst_139 = arith.constant 0.000000e+00 : f32
    %476 = vector.broadcast %cst_139 : f32 to vector<1x9x128xf32>
    %477 = arith.maximumf %476, %475 : vector<1x9x128xf32>
    %478 = vector.extract_strided_slice %255 {offsets = [0, 18, 0], sizes = [9, 1, 128], strides = [1, 1, 1]} : vector<9x20x128xf32> to vector<9x1x128xf32>
    %479 = vector.broadcast %478 : vector<9x1x128xf32> to vector<9x9x128xf32>
    %480 = vector.broadcast %477 : vector<1x9x128xf32> to vector<9x9x128xf32>
    %481 = arith.mulf %479, %480 : vector<9x9x128xf32>
    %482 = arith.addf %470, %481 : vector<9x9x128xf32>
    %cst_140 = arith.constant 1.900000e+01 : f32
    %483 = vector.broadcast %cst_140 : f32 to vector<1x9x128xf32>
    %484 = arith.subf %16, %483 : vector<1x9x128xf32>
    %485 = math.absf %484 : vector<1x9x128xf32>
    %cst_141 = arith.constant 1.000000e+00 : f32
    %486 = vector.broadcast %cst_141 : f32 to vector<1x9x128xf32>
    %487 = arith.subf %486, %485 : vector<1x9x128xf32>
    %cst_142 = arith.constant 0.000000e+00 : f32
    %488 = vector.broadcast %cst_142 : f32 to vector<1x9x128xf32>
    %489 = arith.maximumf %488, %487 : vector<1x9x128xf32>
    %490 = vector.extract_strided_slice %255 {offsets = [0, 19, 0], sizes = [9, 1, 128], strides = [1, 1, 1]} : vector<9x20x128xf32> to vector<9x1x128xf32>
    %491 = vector.broadcast %490 : vector<9x1x128xf32> to vector<9x9x128xf32>
    %492 = vector.broadcast %489 : vector<1x9x128xf32> to vector<9x9x128xf32>
    %493 = arith.mulf %491, %492 : vector<9x9x128xf32>
    %494 = arith.addf %482, %493 : vector<9x9x128xf32>
    %495 = math.roundeven %494 : vector<9x9x128xf32>
    %496 = arith.fptosi %495 : vector<9x9x128xf32> to vector<9x9x128xi32>
    %c0_143 = arith.constant 0 : index
    %c0_144 = arith.constant 0 : index
    %c0_145 = arith.constant 0 : index
    %497 = vector.load %arg3[%c0_143, %c0_144, %c0_145] : memref<9x9x128xi32, #tpu.memory_space<vmem>>, vector<9x9x128xi32>
    tpu.vector_store %arg3[%c0_143, %c0_144, %c0_145], %496 {strides = array<i32>} : memref<9x9x128xi32, #tpu.memory_space<vmem>>, vector<9x9x128xi32>,
    return
  }
  func.func @transform_0(%arg0: i32) -> (i32, i32) {
    %c0_i32 = arith.constant 0 : i32
    %c0_i32_0 = arith.constant 0 : i32
    return %c0_i32, %arg0 : i32, i32
  }
  func.func @transform_1(%arg0: i32) -> (i32, i32, i32) {
    %c0_i32 = arith.constant 0 : i32
    %c0_i32_0 = arith.constant 0 : i32
    %c0_i32_1 = arith.constant 0 : i32
    return %c0_i32, %c0_i32_0, %arg0 : i32, i32, i32
  }
  func.func @transform_2(%arg0: i32) -> (i32, i32, i32) {
    %c0_i32 = arith.constant 0 : i32
    %c0_i32_0 = arith.constant 0 : i32
    %c0_i32_1 = arith.constant 0 : i32
    return %c0_i32, %c0_i32_0, %arg0 : i32, i32, i32
  }
}

</mosaic_0001>

<llo_original>
// kernel: crop.1
$region0: #{crop.1}
  #allocation0 [shape = 'u32[]', space=smem, size = 0x4, offset = 0x4, fixed_abs, tag = 'smem constant byte address 0x4 - core index']
  #allocation1 [shape = 'u32[72,128]{1,0:T(1,128)}', space=vmem, size = 0x9000, scoped, tag = 'internal scratch']
  %s0 = inlined_call_operand.vmem [shape: f32[2,256], index: 0, kind: input, shape index: {}]
  %s1 = inlined_call_operand.vmem [shape: s32[16,20,256], index: 1, kind: input, shape index: {}]
  %s2 = inlined_call_operand.vmem [shape: s32[9,9,256], index: 2, kind: output, shape index: {}]
  %s3 = sld [smem:[#allocation0]]
  $region113: #{crop.1} parent=0
    _
  %s5 = ssub.s32 1, %s3
  %s6 = scalar_select 0, %s5, %s3
  $region1: #{crop.1} parent=0
    #allocation2 [shape = 'u8[393216]{0}', space=vmem, size = 0x60000, scoped, tag = 'input window, operand 1']
    #allocation3 [shape = 'u8[147456]{0}', space=vmem, size = 0x24000, scoped, tag = 'output window, operand 0']
    loop: start=0, step=1, limit=4
    $region2: #{crop.1} parent=1 // loop_pre_header
      _
    $region3: #{crop.1} parent=1 // loop_header
      %s8 = sphi 0, %s12
      %p9 = scmp.ge.s32.totalorder %s8, 4
      %s18 = sphi 0, %s20
      %s21 = sphi 0, %s18
      %s22 = sphi 0, %s21
      %s38 = sphi 0, %s22
      %s44 = sphi 0, %s46
      %s47 = sphi 0, %s44
      %s48 = sphi 0, %s47
      %s64 = sphi 0, %s48
      %s70 = sphi 0, %s72
      %s73 = sphi 0, %s70
      %s74 = sphi 0, %s73
      %s90 = sphi 0, %s74
    $region4: #{crop.1} parent=1 // loop_header_branch
      %11 = sbr.rel (%p9) target = $region8
    $region5: #{crop.1} parent=1 // loop_body
      %s13 = ssub.s32 %s8, 1
      %s14 = ssub.s32 %s8, 2
      %s15 = sadd.s32 %s8, 1
      %s16 = ssub.s32 %s8, %s15
      %p17 = scmp.eq.s32.totalorder %s16, 0
      %s19 = sadd.s32 %s18, 1
      %s20 = scalar_select %p17, %s18, %s19
      %p23 = pneg %p17
      %p24 = scmp.eq.s32.totalorder %s8, 1
      %p25 = por %p23, %p24
      %p26 = scmp.ne.s32.totalorder %s18, %s21
      %p27 = scmp.eq.s32.totalorder %s8, 0
      %p28 = por %p26, %p27
      %p29 = scmp.ne.s32.totalorder %s18, %s21
      %p30 = scmp.eq.s32.totalorder %s13, 1
      %p31 = por %p29, %p30
      %p32 = scmp.ne.s32.totalorder %s21, %s22
      %p33 = scmp.eq.s32.totalorder %s13, 0
      %p34 = por %p32, %p33
      %p35 = scmp.ne.s32.totalorder %s21, %s22
      %p36 = scmp.eq.s32.totalorder %s14, 1
      %p37 = por %p35, %p36
      %p39 = scmp.ne.s32.totalorder %s22, %s38
      %p40 = scmp.eq.s32.totalorder %s14, 0
      %p41 = por %p39, %p40
      %s42 = ssub.s32 %s8, %s15
      %p43 = scmp.eq.s32.totalorder %s42, 0
      %s45 = sadd.s32 %s44, 1
      %s46 = scalar_select %p43, %s44, %s45
      %p49 = pneg %p43
      %p50 = scmp.eq.s32.totalorder %s8, 1
      %p51 = por %p49, %p50
      %p52 = scmp.ne.s32.totalorder %s44, %s47
      %p53 = scmp.eq.s32.totalorder %s8, 0
      %p54 = por %p52, %p53
      %p55 = scmp.ne.s32.totalorder %s44, %s47
      %p56 = scmp.eq.s32.totalorder %s13, 1
      %p57 = por %p55, %p56
      %p58 = scmp.ne.s32.totalorder %s47, %s48
      %p59 = scmp.eq.s32.totalorder %s13, 0
      %p60 = por %p58, %p59
      %p61 = scmp.ne.s32.totalorder %s47, %s48
      %p62 = scmp.eq.s32.totalorder %s14, 1
      %p63 = por %p61, %p62
      %p65 = scmp.ne.s32.totalorder %s48, %s64
      %p66 = scmp.eq.s32.totalorder %s14, 0
      %p67 = por %p65, %p66
      %s68 = ssub.s32 %s8, %s15
      %p69 = scmp.eq.s32.totalorder %s68, 0
      %s71 = sadd.s32 %s70, 1
      %s72 = scalar_select %p69, %s70, %s71
      %p75 = pneg %p69
      %p76 = scmp.eq.s32.totalorder %s8, 1
      %p77 = por %p75, %p76
      %p78 = scmp.ne.s32.totalorder %s70, %s73
      %p79 = scmp.eq.s32.totalorder %s8, 0
      %p80 = por %p78, %p79
      %p81 = scmp.ne.s32.totalorder %s70, %s73
      %p82 = scmp.eq.s32.totalorder %s13, 1
      %p83 = por %p81, %p82
      %p84 = scmp.ne.s32.totalorder %s73, %s74
      %p85 = scmp.eq.s32.totalorder %s13, 0
      %p86 = por %p84, %p85
      %p87 = scmp.ne.s32.totalorder %s73, %s74
      %p88 = scmp.eq.s32.totalorder %s14, 1
      %p89 = por %p87, %p88
      %p91 = scmp.ne.s32.totalorder %s74, %s90
      %p92 = scmp.eq.s32.totalorder %s14, 0
      %p93 = por %p91, %p92
      %p94 = scmp.le.s32.totalorder 1, %s8
      %p95 = scmp.lt.s32.totalorder %s8, 3
      %p96 = pnand %p94, %p95
      %p97 = pneg %p96
      // Predicated region
      $region9: #{crop.1} parent=5 // pred_check
        _
      $region10: #{crop.1} parent=5 // pred_check_branch
        %99 = sbr.rel (%p96) target = $region12
      $region11: #{crop.1} parent=5 // pred_region
        %s100 = ssub.s32 %s8, 1
      $region12: #{crop.1} parent=5 // pred_fallthru
        _
      %p101 = scmp.lt.s32.totalorder %s8, 2
      // Predicated region
      $region13: #{crop.1} parent=5 // pred_check
        %p102 = pneg %p101
      $region14: #{crop.1} parent=5 // pred_check_branch
        %104 = sbr.rel (%p102) target = $region16
      $region15: #{crop.1} parent=5 // pred_region
        // Predicated region
        $region17: #{crop.1} parent=15 // pred_check
          %p105 = pneg %p28
        $region18: #{crop.1} parent=15 // pred_check_branch
          %107 = sbr.rel (%p105) target = $region20
        $region19: #{crop.1} parent=15 // pred_region
          %p108 = scmp.lt.s32.totalorder %s8, 1
          %s109 = scalar_select %p108, %s8, 1
          %s110 = smul.addr %s109, 2
          %s111 = scalar_lea.vmem %s0, %s110
        $region20: #{crop.1} parent=15 // pred_fallthru
          _
        // Predicated region
        $region21: #{crop.1} parent=15 // pred_check
          %p112 = pneg %p54
        $region22: #{crop.1} parent=15 // pred_check_branch
          %114 = sbr.rel (%p112) target = $region24
        $region23: #{crop.1} parent=15 // pred_region
          %s115 = sand.u32 %s44, 1
          %s116 = sand.u32 %s44, 1
          %s117 = smul.addr %s116, 384
          %s118 = scalar_lea.vmem [#allocation2], %s117
          %s119 = smul.addr %s8, 8
          %s120 = scalar_lea.vmem %s1, %s119
          // Predicated region
          $region25: #{crop.1} parent=23 // pred_check
            _
          $region26: #{crop.1} parent=23 // pred_check_branch
            %122 = sbr.rel (0) target = $region28
          $region27: #{crop.1} parent=23 // pred_region
            // Predicated region
            $region29: #{crop.1} parent=27 // pred_check
              _
            $region30: #{crop.1} parent=27 // pred_check_branch
              %124 = sbr.rel (0) target = $region32
            $region31: #{crop.1} parent=27 // pred_region
              // Predicated region
              $region44: #{crop.1} parent=31 // pred_check
                _
              $region45: #{crop.1} parent=31 // pred_check_branch
                %234 = sbr.rel (0) target = $region47
              $region46: #{crop.1} parent=31 // pred_region
                loop: start=0, step=1, limit=1
                $region48: #{crop.1} parent=46 // loop_pre_header
                  _
                $region49: #{crop.1} parent=46 // loop_header
                  %s236 = sphi 0, %s240
                  %p237 = scmp.ge.s32.totalorder %s236, 1
                  %s241 = sphi %s120, %s120
                  %s242 = sphi %s118, %s118
                $region50: #{crop.1} parent=46 // loop_header_branch
                  %239 = sbr.rel (%p237) target = $region54
                $region51: #{crop.1} parent=46 // loop_body
                  %v243 = vld [vmem:[%s241] sm:$0xff]
                  %244 = vst [vmem:[%s242] sm:$0xff] %v243
                  %v245 = vld [vmem:[%s241 + $0x10] sm:$0xff]
                  %246 = vst [vmem:[%s242 + $0x8] sm:$0xff] %v245
                  %v247 = vld [vmem:[%s241 + $0x20] sm:$0xff]
                  %248 = vst [vmem:[%s242 + $0x10] sm:$0xff] %v247
                  %v249 = vld [vmem:[%s241 + $0x30] sm:$0xff]
                  %250 = vst [vmem:[%s242 + $0x18] sm:$0xff] %v249
                  %v251 = vld [vmem:[%s241 + $0x40] sm:$0xff]
                  %252 = vst [vmem:[%s242 + $0x20] sm:$0xff] %v251
                  %v253 = vld [vmem:[%s241 + $0x50] sm:$0xff]
                  %254 = vst [vmem:[%s242 + $0x28] sm:$0xff] %v253
                  %v255 = vld [vmem:[%s241 + $0x60] sm:$0xff]
                  %256 = vst [vmem:[%s242 + $0x30] sm:$0xff] %v255
                  %v257 = vld [vmem:[%s241 + $0x70] sm:$0xff]
                  %258 = vst [vmem:[%s242 + $0x38] sm:$0xff] %v257
                  %v259 = vld [vmem:[%s241 + $0x80] sm:$0xff]
                  %260 = vst [vmem:[%s242 + $0x40] sm:$0xff] %v259
                  %v261 = vld [vmem:[%s241 + $0x90] sm:$0xff]
                  %262 = vst [vmem:[%s242 + $0x48] sm:$0xff] %v261
                  %v263 = vld [vmem:[%s241 + $0xa0] sm:$0xff]
                  %264 = vst [vmem:[%s242 + $0x50] sm:$0xff] %v263
                  %v265 = vld [vmem:[%s241 + $0xb0] sm:$0xff]
                  %266 = vst [vmem:[%s242 + $0x58] sm:$0xff] %v265
                  %v267 = vld [vmem:[%s241 + $0xc0] sm:$0xff]
                  %268 = vst [vmem:[%s242 + $0x60] sm:$0xff] %v267
                  %v269 = vld [vmem:[%s241 + $0xd0] sm:$0xff]
                  %270 = vst [vmem:[%s242 + $0x68] sm:$0xff] %v269
                  %v271 = vld [vmem:[%s241 + $0xe0] sm:$0xff]
                  %272 = vst [vmem:[%s242 + $0x70] sm:$0xff] %v271
                  %v273 = vld [vmem:[%s241 + $0xf0] sm:$0xff]
                  %274 = vst [vmem:[%s242 + $0x78] sm:$0xff] %v273
                  %v275 = vld [vmem:[%s241 + $0x100] sm:$0xff]
                  %276 = vst [vmem:[%s242 + $0x80] sm:$0xff] %v275
                  %v277 = vld [vmem:[%s241 + $0x110] sm:$0xff]
                  %278 = vst [vmem:[%s242 + $0x88] sm:$0xff] %v277
                  %v279 = vld [vmem:[%s241 + $0x120] sm:$0xff]
                  %280 = vst [vmem:[%s242 + $0x90] sm:$0xff] %v279
                  %v281 = vld [vmem:[%s241 + $0x130] sm:$0xff]
                  %282 = vst [vmem:[%s242 + $0x98] sm:$0xff] %v281
                  %v283 = vld [vmem:[%s241 + $0x140] sm:$0xff]
                  %284 = vst [vmem:[%s242 + $0xa0] sm:$0xff] %v283
                  %v285 = vld [vmem:[%s241 + $0x150] sm:$0xff]
                  %286 = vst [vmem:[%s242 + $0xa8] sm:$0xff] %v285
                  %v287 = vld [vmem:[%s241 + $0x160] sm:$0xff]
                  %288 = vst [vmem:[%s242 + $0xb0] sm:$0xff] %v287
                  %v289 = vld [vmem:[%s241 + $0x170] sm:$0xff]
                  %290 = vst [vmem:[%s242 + $0xb8] sm:$0xff] %v289
                  %v291 = vld [vmem:[%s241 + $0x180] sm:$0xff]
                  %292 = vst [vmem:[%s242 + $0xc0] sm:$0xff] %v291
                  %v293 = vld [vmem:[%s241 + $0x190] sm:$0xff]
                  %294 = vst [vmem:[%s242 + $0xc8] sm:$0xff] %v293
                  %v295 = vld [vmem:[%s241 + $0x1a0] sm:$0xff]
                  %296 = vst [vmem:[%s242 + $0xd0] sm:$0xff] %v295
                  %v297 = vld [vmem:[%s241 + $0x1b0] sm:$0xff]
                  %298 = vst [vmem:[%s242 + $0xd8] sm:$0xff] %v297
                  %v299 = vld [vmem:[%s241 + $0x1c0] sm:$0xff]
                  %300 = vst [vmem:[%s242 + $0xe0] sm:$0xff] %v299
                  %v301 = vld [vmem:[%s241 + $0x1d0] sm:$0xff]
                  %302 = vst [vmem:[%s242 + $0xe8] sm:$0xff] %v301
                  %v303 = vld [vmem:[%s241 + $0x1e0] sm:$0xff]
                  %304 = vst [vmem:[%s242 + $0xf0] sm:$0xff] %v303
                  %v305 = vld [vmem:[%s241 + $0x1f0] sm:$0xff]
                  %306 = vst [vmem:[%s242 + $0xf8] sm:$0xff] %v305
                  %v307 = vld [vmem:[%s241 + $0x200] sm:$0xff]
                  %308 = vst [vmem:[%s242 + $0x100] sm:$0xff] %v307
                  %v309 = vld [vmem:[%s241 + $0x210] sm:$0xff]
                  %310 = vst [vmem:[%s242 + $0x108] sm:$0xff] %v309
                  %v311 = vld [vmem:[%s241 + $0x220] sm:$0xff]
                  %312 = vst [vmem:[%s242 + $0x110] sm:$0xff] %v311
                  %v313 = vld [vmem:[%s241 + $0x230] sm:$0xff]
                  %314 = vst [vmem:[%s242 + $0x118] sm:$0xff] %v313
                  %v315 = vld [vmem:[%s241 + $0x240] sm:$0xff]
                  %316 = vst [vmem:[%s242 + $0x120] sm:$0xff] %v315
                  %v317 = vld [vmem:[%s241 + $0x250] sm:$0xff]
                  %318 = vst [vmem:[%s242 + $0x128] sm:$0xff] %v317
                  %v319 = vld [vmem:[%s241 + $0x260] sm:$0xff]
                  %320 = vst [vmem:[%s242 + $0x130] sm:$0xff] %v319
                  %v321 = vld [vmem:[%s241 + $0x270] sm:$0xff]
                  %322 = vst [vmem:[%s242 + $0x138] sm:$0xff] %v321
                  %v323 = vld [vmem:[%s241 + $0x280] sm:$0xff]
                  %324 = vst [vmem:[%s242 + $0x140] sm:$0xff] %v323
                  %v325 = vld [vmem:[%s241 + $0x290] sm:$0xff]
                  %326 = vst [vmem:[%s242 + $0x148] sm:$0xff] %v325
                  %v327 = vld [vmem:[%s241 + $0x2a0] sm:$0xff]
                  %328 = vst [vmem:[%s242 + $0x150] sm:$0xff] %v327
                  %v329 = vld [vmem:[%s241 + $0x2b0] sm:$0xff]
                  %330 = vst [vmem:[%s242 + $0x158] sm:$0xff] %v329
                  %v331 = vld [vmem:[%s241 + $0x2c0] sm:$0xff]
                  %332 = vst [vmem:[%s242 + $0x160] sm:$0xff] %v331
                  %v333 = vld [vmem:[%s241 + $0x2d0] sm:$0xff]
                  %334 = vst [vmem:[%s242 + $0x168] sm:$0xff] %v333
                  %v335 = vld [vmem:[%s241 + $0x2e0] sm:$0xff]
                  %336 = vst [vmem:[%s242 + $0x170] sm:$0xff] %v335
                  %v337 = vld [vmem:[%s241 + $0x2f0] sm:$0xff]
                  %338 = vst [vmem:[%s242 + $0x178] sm:$0xff] %v337
                $region52: #{crop.1} parent=46 // loop_footer
                  %s240 = sadd.s32 1, %s236
                $region53: #{crop.1} parent=46 // loop_footer_branch
                  %235 = sbr.rel target = $region49
                $region54: #{crop.1} parent=46 // loop_exit
                  _
              $region47: #{crop.1} parent=31 // pred_fallthru
                _
              // Predicated region
              $region55: #{crop.1} parent=31 // pred_check
                _
              $region56: #{crop.1} parent=31 // pred_check_branch
                %340 = sbr.rel target = $region58
              $region57: #{crop.1} parent=31 // pred_region
                _
              $region58: #{crop.1} parent=31 // pred_fallthru
                _
            $region32: #{crop.1} parent=27 // pred_fallthru
              _
            // Predicated region
            $region33: #{crop.1} parent=27 // pred_check
              _
            $region34: #{crop.1} parent=27 // pred_check_branch
              %126 = sbr.rel target = $region36
            $region35: #{crop.1} parent=27 // pred_region
              %s128 = ssub.s32 256, 1
              loop: start=0, step=1, limit=1
              $region37: #{crop.1} parent=35 // loop_pre_header
                _
              $region38: #{crop.1} parent=35 // loop_header
                %s130 = sphi 0, %s134
                %p131 = scmp.ge.s32.totalorder %s130, 1
                %s135 = sphi %s120, %s120
                %s136 = sphi %s118, %s118
              $region39: #{crop.1} parent=35 // loop_header_branch
                %133 = sbr.rel (%p131) target = $region43
              $region40: #{crop.1} parent=35 // loop_body
                %v137 = vld [vmem:[%s135] sm:%s128]
                %138 = vst [vmem:[%s136] sm:%s128] %v137
                %v139 = vld [vmem:[%s135 + $0x10] sm:%s128]
                %140 = vst [vmem:[%s136 + $0x8] sm:%s128] %v139
                %v141 = vld [vmem:[%s135 + $0x20] sm:%s128]
                %142 = vst [vmem:[%s136 + $0x10] sm:%s128] %v141
                %v143 = vld [vmem:[%s135 + $0x30] sm:%s128]
                %144 = vst [vmem:[%s136 + $0x18] sm:%s128] %v143
                %v145 = vld [vmem:[%s135 + $0x40] sm:%s128]
                %146 = vst [vmem:[%s136 + $0x20] sm:%s128] %v145
                %v147 = vld [vmem:[%s135 + $0x50] sm:%s128]
                %148 = vst [vmem:[%s136 + $0x28] sm:%s128] %v147
                %v149 = vld [vmem:[%s135 + $0x60] sm:%s128]
                %150 = vst [vmem:[%s136 + $0x30] sm:%s128] %v149
                %v151 = vld [vmem:[%s135 + $0x70] sm:%s128]
                %152 = vst [vmem:[%s136 + $0x38] sm:%s128] %v151
                %v153 = vld [vmem:[%s135 + $0x80] sm:%s128]
                %154 = vst [vmem:[%s136 + $0x40] sm:%s128] %v153
                %v155 = vld [vmem:[%s135 + $0x90] sm:%s128]
                %156 = vst [vmem:[%s136 + $0x48] sm:%s128] %v155
                %v157 = vld [vmem:[%s135 + $0xa0] sm:%s128]
                %158 = vst [vmem:[%s136 + $0x50] sm:%s128] %v157
                %v159 = vld [vmem:[%s135 + $0xb0] sm:%s128]
                %160 = vst [vmem:[%s136 + $0x58] sm:%s128] %v159
                %v161 = vld [vmem:[%s135 + $0xc0] sm:%s128]
                %162 = vst [vmem:[%s136 + $0x60] sm:%s128] %v161
                %v163 = vld [vmem:[%s135 + $0xd0] sm:%s128]
                %164 = vst [vmem:[%s136 + $0x68] sm:%s128] %v163
                %v165 = vld [vmem:[%s135 + $0xe0] sm:%s128]
                %166 = vst [vmem:[%s136 + $0x70] sm:%s128] %v165
                %v167 = vld [vmem:[%s135 + $0xf0] sm:%s128]
                %168 = vst [vmem:[%s136 + $0x78] sm:%s128] %v167
                %v169 = vld [vmem:[%s135 + $0x100] sm:%s128]
                %170 = vst [vmem:[%s136 + $0x80] sm:%s128] %v169
                %v171 = vld [vmem:[%s135 + $0x110] sm:%s128]
                %172 = vst [vmem:[%s136 + $0x88] sm:%s128] %v171
                %v173 = vld [vmem:[%s135 + $0x120] sm:%s128]
                %174 = vst [vmem:[%s136 + $0x90] sm:%s128] %v173
                %v175 = vld [vmem:[%s135 + $0x130] sm:%s128]
                %176 = vst [vmem:[%s136 + $0x98] sm:%s128] %v175
                %v177 = vld [vmem:[%s135 + $0x140] sm:%s128]
                %178 = vst [vmem:[%s136 + $0xa0] sm:%s128] %v177
                %v179 = vld [vmem:[%s135 + $0x150] sm:%s128]
                %180 = vst [vmem:[%s136 + $0xa8] sm:%s128] %v179
                %v181 = vld [vmem:[%s135 + $0x160] sm:%s128]
                %182 = vst [vmem:[%s136 + $0xb0] sm:%s128] %v181
                %v183 = vld [vmem:[%s135 + $0x170] sm:%s128]
                %184 = vst [vmem:[%s136 + $0xb8] sm:%s128] %v183
                %v185 = vld [vmem:[%s135 + $0x180] sm:%s128]
                %186 = vst [vmem:[%s136 + $0xc0] sm:%s128] %v185
                %v187 = vld [vmem:[%s135 + $0x190] sm:%s128]
                %188 = vst [vmem:[%s136 + $0xc8] sm:%s128] %v187
                %v189 = vld [vmem:[%s135 + $0x1a0] sm:%s128]
                %190 = vst [vmem:[%s136 + $0xd0] sm:%s128] %v189
                %v191 = vld [vmem:[%s135 + $0x1b0] sm:%s128]
                %192 = vst [vmem:[%s136 + $0xd8] sm:%s128] %v191
                %v193 = vld [vmem:[%s135 + $0x1c0] sm:%s128]
                %194 = vst [vmem:[%s136 + $0xe0] sm:%s128] %v193
                %v195 = vld [vmem:[%s135 + $0x1d0] sm:%s128]
                %196 = vst [vmem:[%s136 + $0xe8] sm:%s128] %v195
                %v197 = vld [vmem:[%s135 + $0x1e0] sm:%s128]
                %198 = vst [vmem:[%s136 + $0xf0] sm:%s128] %v197
                %v199 = vld [vmem:[%s135 + $0x1f0] sm:%s128]
                %200 = vst [vmem:[%s136 + $0xf8] sm:%s128] %v199
                %v201 = vld [vmem:[%s135 + $0x200] sm:%s128]
                %202 = vst [vmem:[%s136 + $0x100] sm:%s128] %v201
                %v203 = vld [vmem:[%s135 + $0x210] sm:%s128]
                %204 = vst [vmem:[%s136 + $0x108] sm:%s128] %v203
                %v205 = vld [vmem:[%s135 + $0x220] sm:%s128]
                %206 = vst [vmem:[%s136 + $0x110] sm:%s128] %v205
                %v207 = vld [vmem:[%s135 + $0x230] sm:%s128]
                %208 = vst [vmem:[%s136 + $0x118] sm:%s128] %v207
                %v209 = vld [vmem:[%s135 + $0x240] sm:%s128]
                %210 = vst [vmem:[%s136 + $0x120] sm:%s128] %v209
                %v211 = vld [vmem:[%s135 + $0x250] sm:%s128]
                %212 = vst [vmem:[%s136 + $0x128] sm:%s128] %v211
                %v213 = vld [vmem:[%s135 + $0x260] sm:%s128]
                %214 = vst [vmem:[%s136 + $0x130] sm:%s128] %v213
                %v215 = vld [vmem:[%s135 + $0x270] sm:%s128]
                %216 = vst [vmem:[%s136 + $0x138] sm:%s128] %v215
                %v217 = vld [vmem:[%s135 + $0x280] sm:%s128]
                %218 = vst [vmem:[%s136 + $0x140] sm:%s128] %v217
                %v219 = vld [vmem:[%s135 + $0x290] sm:%s128]
                %220 = vst [vmem:[%s136 + $0x148] sm:%s128] %v219
                %v221 = vld [vmem:[%s135 + $0x2a0] sm:%s128]
                %222 = vst [vmem:[%s136 + $0x150] sm:%s128] %v221
                %v223 = vld [vmem:[%s135 + $0x2b0] sm:%s128]
                %224 = vst [vmem:[%s136 + $0x158] sm:%s128] %v223
                %v225 = vld [vmem:[%s135 + $0x2c0] sm:%s128]
                %226 = vst [vmem:[%s136 + $0x160] sm:%s128] %v225
                %v227 = vld [vmem:[%s135 + $0x2d0] sm:%s128]
                %228 = vst [vmem:[%s136 + $0x168] sm:%s128] %v227
                %v229 = vld [vmem:[%s135 + $0x2e0] sm:%s128]
                %230 = vst [vmem:[%s136 + $0x170] sm:%s128] %v229
                %v231 = vld [vmem:[%s135 + $0x2f0] sm:%s128]
                %232 = vst [vmem:[%s136 + $0x178] sm:%s128] %v231
              $region41: #{crop.1} parent=35 // loop_footer
                %s134 = sadd.s32 1, %s130
              $region42: #{crop.1} parent=35 // loop_footer_branch
                %129 = sbr.rel target = $region38
              $region43: #{crop.1} parent=35 // loop_exit
                _
            $region36: #{crop.1} parent=27 // pred_fallthru
              _
          $region28: #{crop.1} parent=23 // pred_fallthru
            _
          %341 = vnop
        $region24: #{crop.1} parent=15 // pred_fallthru
          _
      $region16: #{crop.1} parent=5 // pred_fallthru
        _
      %p342 = scmp.le.s32.totalorder 1, %s8
      %p343 = scmp.lt.s32.totalorder %s8, 3
      %p344 = pnand %p342, %p343
      %p345 = pneg %p344
      // Predicated region
      $region59: #{crop.1} parent=5 // pred_check
        _
      $region60: #{crop.1} parent=5 // pred_check_branch
        %347 = sbr.rel (%p344) target = $region62
      $region61: #{crop.1} parent=5 // pred_region
        %s348 = ssub.s32 %s8, 1
        %s349 = sand.u32 %s47, 1
        %s350 = sand.u32 %s47, 1
        %s351 = smul.addr %s350, 384
        %s352 = scalar_lea.vmem [#allocation2], %s351
        // Predicated region
        $region63: #{crop.1} parent=61 // pred_check
          %p353 = pneg %p60
        $region64: #{crop.1} parent=61 // pred_check_branch
          %355 = sbr.rel (%p353) target = $region66
        $region65: #{crop.1} parent=61 // pred_region
          _
        $region66: #{crop.1} parent=61 // pred_fallthru
          _
        %p356 = scmp.lt.s32.totalorder %s13, 1
        %s357 = scalar_select %p356, %s13, 1
        %s358 = smul.addr %s357, 2
        %s359 = scalar_lea.vmem %s0, %s358
        %p360 = pneg %p34
        %p361 = pneg %p31
        %s362 = sand.u32 %s47, 1
        %s363 = sand.u32 %s47, 1
        %s364 = smul.addr %s363, 384
        %s365 = scalar_lea.vmem [#allocation2], %s364
        %p366 = pneg %p60
        %p367 = pneg %p57
        %p368 = pneg %p86
        %p369 = pneg %p83
        %s370 = sand.u32 %s73, 1
        %s371 = sand.u32 %s73, 1
        %s372 = smul.addr %s371, 144
        %s373 = scalar_lea.vmem [#allocation3], %s372
        %p374 = scmp.lt.s32.totalorder %s13, 1
        %s375 = scalar_select %p374, %s13, 1
        %s376 = smul.addr %s375, 2
        %s377 = scalar_lea.vmem %s0, %s376
        %v378 = vld [vmem:[%s377] sm:$0x3]
        %v379 = vcvt.s32.f32 0
        %v380 = vcvt.s32.f32 1
        %v381 = vcvt.s32.f32 2
        %v382 = vcvt.s32.f32 3
        %v383 = vcvt.s32.f32 4
        %v384 = vcvt.s32.f32 5
        %v385 = vcvt.s32.f32 6
        %v386 = vcvt.s32.f32 7
        %v387 = vcvt.s32.f32 8
        %v388 = vlaneseq
        %v389 = vshrl.u32 %v388, 7
        %v390 = vadd.s32 %v389, 8
        %v391 = vcvt.s32.f32 %v389
        %v392 = vcvt.s32.f32 %v390
        %v393 = vadd.f32 %v379, -5.5
        %v394 = vadd.f32 %v380, -5.5
        %v395 = vadd.f32 %v381, -5.5
        %v396 = vadd.f32 %v382, -5.5
        %v397 = vadd.f32 %v383, -5.5
        %v398 = vadd.f32 %v384, -5.5
        %v399 = vadd.f32 %v385, -5.5
        %v400 = vadd.f32 %v386, -5.5
        %v401 = vadd.f32 %v387, -5.5
        %v402 = vadd.f32 %v378, %v393
        %v403 = vadd.f32 %v378, %v394
        %v404 = vadd.f32 %v378, %v395
        %v405 = vadd.f32 %v378, %v396
        %v406 = vadd.f32 %v378, %v397
        %v407 = vadd.f32 %v378, %v398
        %v408 = vadd.f32 %v378, %v399
        %v409 = vadd.f32 %v378, %v400
        %v410 = vadd.f32 %v378, %v401
        %v411 = vadd.f32 %v391, -5.5
        %v412 = vadd.f32 %v392, -5.5
        %v413 = vperm.slane %v378, 0
        %v414 = vadd.f32 %v413, %v411
        %v415 = vadd.f32 %v413, %v412
        %v416 = vand.u32 2147483647, %v402
        %v417 = vand.u32 2147483647, %v403
        %v418 = vand.u32 2147483647, %v404
        %v419 = vand.u32 2147483647, %v405
        %v420 = vand.u32 2147483647, %v406
        %v421 = vand.u32 2147483647, %v407
        %v422 = vand.u32 2147483647, %v408
        %v423 = vand.u32 2147483647, %v409
        %v424 = vand.u32 2147483647, %v410
        %v425 = vsub.f32 1.0, %v416
        %v426 = vsub.f32 1.0, %v417
        %v427 = vsub.f32 1.0, %v418
        %v428 = vsub.f32 1.0, %v419
        %v429 = vsub.f32 1.0, %v420
        %v430 = vsub.f32 1.0, %v421
        %v431 = vsub.f32 1.0, %v422
        %v432 = vsub.f32 1.0, %v423
        %v433 = vsub.f32 1.0, %v424
        %v434 = vmax.f32 %v425, 0.0
        %v435 = vmax.f32 %v426, 0.0
        %v436 = vmax.f32 %v427, 0.0
        %v437 = vmax.f32 %v428, 0.0
        %v438 = vmax.f32 %v429, 0.0
        %v439 = vmax.f32 %v430, 0.0
        %v440 = vmax.f32 %v431, 0.0
        %v441 = vmax.f32 %v432, 0.0
        %v442 = vmax.f32 %v433, 0.0
        %v443 = vld [vmem:[%s352] sm:$0xff]
        %v444 = vld [vmem:[%s352 + $0x8] sm:$0xff]
        %v445 = vld [vmem:[%s352 + $0x10] sm:$0xf]
        %v446 = vcvt.s32.f32 %v443
        %v447 = vcvt.s32.f32 %v444
        %v448 = vcvt.s32.f32 %v445
        %v449 = vperm.slane %v434, 1
        %v450 = vperm.slane %v435, 1
        %v451 = vperm.slane %v436, 1
        %v452 = vperm.slane %v437, 1
        %v453 = vperm.slane %v438, 1
        %v454 = vperm.slane %v439, 1
        %v455 = vperm.slane %v440, 1
        %v456 = vperm.slane %v441, 1
        %v457 = vperm.slane %v442, 1
        %v458 = vmul.f32 %v449, %v446
        %v459 = vmul.f32 %v449, %v447
        %v460 = vmul.f32 %v449, %v448
        %v461 = vmul.f32 %v450, %v446
        %v462 = vmul.f32 %v450, %v447
        %v463 = vmul.f32 %v450, %v448
        %v464 = vmul.f32 %v451, %v446
        %v465 = vmul.f32 %v451, %v447
        %v466 = vmul.f32 %v451, %v448
        %v467 = vmul.f32 %v452, %v446
        %v468 = vmul.f32 %v452, %v447
        %v469 = vmul.f32 %v452, %v448
        %v470 = vmul.f32 %v453, %v446
        %v471 = vmul.f32 %v453, %v447
        %v472 = vmul.f32 %v453, %v448
        %v473 = vmul.f32 %v454, %v446
        %v474 = vmul.f32 %v454, %v447
        %v475 = vmul.f32 %v454, %v448
        %v476 = vmul.f32 %v455, %v446
        %v477 = vmul.f32 %v455, %v447
        %v478 = vmul.f32 %v455, %v448
        %v479 = vmul.f32 %v456, %v446
        %v480 = vmul.f32 %v456, %v447
        %v481 = vmul.f32 %v456, %v448
        %v482 = vmul.f32 %v457, %v446
        %v483 = vmul.f32 %v457, %v447
        %v484 = vmul.f32 %v457, %v448
        %v485 = vsub.f32 %v402, 1.0
        %v486 = vsub.f32 %v403, 1.0
        %v487 = vsub.f32 %v404, 1.0
        %v488 = vsub.f32 %v405, 1.0
        %v489 = vsub.f32 %v406, 1.0
        %v490 = vsub.f32 %v407, 1.0
        %v491 = vsub.f32 %v408, 1.0
        %v492 = vsub.f32 %v409, 1.0
        %v493 = vsub.f32 %v410, 1.0
        %v494 = vand.u32 2147483647, %v485
        %v495 = vand.u32 2147483647, %v486
        %v496 = vand.u32 2147483647, %v487
        %v497 = vand.u32 2147483647, %v488
        %v498 = vand.u32 2147483647, %v489
        %v499 = vand.u32 2147483647, %v490
        %v500 = vand.u32 2147483647, %v491
        %v501 = vand.u32 2147483647, %v492
        %v502 = vand.u32 2147483647, %v493
        %v503 = vsub.f32 1.0, %v494
        %v504 = vsub.f32 1.0, %v495
        %v505 = vsub.f32 1.0, %v496
        %v506 = vsub.f32 1.0, %v497
        %v507 = vsub.f32 1.0, %v498
        %v508 = vsub.f32 1.0, %v499
        %v509 = vsub.f32 1.0, %v500
        %v510 = vsub.f32 1.0, %v501
        %v511 = vsub.f32 1.0, %v502
        %v512 = vmax.f32 %v503, 0.0
        %v513 = vmax.f32 %v504, 0.0
        %v514 = vmax.f32 %v505, 0.0
        %v515 = vmax.f32 %v506, 0.0
        %v516 = vmax.f32 %v507, 0.0
        %v517 = vmax.f32 %v508, 0.0
        %v518 = vmax.f32 %v509, 0.0
        %v519 = vmax.f32 %v510, 0.0
        %v520 = vmax.f32 %v511, 0.0
        %s521 = scalar_lea.vmem %s352, 24 [#allocation2]
        %v522 = vld [vmem:[%s521] sm:$0xff]
        %v523 = vld [vmem:[%s521 + $0x8] sm:$0xff]
        %v524 = vld [vmem:[%s521 + $0x10] sm:$0xf]
        %v525 = vcvt.s32.f32 %v522
        %v526 = vcvt.s32.f32 %v523
        %v527 = vcvt.s32.f32 %v524
        %v528 = vperm.slane %v512, 1
        %v529 = vperm.slane %v513, 1
        %v530 = vperm.slane %v514, 1
        %v531 = vperm.slane %v515, 1
        %v532 = vperm.slane %v516, 1
        %v533 = vperm.slane %v517, 1
        %v534 = vperm.slane %v518, 1
        %v535 = vperm.slane %v519, 1
        %v536 = vperm.slane %v520, 1
        %v537 = vmul.f32 %v528, %v525
        %v538 = vmul.f32 %v528, %v526
        %v539 = vmul.f32 %v528, %v527
        %v540 = vmul.f32 %v529, %v525
        %v541 = vmul.f32 %v529, %v526
        %v542 = vmul.f32 %v529, %v527
        %v543 = vmul.f32 %v530, %v525
        %v544 = vmul.f32 %v530, %v526
        %v545 = vmul.f32 %v530, %v527
        %v546 = vmul.f32 %v531, %v525
        %v547 = vmul.f32 %v531, %v526
        %v548 = vmul.f32 %v531, %v527
        %v549 = vmul.f32 %v532, %v525
        %v550 = vmul.f32 %v532, %v526
        %v551 = vmul.f32 %v532, %v527
        %v552 = vmul.f32 %v533, %v525
        %v553 = vmul.f32 %v533, %v526
        %v554 = vmul.f32 %v533, %v527
        %v555 = vmul.f32 %v534, %v525
        %v556 = vmul.f32 %v534, %v526
        %v557 = vmul.f32 %v534, %v527
        %v558 = vmul.f32 %v535, %v525
        %v559 = vmul.f32 %v535, %v526
        %v560 = vmul.f32 %v535, %v527
        %v561 = vmul.f32 %v536, %v525
        %v562 = vmul.f32 %v536, %v526
        %v563 = vmul.f32 %v536, %v527
        %v564 = vadd.f32 %v458, %v537
        %v565 = vadd.f32 %v459, %v538
        %v566 = vadd.f32 %v460, %v539
        %v567 = vadd.f32 %v461, %v540
        %v568 = vadd.f32 %v462, %v541
        %v569 = vadd.f32 %v463, %v542
        %v570 = vadd.f32 %v464, %v543
        %v571 = vadd.f32 %v465, %v544
        %v572 = vadd.f32 %v466, %v545
        %v573 = vadd.f32 %v467, %v546
        %v574 = vadd.f32 %v468, %v547
        %v575 = vadd.f32 %v469, %v548
        %v576 = vadd.f32 %v470, %v549
        %v577 = vadd.f32 %v471, %v550
        %v578 = vadd.f32 %v472, %v551
        %v579 = vadd.f32 %v473, %v552
        %v580 = vadd.f32 %v474, %v553
        %v581 = vadd.f32 %v475, %v554
        %v582 = vadd.f32 %v476, %v555
        %v583 = vadd.f32 %v477, %v556
        %v584 = vadd.f32 %v478, %v557
        %v585 = vadd.f32 %v479, %v558
        %v586 = vadd.f32 %v480, %v559
        %v587 = vadd.f32 %v481, %v560
        %v588 = vadd.f32 %v482, %v561
        %v589 = vadd.f32 %v483, %v562
        %v590 = vadd.f32 %v484, %v563
        %v591 = vsub.f32 %v402, 2.0
        %v592 = vsub.f32 %v403, 2.0
        %v593 = vsub.f32 %v404, 2.0
        %v594 = vsub.f32 %v405, 2.0
        %v595 = vsub.f32 %v406, 2.0
        %v596 = vsub.f32 %v407, 2.0
        %v597 = vsub.f32 %v408, 2.0
        %v598 = vsub.f32 %v409, 2.0
        %v599 = vsub.f32 %v410, 2.0
        %v600 = vand.u32 2147483647, %v591
        %v601 = vand.u32 2147483647, %v592
        %v602 = vand.u32 2147483647, %v593
        %v603 = vand.u32 2147483647, %v594
        %v604 = vand.u32 2147483647, %v595
        %v605 = vand.u32 2147483647, %v596
        %v606 = vand.u32 2147483647, %v597
        %v607 = vand.u32 2147483647, %v598
        %v608 = vand.u32 2147483647, %v599
        %v609 = vsub.f32 1.0, %v600
        %v610 = vsub.f32 1.0, %v601
        %v611 = vsub.f32 1.0, %v602
        %v612 = vsub.f32 1.0, %v603
        %v613 = vsub.f32 1.0, %v604
        %v614 = vsub.f32 1.0, %v605
        %v615 = vsub.f32 1.0, %v606
        %v616 = vsub.f32 1.0, %v607
        %v617 = vsub.f32 1.0, %v608
        %v618 = vmax.f32 %v609, 0.0
        %v619 = vmax.f32 %v610, 0.0
        %v620 = vmax.f32 %v611, 0.0
        %v621 = vmax.f32 %v612, 0.0
        %v622 = vmax.f32 %v613, 0.0
        %v623 = vmax.f32 %v614, 0.0
        %v624 = vmax.f32 %v615, 0.0
        %v625 = vmax.f32 %v616, 0.0
        %v626 = vmax.f32 %v617, 0.0
        %s627 = scalar_lea.vmem %s352, 48 [#allocation2]
        %v628 = vld [vmem:[%s627] sm:$0xff]
        %v629 = vld [vmem:[%s627 + $0x8] sm:$0xff]
        %v630 = vld [vmem:[%s627 + $0x10] sm:$0xf]
        %v631 = vcvt.s32.f32 %v628
        %v632 = vcvt.s32.f32 %v629
        %v633 = vcvt.s32.f32 %v630
        %v634 = vperm.slane %v618, 1
        %v635 = vperm.slane %v619, 1
        %v636 = vperm.slane %v620, 1
        %v637 = vperm.slane %v621, 1
        %v638 = vperm.slane %v622, 1
        %v639 = vperm.slane %v623, 1
        %v640 = vperm.slane %v624, 1
        %v641 = vperm.slane %v625, 1
        %v642 = vperm.slane %v626, 1
        %v643 = vmul.f32 %v634, %v631
        %v644 = vmul.f32 %v634, %v632
        %v645 = vmul.f32 %v634, %v633
        %v646 = vmul.f32 %v635, %v631
        %v647 = vmul.f32 %v635, %v632
        %v648 = vmul.f32 %v635, %v633
        %v649 = vmul.f32 %v636, %v631
        %v650 = vmul.f32 %v636, %v632
        %v651 = vmul.f32 %v636, %v633
        %v652 = vmul.f32 %v637, %v631
        %v653 = vmul.f32 %v637, %v632
        %v654 = vmul.f32 %v637, %v633
        %v655 = vmul.f32 %v638, %v631
        %v656 = vmul.f32 %v638, %v632
        %v657 = vmul.f32 %v638, %v633
        %v658 = vmul.f32 %v639, %v631
        %v659 = vmul.f32 %v639, %v632
        %v660 = vmul.f32 %v639, %v633
        %v661 = vmul.f32 %v640, %v631
        %v662 = vmul.f32 %v640, %v632
        %v663 = vmul.f32 %v640, %v633
        %v664 = vmul.f32 %v641, %v631
        %v665 = vmul.f32 %v641, %v632
        %v666 = vmul.f32 %v641, %v633
        %v667 = vmul.f32 %v642, %v631
        %v668 = vmul.f32 %v642, %v632
        %v669 = vmul.f32 %v642, %v633
        %v670 = vadd.f32 %v564, %v643
        %v671 = vadd.f32 %v565, %v644
        %v672 = vadd.f32 %v566, %v645
        %v673 = vadd.f32 %v567, %v646
        %v674 = vadd.f32 %v568, %v647
        %v675 = vadd.f32 %v569, %v648
        %v676 = vadd.f32 %v570, %v649
        %v677 = vadd.f32 %v571, %v650
        %v678 = vadd.f32 %v572, %v651
        %v679 = vadd.f32 %v573, %v652
        %v680 = vadd.f32 %v574, %v653
        %v681 = vadd.f32 %v575, %v654
        %v682 = vadd.f32 %v576, %v655
        %v683 = vadd.f32 %v577, %v656
        %v684 = vadd.f32 %v578, %v657
        %v685 = vadd.f32 %v579, %v658
        %v686 = vadd.f32 %v580, %v659
        %v687 = vadd.f32 %v581, %v660
        %v688 = vadd.f32 %v582, %v661
        %v689 = vadd.f32 %v583, %v662
        %v690 = vadd.f32 %v584, %v663
        %v691 = vadd.f32 %v585, %v664
        %v692 = vadd.f32 %v586, %v665
        %v693 = vadd.f32 %v587, %v666
        %v694 = vadd.f32 %v588, %v667
        %v695 = vadd.f32 %v589, %v668
        %v696 = vadd.f32 %v590, %v669
        %v697 = vsub.f32 %v402, 3.0
        %v698 = vsub.f32 %v403, 3.0
        %v699 = vsub.f32 %v404, 3.0
        %v700 = vsub.f32 %v405, 3.0
        %v701 = vsub.f32 %v406, 3.0
        %v702 = vsub.f32 %v407, 3.0
        %v703 = vsub.f32 %v408, 3.0
        %v704 = vsub.f32 %v409, 3.0
        %v705 = vsub.f32 %v410, 3.0
        %v706 = vand.u32 2147483647, %v697
        %v707 = vand.u32 2147483647, %v698
        %v708 = vand.u32 2147483647, %v699
        %v709 = vand.u32 2147483647, %v700
        %v710 = vand.u32 2147483647, %v701
        %v711 = vand.u32 2147483647, %v702
        %v712 = vand.u32 2147483647, %v703
        %v713 = vand.u32 2147483647, %v704
        %v714 = vand.u32 2147483647, %v705
        %v715 = vsub.f32 1.0, %v706
        %v716 = vsub.f32 1.0, %v707
        %v717 = vsub.f32 1.0, %v708
        %v718 = vsub.f32 1.0, %v709
        %v719 = vsub.f32 1.0, %v710
        %v720 = vsub.f32 1.0, %v711
        %v721 = vsub.f32 1.0, %v712
        %v722 = vsub.f32 1.0, %v713
        %v723 = vsub.f32 1.0, %v714
        %v724 = vmax.f32 %v715, 0.0
        %v725 = vmax.f32 %v716, 0.0
        %v726 = vmax.f32 %v717, 0.0
        %v727 = vmax.f32 %v718, 0.0
        %v728 = vmax.f32 %v719, 0.0
        %v729 = vmax.f32 %v720, 0.0
        %v730 = vmax.f32 %v721, 0.0
        %v731 = vmax.f32 %v722, 0.0
        %v732 = vmax.f32 %v723, 0.0
        %s733 = scalar_lea.vmem %s352, 72 [#allocation2]
        %v734 = vld [vmem:[%s733] sm:$0xff]
        %v735 = vld [vmem:[%s733 + $0x8] sm:$0xff]
        %v736 = vld [vmem:[%s733 + $0x10] sm:$0xf]
        %v737 = vcvt.s32.f32 %v734
        %v738 = vcvt.s32.f32 %v735
        %v739 = vcvt.s32.f32 %v736
        %v740 = vperm.slane %v724, 1
        %v741 = vperm.slane %v725, 1
        %v742 = vperm.slane %v726, 1
        %v743 = vperm.slane %v727, 1
        %v744 = vperm.slane %v728, 1
        %v745 = vperm.slane %v729, 1
        %v746 = vperm.slane %v730, 1
        %v747 = vperm.slane %v731, 1
        %v748 = vperm.slane %v732, 1
        %v749 = vmul.f32 %v740, %v737
        %v750 = vmul.f32 %v740, %v738
        %v751 = vmul.f32 %v740, %v739
        %v752 = vmul.f32 %v741, %v737
        %v753 = vmul.f32 %v741, %v738
        %v754 = vmul.f32 %v741, %v739
        %v755 = vmul.f32 %v742, %v737
        %v756 = vmul.f32 %v742, %v738
        %v757 = vmul.f32 %v742, %v739
        %v758 = vmul.f32 %v743, %v737
        %v759 = vmul.f32 %v743, %v738
        %v760 = vmul.f32 %v743, %v739
        %v761 = vmul.f32 %v744, %v737
        %v762 = vmul.f32 %v744, %v738
        %v763 = vmul.f32 %v744, %v739
        %v764 = vmul.f32 %v745, %v737
        %v765 = vmul.f32 %v745, %v738
        %v766 = vmul.f32 %v745, %v739
        %v767 = vmul.f32 %v746, %v737
        %v768 = vmul.f32 %v746, %v738
        %v769 = vmul.f32 %v746, %v739
        %v770 = vmul.f32 %v747, %v737
        %v771 = vmul.f32 %v747, %v738
        %v772 = vmul.f32 %v747, %v739
        %v773 = vmul.f32 %v748, %v737
        %v774 = vmul.f32 %v748, %v738
        %v775 = vmul.f32 %v748, %v739
        %v776 = vadd.f32 %v670, %v749
        %v777 = vadd.f32 %v671, %v750
        %v778 = vadd.f32 %v672, %v751
        %v779 = vadd.f32 %v673, %v752
        %v780 = vadd.f32 %v674, %v753
        %v781 = vadd.f32 %v675, %v754
        %v782 = vadd.f32 %v676, %v755
        %v783 = vadd.f32 %v677, %v756
        %v784 = vadd.f32 %v678, %v757
        %v785 = vadd.f32 %v679, %v758
        %v786 = vadd.f32 %v680, %v759
        %v787 = vadd.f32 %v681, %v760
        %v788 = vadd.f32 %v682, %v761
        %v789 = vadd.f32 %v683, %v762
        %v790 = vadd.f32 %v684, %v763
        %v791 = vadd.f32 %v685, %v764
        %v792 = vadd.f32 %v686, %v765
        %v793 = vadd.f32 %v687, %v766
        %v794 = vadd.f32 %v688, %v767
        %v795 = vadd.f32 %v689, %v768
        %v796 = vadd.f32 %v690, %v769
        %v797 = vadd.f32 %v691, %v770
        %v798 = vadd.f32 %v692, %v771
        %v799 = vadd.f32 %v693, %v772
        %v800 = vadd.f32 %v694, %v773
        %v801 = vadd.f32 %v695, %v774
        %v802 = vadd.f32 %v696, %v775
        %v803 = vsub.f32 %v402, 4.0
        %v804 = vsub.f32 %v403, 4.0
        %v805 = vsub.f32 %v404, 4.0
        %v806 = vsub.f32 %v405, 4.0
        %v807 = vsub.f32 %v406, 4.0
        %v808 = vsub.f32 %v407, 4.0
        %v809 = vsub.f32 %v408, 4.0
        %v810 = vsub.f32 %v409, 4.0
        %v811 = vsub.f32 %v410, 4.0
        %v812 = vand.u32 2147483647, %v803
        %v813 = vand.u32 2147483647, %v804
        %v814 = vand.u32 2147483647, %v805
        %v815 = vand.u32 2147483647, %v806
        %v816 = vand.u32 2147483647, %v807
        %v817 = vand.u32 2147483647, %v808
        %v818 = vand.u32 2147483647, %v809
        %v819 = vand.u32 2147483647, %v810
        %v820 = vand.u32 2147483647, %v811
        %v821 = vsub.f32 1.0, %v812
        %v822 = vsub.f32 1.0, %v813
        %v823 = vsub.f32 1.0, %v814
        %v824 = vsub.f32 1.0, %v815
        %v825 = vsub.f32 1.0, %v816
        %v826 = vsub.f32 1.0, %v817
        %v827 = vsub.f32 1.0, %v818
        %v828 = vsub.f32 1.0, %v819
        %v829 = vsub.f32 1.0, %v820
        %v830 = vmax.f32 %v821, 0.0
        %v831 = vmax.f32 %v822, 0.0
        %v832 = vmax.f32 %v823, 0.0
        %v833 = vmax.f32 %v824, 0.0
        %v834 = vmax.f32 %v825, 0.0
        %v835 = vmax.f32 %v826, 0.0
        %v836 = vmax.f32 %v827, 0.0
        %v837 = vmax.f32 %v828, 0.0
        %v838 = vmax.f32 %v829, 0.0
        %s839 = scalar_lea.vmem %s352, 96 [#allocation2]
        %v840 = vld [vmem:[%s839] sm:$0xff]
        %v841 = vld [vmem:[%s839 + $0x8] sm:$0xff]
        %v842 = vld [vmem:[%s839 + $0x10] sm:$0xf]
        %v843 = vcvt.s32.f32 %v840
        %v844 = vcvt.s32.f32 %v841
        %v845 = vcvt.s32.f32 %v842
        %v846 = vperm.slane %v830, 1
        %v847 = vperm.slane %v831, 1
        %v848 = vperm.slane %v832, 1
        %v849 = vperm.slane %v833, 1
        %v850 = vperm.slane %v834, 1
        %v851 = vperm.slane %v835, 1
        %v852 = vperm.slane %v836, 1
        %v853 = vperm.slane %v837, 1
        %v854 = vperm.slane %v838, 1
        %v855 = vmul.f32 %v846, %v843
        %v856 = vmul.f32 %v846, %v844
        %v857 = vmul.f32 %v846, %v845
        %v858 = vmul.f32 %v847, %v843
        %v859 = vmul.f32 %v847, %v844
        %v860 = vmul.f32 %v847, %v845
        %v861 = vmul.f32 %v848, %v843
        %v862 = vmul.f32 %v848, %v844
        %v863 = vmul.f32 %v848, %v845
        %v864 = vmul.f32 %v849, %v843
        %v865 = vmul.f32 %v849, %v844
        %v866 = vmul.f32 %v849, %v845
        %v867 = vmul.f32 %v850, %v843
        %v868 = vmul.f32 %v850, %v844
        %v869 = vmul.f32 %v850, %v845
        %v870 = vmul.f32 %v851, %v843
        %v871 = vmul.f32 %v851, %v844
        %v872 = vmul.f32 %v851, %v845
        %v873 = vmul.f32 %v852, %v843
        %v874 = vmul.f32 %v852, %v844
        %v875 = vmul.f32 %v852, %v845
        %v876 = vmul.f32 %v853, %v843
        %v877 = vmul.f32 %v853, %v844
        %v878 = vmul.f32 %v853, %v845
        %v879 = vmul.f32 %v854, %v843
        %v880 = vmul.f32 %v854, %v844
        %v881 = vmul.f32 %v854, %v845
        %v882 = vadd.f32 %v776, %v855
        %v883 = vadd.f32 %v777, %v856
        %v884 = vadd.f32 %v778, %v857
        %v885 = vadd.f32 %v779, %v858
        %v886 = vadd.f32 %v780, %v859
        %v887 = vadd.f32 %v781, %v860
        %v888 = vadd.f32 %v782, %v861
        %v889 = vadd.f32 %v783, %v862
        %v890 = vadd.f32 %v784, %v863
        %v891 = vadd.f32 %v785, %v864
        %v892 = vadd.f32 %v786, %v865
        %v893 = vadd.f32 %v787, %v866
        %v894 = vadd.f32 %v788, %v867
        %v895 = vadd.f32 %v789, %v868
        %v896 = vadd.f32 %v790, %v869
        %v897 = vadd.f32 %v791, %v870
        %v898 = vadd.f32 %v792, %v871
        %v899 = vadd.f32 %v793, %v872
        %v900 = vadd.f32 %v794, %v873
        %v901 = vadd.f32 %v795, %v874
        %v902 = vadd.f32 %v796, %v875
        %v903 = vadd.f32 %v797, %v876
        %v904 = vadd.f32 %v798, %v877
        %v905 = vadd.f32 %v799, %v878
        %v906 = vadd.f32 %v800, %v879
        %v907 = vadd.f32 %v801, %v880
        %v908 = vadd.f32 %v802, %v881
        %v909 = vsub.f32 %v402, 5.0
        %v910 = vsub.f32 %v403, 5.0
        %v911 = vsub.f32 %v404, 5.0
        %v912 = vsub.f32 %v405, 5.0
        %v913 = vsub.f32 %v406, 5.0
        %v914 = vsub.f32 %v407, 5.0
        %v915 = vsub.f32 %v408, 5.0
        %v916 = vsub.f32 %v409, 5.0
        %v917 = vsub.f32 %v410, 5.0
        %v918 = vand.u32 2147483647, %v909
        %v919 = vand.u32 2147483647, %v910
        %v920 = vand.u32 2147483647, %v911
        %v921 = vand.u32 2147483647, %v912
        %v922 = vand.u32 2147483647, %v913
        %v923 = vand.u32 2147483647, %v914
        %v924 = vand.u32 2147483647, %v915
        %v925 = vand.u32 2147483647, %v916
        %v926 = vand.u32 2147483647, %v917
        %v927 = vsub.f32 1.0, %v918
        %v928 = vsub.f32 1.0, %v919
        %v929 = vsub.f32 1.0, %v920
        %v930 = vsub.f32 1.0, %v921
        %v931 = vsub.f32 1.0, %v922
        %v932 = vsub.f32 1.0, %v923
        %v933 = vsub.f32 1.0, %v924
        %v934 = vsub.f32 1.0, %v925
        %v935 = vsub.f32 1.0, %v926
        %v936 = vmax.f32 %v927, 0.0
        %v937 = vmax.f32 %v928, 0.0
        %v938 = vmax.f32 %v929, 0.0
        %v939 = vmax.f32 %v930, 0.0
        %v940 = vmax.f32 %v931, 0.0
        %v941 = vmax.f32 %v932, 0.0
        %v942 = vmax.f32 %v933, 0.0
        %v943 = vmax.f32 %v934, 0.0
        %v944 = vmax.f32 %v935, 0.0
        %s945 = scalar_lea.vmem %s352, 120 [#allocation2]
        %v946 = vld [vmem:[%s945] sm:$0xff]
        %v947 = vld [vmem:[%s945 + $0x8] sm:$0xff]
        %v948 = vld [vmem:[%s945 + $0x10] sm:$0xf]
        %v949 = vcvt.s32.f32 %v946
        %v950 = vcvt.s32.f32 %v947
        %v951 = vcvt.s32.f32 %v948
        %v952 = vperm.slane %v936, 1
        %v953 = vperm.slane %v937, 1
        %v954 = vperm.slane %v938, 1
        %v955 = vperm.slane %v939, 1
        %v956 = vperm.slane %v940, 1
        %v957 = vperm.slane %v941, 1
        %v958 = vperm.slane %v942, 1
        %v959 = vperm.slane %v943, 1
        %v960 = vperm.slane %v944, 1
        %v961 = vmul.f32 %v952, %v949
        %v962 = vmul.f32 %v952, %v950
        %v963 = vmul.f32 %v952, %v951
        %v964 = vmul.f32 %v953, %v949
        %v965 = vmul.f32 %v953, %v950
        %v966 = vmul.f32 %v953, %v951
        %v967 = vmul.f32 %v954, %v949
        %v968 = vmul.f32 %v954, %v950
        %v969 = vmul.f32 %v954, %v951
        %v970 = vmul.f32 %v955, %v949
        %v971 = vmul.f32 %v955, %v950
        %v972 = vmul.f32 %v955, %v951
        %v973 = vmul.f32 %v956, %v949
        %v974 = vmul.f32 %v956, %v950
        %v975 = vmul.f32 %v956, %v951
        %v976 = vmul.f32 %v957, %v949
        %v977 = vmul.f32 %v957, %v950
        %v978 = vmul.f32 %v957, %v951
        %v979 = vmul.f32 %v958, %v949
        %v980 = vmul.f32 %v958, %v950
        %v981 = vmul.f32 %v958, %v951
        %v982 = vmul.f32 %v959, %v949
        %v983 = vmul.f32 %v959, %v950
        %v984 = vmul.f32 %v959, %v951
        %v985 = vmul.f32 %v960, %v949
        %v986 = vmul.f32 %v960, %v950
        %v987 = vmul.f32 %v960, %v951
        %v988 = vadd.f32 %v882, %v961
        %v989 = vadd.f32 %v883, %v962
        %v990 = vadd.f32 %v884, %v963
        %v991 = vadd.f32 %v885, %v964
        %v992 = vadd.f32 %v886, %v965
        %v993 = vadd.f32 %v887, %v966
        %v994 = vadd.f32 %v888, %v967
        %v995 = vadd.f32 %v889, %v968
        %v996 = vadd.f32 %v890, %v969
        %v997 = vadd.f32 %v891, %v970
        %v998 = vadd.f32 %v892, %v971
        %v999 = vadd.f32 %v893, %v972
        %v1000 = vadd.f32 %v894, %v973
        %v1001 = vadd.f32 %v895, %v974
        %v1002 = vadd.f32 %v896, %v975
        %v1003 = vadd.f32 %v897, %v976
        %v1004 = vadd.f32 %v898, %v977
        %v1005 = vadd.f32 %v899, %v978
        %v1006 = vadd.f32 %v900, %v979
        %v1007 = vadd.f32 %v901, %v980
        %v1008 = vadd.f32 %v902, %v981
        %v1009 = vadd.f32 %v903, %v982
        %v1010 = vadd.f32 %v904, %v983
        %v1011 = vadd.f32 %v905, %v984
        %v1012 = vadd.f32 %v906, %v985
        %v1013 = vadd.f32 %v907, %v986
        %v1014 = vadd.f32 %v908, %v987
        %v1015 = vsub.f32 %v402, 6.0
        %v1016 = vsub.f32 %v403, 6.0
        %v1017 = vsub.f32 %v404, 6.0
        %v1018 = vsub.f32 %v405, 6.0
        %v1019 = vsub.f32 %v406, 6.0
        %v1020 = vsub.f32 %v407, 6.0
        %v1021 = vsub.f32 %v408, 6.0
        %v1022 = vsub.f32 %v409, 6.0
        %v1023 = vsub.f32 %v410, 6.0
        %v1024 = vand.u32 2147483647, %v1015
        %v1025 = vand.u32 2147483647, %v1016
        %v1026 = vand.u32 2147483647, %v1017
        %v1027 = vand.u32 2147483647, %v1018
        %v1028 = vand.u32 2147483647, %v1019
        %v1029 = vand.u32 2147483647, %v1020
        %v1030 = vand.u32 2147483647, %v1021
        %v1031 = vand.u32 2147483647, %v1022
        %v1032 = vand.u32 2147483647, %v1023
        %v1033 = vsub.f32 1.0, %v1024
        %v1034 = vsub.f32 1.0, %v1025
        %v1035 = vsub.f32 1.0, %v1026
        %v1036 = vsub.f32 1.0, %v1027
        %v1037 = vsub.f32 1.0, %v1028
        %v1038 = vsub.f32 1.0, %v1029
        %v1039 = vsub.f32 1.0, %v1030
        %v1040 = vsub.f32 1.0, %v1031
        %v1041 = vsub.f32 1.0, %v1032
        %v1042 = vmax.f32 %v1033, 0.0
        %v1043 = vmax.f32 %v1034, 0.0
        %v1044 = vmax.f32 %v1035, 0.0
        %v1045 = vmax.f32 %v1036, 0.0
        %v1046 = vmax.f32 %v1037, 0.0
        %v1047 = vmax.f32 %v1038, 0.0
        %v1048 = vmax.f32 %v1039, 0.0
        %v1049 = vmax.f32 %v1040, 0.0
        %v1050 = vmax.f32 %v1041, 0.0
        %s1051 = scalar_lea.vmem %s352, 144 [#allocation2]
        %v1052 = vld [vmem:[%s1051] sm:$0xff]
        %v1053 = vld [vmem:[%s1051 + $0x8] sm:$0xff]
        %v1054 = vld [vmem:[%s1051 + $0x10] sm:$0xf]
        %v1055 = vcvt.s32.f32 %v1052
        %v1056 = vcvt.s32.f32 %v1053
        %v1057 = vcvt.s32.f32 %v1054
        %v1058 = vperm.slane %v1042, 1
        %v1059 = vperm.slane %v1043, 1
        %v1060 = vperm.slane %v1044, 1
        %v1061 = vperm.slane %v1045, 1
        %v1062 = vperm.slane %v1046, 1
        %v1063 = vperm.slane %v1047, 1
        %v1064 = vperm.slane %v1048, 1
        %v1065 = vperm.slane %v1049, 1
        %v1066 = vperm.slane %v1050, 1
        %v1067 = vmul.f32 %v1058, %v1055
        %v1068 = vmul.f32 %v1058, %v1056
        %v1069 = vmul.f32 %v1058, %v1057
        %v1070 = vmul.f32 %v1059, %v1055
        %v1071 = vmul.f32 %v1059, %v1056
        %v1072 = vmul.f32 %v1059, %v1057
        %v1073 = vmul.f32 %v1060, %v1055
        %v1074 = vmul.f32 %v1060, %v1056
        %v1075 = vmul.f32 %v1060, %v1057
        %v1076 = vmul.f32 %v1061, %v1055
        %v1077 = vmul.f32 %v1061, %v1056
        %v1078 = vmul.f32 %v1061, %v1057
        %v1079 = vmul.f32 %v1062, %v1055
        %v1080 = vmul.f32 %v1062, %v1056
        %v1081 = vmul.f32 %v1062, %v1057
        %v1082 = vmul.f32 %v1063, %v1055
        %v1083 = vmul.f32 %v1063, %v1056
        %v1084 = vmul.f32 %v1063, %v1057
        %v1085 = vmul.f32 %v1064, %v1055
        %v1086 = vmul.f32 %v1064, %v1056
        %v1087 = vmul.f32 %v1064, %v1057
        %v1088 = vmul.f32 %v1065, %v1055
        %v1089 = vmul.f32 %v1065, %v1056
        %v1090 = vmul.f32 %v1065, %v1057
        %v1091 = vmul.f32 %v1066, %v1055
        %v1092 = vmul.f32 %v1066, %v1056
        %v1093 = vmul.f32 %v1066, %v1057
        %v1094 = vadd.f32 %v988, %v1067
        %v1095 = vadd.f32 %v989, %v1068
        %v1096 = vadd.f32 %v990, %v1069
        %v1097 = vadd.f32 %v991, %v1070
        %v1098 = vadd.f32 %v992, %v1071
        %v1099 = vadd.f32 %v993, %v1072
        %v1100 = vadd.f32 %v994, %v1073
        %v1101 = vadd.f32 %v995, %v1074
        %v1102 = vadd.f32 %v996, %v1075
        %v1103 = vadd.f32 %v997, %v1076
        %v1104 = vadd.f32 %v998, %v1077
        %v1105 = vadd.f32 %v999, %v1078
        %v1106 = vadd.f32 %v1000, %v1079
        %v1107 = vadd.f32 %v1001, %v1080
        %v1108 = vadd.f32 %v1002, %v1081
        %v1109 = vadd.f32 %v1003, %v1082
        %v1110 = vadd.f32 %v1004, %v1083
        %v1111 = vadd.f32 %v1005, %v1084
        %v1112 = vadd.f32 %v1006, %v1085
        %v1113 = vadd.f32 %v1007, %v1086
        %v1114 = vadd.f32 %v1008, %v1087
        %v1115 = vadd.f32 %v1009, %v1088
        %v1116 = vadd.f32 %v1010, %v1089
        %v1117 = vadd.f32 %v1011, %v1090
        %v1118 = vadd.f32 %v1012, %v1091
        %v1119 = vadd.f32 %v1013, %v1092
        %v1120 = vadd.f32 %v1014, %v1093
        %v1121 = vsub.f32 %v402, 7.0
        %v1122 = vsub.f32 %v403, 7.0
        %v1123 = vsub.f32 %v404, 7.0
        %v1124 = vsub.f32 %v405, 7.0
        %v1125 = vsub.f32 %v406, 7.0
        %v1126 = vsub.f32 %v407, 7.0
        %v1127 = vsub.f32 %v408, 7.0
        %v1128 = vsub.f32 %v409, 7.0
        %v1129 = vsub.f32 %v410, 7.0
        %v1130 = vand.u32 2147483647, %v1121
        %v1131 = vand.u32 2147483647, %v1122
        %v1132 = vand.u32 2147483647, %v1123
        %v1133 = vand.u32 2147483647, %v1124
        %v1134 = vand.u32 2147483647, %v1125
        %v1135 = vand.u32 2147483647, %v1126
        %v1136 = vand.u32 2147483647, %v1127
        %v1137 = vand.u32 2147483647, %v1128
        %v1138 = vand.u32 2147483647, %v1129
        %v1139 = vsub.f32 1.0, %v1130
        %v1140 = vsub.f32 1.0, %v1131
        %v1141 = vsub.f32 1.0, %v1132
        %v1142 = vsub.f32 1.0, %v1133
        %v1143 = vsub.f32 1.0, %v1134
        %v1144 = vsub.f32 1.0, %v1135
        %v1145 = vsub.f32 1.0, %v1136
        %v1146 = vsub.f32 1.0, %v1137
        %v1147 = vsub.f32 1.0, %v1138
        %v1148 = vmax.f32 %v1139, 0.0
        %v1149 = vmax.f32 %v1140, 0.0
        %v1150 = vmax.f32 %v1141, 0.0
        %v1151 = vmax.f32 %v1142, 0.0
        %v1152 = vmax.f32 %v1143, 0.0
        %v1153 = vmax.f32 %v1144, 0.0
        %v1154 = vmax.f32 %v1145, 0.0
        %v1155 = vmax.f32 %v1146, 0.0
        %v1156 = vmax.f32 %v1147, 0.0
        %s1157 = scalar_lea.vmem %s352, 168 [#allocation2]
        %v1158 = vld [vmem:[%s1157] sm:$0xff]
        %v1159 = vld [vmem:[%s1157 + $0x8] sm:$0xff]
        %v1160 = vld [vmem:[%s1157 + $0x10] sm:$0xf]
        %v1161 = vcvt.s32.f32 %v1158
        %v1162 = vcvt.s32.f32 %v1159
        %v1163 = vcvt.s32.f32 %v1160
        %v1164 = vperm.slane %v1148, 1
        %v1165 = vperm.slane %v1149, 1
        %v1166 = vperm.slane %v1150, 1
        %v1167 = vperm.slane %v1151, 1
        %v1168 = vperm.slane %v1152, 1
        %v1169 = vperm.slane %v1153, 1
        %v1170 = vperm.slane %v1154, 1
        %v1171 = vperm.slane %v1155, 1
        %v1172 = vperm.slane %v1156, 1
        %v1173 = vmul.f32 %v1164, %v1161
        %v1174 = vmul.f32 %v1164, %v1162
        %v1175 = vmul.f32 %v1164, %v1163
        %v1176 = vmul.f32 %v1165, %v1161
        %v1177 = vmul.f32 %v1165, %v1162
        %v1178 = vmul.f32 %v1165, %v1163
        %v1179 = vmul.f32 %v1166, %v1161
        %v1180 = vmul.f32 %v1166, %v1162
        %v1181 = vmul.f32 %v1166, %v1163
        %v1182 = vmul.f32 %v1167, %v1161
        %v1183 = vmul.f32 %v1167, %v1162
        %v1184 = vmul.f32 %v1167, %v1163
        %v1185 = vmul.f32 %v1168, %v1161
        %v1186 = vmul.f32 %v1168, %v1162
        %v1187 = vmul.f32 %v1168, %v1163
        %v1188 = vmul.f32 %v1169, %v1161
        %v1189 = vmul.f32 %v1169, %v1162
        %v1190 = vmul.f32 %v1169, %v1163
        %v1191 = vmul.f32 %v1170, %v1161
        %v1192 = vmul.f32 %v1170, %v1162
        %v1193 = vmul.f32 %v1170, %v1163
        %v1194 = vmul.f32 %v1171, %v1161
        %v1195 = vmul.f32 %v1171, %v1162
        %v1196 = vmul.f32 %v1171, %v1163
        %v1197 = vmul.f32 %v1172, %v1161
        %v1198 = vmul.f32 %v1172, %v1162
        %v1199 = vmul.f32 %v1172, %v1163
        %v1200 = vadd.f32 %v1094, %v1173
        %v1201 = vadd.f32 %v1095, %v1174
        %v1202 = vadd.f32 %v1096, %v1175
        %v1203 = vadd.f32 %v1097, %v1176
        %v1204 = vadd.f32 %v1098, %v1177
        %v1205 = vadd.f32 %v1099, %v1178
        %v1206 = vadd.f32 %v1100, %v1179
        %v1207 = vadd.f32 %v1101, %v1180
        %v1208 = vadd.f32 %v1102, %v1181
        %v1209 = vadd.f32 %v1103, %v1182
        %v1210 = vadd.f32 %v1104, %v1183
        %v1211 = vadd.f32 %v1105, %v1184
        %v1212 = vadd.f32 %v1106, %v1185
        %v1213 = vadd.f32 %v1107, %v1186
        %v1214 = vadd.f32 %v1108, %v1187
        %v1215 = vadd.f32 %v1109, %v1188
        %v1216 = vadd.f32 %v1110, %v1189
        %v1217 = vadd.f32 %v1111, %v1190
        %v1218 = vadd.f32 %v1112, %v1191
        %v1219 = vadd.f32 %v1113, %v1192
        %v1220 = vadd.f32 %v1114, %v1193
        %v1221 = vadd.f32 %v1115, %v1194
        %v1222 = vadd.f32 %v1116, %v1195
        %v1223 = vadd.f32 %v1117, %v1196
        %v1224 = vadd.f32 %v1118, %v1197
        %v1225 = vadd.f32 %v1119, %v1198
        %v1226 = vadd.f32 %v1120, %v1199
        %v1227 = vsub.f32 %v402, 8.0
        %v1228 = vsub.f32 %v403, 8.0
        %v1229 = vsub.f32 %v404, 8.0
        %v1230 = vsub.f32 %v405, 8.0
        %v1231 = vsub.f32 %v406, 8.0
        %v1232 = vsub.f32 %v407, 8.0
        %v1233 = vsub.f32 %v408, 8.0
        %v1234 = vsub.f32 %v409, 8.0
        %v1235 = vsub.f32 %v410, 8.0
        %v1236 = vand.u32 2147483647, %v1227
        %v1237 = vand.u32 2147483647, %v1228
        %v1238 = vand.u32 2147483647, %v1229
        %v1239 = vand.u32 2147483647, %v1230
        %v1240 = vand.u32 2147483647, %v1231
        %v1241 = vand.u32 2147483647, %v1232
        %v1242 = vand.u32 2147483647, %v1233
        %v1243 = vand.u32 2147483647, %v1234
        %v1244 = vand.u32 2147483647, %v1235
        %v1245 = vsub.f32 1.0, %v1236
        %v1246 = vsub.f32 1.0, %v1237
        %v1247 = vsub.f32 1.0, %v1238
        %v1248 = vsub.f32 1.0, %v1239
        %v1249 = vsub.f32 1.0, %v1240
        %v1250 = vsub.f32 1.0, %v1241
        %v1251 = vsub.f32 1.0, %v1242
        %v1252 = vsub.f32 1.0, %v1243
        %v1253 = vsub.f32 1.0, %v1244
        %v1254 = vmax.f32 %v1245, 0.0
        %v1255 = vmax.f32 %v1246, 0.0
        %v1256 = vmax.f32 %v1247, 0.0
        %v1257 = vmax.f32 %v1248, 0.0
        %v1258 = vmax.f32 %v1249, 0.0
        %v1259 = vmax.f32 %v1250, 0.0
        %v1260 = vmax.f32 %v1251, 0.0
        %v1261 = vmax.f32 %v1252, 0.0
        %v1262 = vmax.f32 %v1253, 0.0
        %s1263 = scalar_lea.vmem %s352, 192 [#allocation2]
        %v1264 = vld [vmem:[%s1263] sm:$0xff]
        %v1265 = vld [vmem:[%s1263 + $0x8] sm:$0xff]
        %v1266 = vld [vmem:[%s1263 + $0x10] sm:$0xf]
        %v1267 = vcvt.s32.f32 %v1264
        %v1268 = vcvt.s32.f32 %v1265
        %v1269 = vcvt.s32.f32 %v1266
        %v1270 = vperm.slane %v1254, 1
        %v1271 = vperm.slane %v1255, 1
        %v1272 = vperm.slane %v1256, 1
        %v1273 = vperm.slane %v1257, 1
        %v1274 = vperm.slane %v1258, 1
        %v1275 = vperm.slane %v1259, 1
        %v1276 = vperm.slane %v1260, 1
        %v1277 = vperm.slane %v1261, 1
        %v1278 = vperm.slane %v1262, 1
        %v1279 = vmul.f32 %v1270, %v1267
        %v1280 = vmul.f32 %v1270, %v1268
        %v1281 = vmul.f32 %v1270, %v1269
        %v1282 = vmul.f32 %v1271, %v1267
        %v1283 = vmul.f32 %v1271, %v1268
        %v1284 = vmul.f32 %v1271, %v1269
        %v1285 = vmul.f32 %v1272, %v1267
        %v1286 = vmul.f32 %v1272, %v1268
        %v1287 = vmul.f32 %v1272, %v1269
        %v1288 = vmul.f32 %v1273, %v1267
        %v1289 = vmul.f32 %v1273, %v1268
        %v1290 = vmul.f32 %v1273, %v1269
        %v1291 = vmul.f32 %v1274, %v1267
        %v1292 = vmul.f32 %v1274, %v1268
        %v1293 = vmul.f32 %v1274, %v1269
        %v1294 = vmul.f32 %v1275, %v1267
        %v1295 = vmul.f32 %v1275, %v1268
        %v1296 = vmul.f32 %v1275, %v1269
        %v1297 = vmul.f32 %v1276, %v1267
        %v1298 = vmul.f32 %v1276, %v1268
        %v1299 = vmul.f32 %v1276, %v1269
        %v1300 = vmul.f32 %v1277, %v1267
        %v1301 = vmul.f32 %v1277, %v1268
        %v1302 = vmul.f32 %v1277, %v1269
        %v1303 = vmul.f32 %v1278, %v1267
        %v1304 = vmul.f32 %v1278, %v1268
        %v1305 = vmul.f32 %v1278, %v1269
        %v1306 = vadd.f32 %v1200, %v1279
        %v1307 = vadd.f32 %v1201, %v1280
        %v1308 = vadd.f32 %v1202, %v1281
        %v1309 = vadd.f32 %v1203, %v1282
        %v1310 = vadd.f32 %v1204, %v1283
        %v1311 = vadd.f32 %v1205, %v1284
        %v1312 = vadd.f32 %v1206, %v1285
        %v1313 = vadd.f32 %v1207, %v1286
        %v1314 = vadd.f32 %v1208, %v1287
        %v1315 = vadd.f32 %v1209, %v1288
        %v1316 = vadd.f32 %v1210, %v1289
        %v1317 = vadd.f32 %v1211, %v1290
        %v1318 = vadd.f32 %v1212, %v1291
        %v1319 = vadd.f32 %v1213, %v1292
        %v1320 = vadd.f32 %v1214, %v1293
        %v1321 = vadd.f32 %v1215, %v1294
        %v1322 = vadd.f32 %v1216, %v1295
        %v1323 = vadd.f32 %v1217, %v1296
        %v1324 = vadd.f32 %v1218, %v1297
        %v1325 = vadd.f32 %v1219, %v1298
        %v1326 = vadd.f32 %v1220, %v1299
        %v1327 = vadd.f32 %v1221, %v1300
        %v1328 = vadd.f32 %v1222, %v1301
        %v1329 = vadd.f32 %v1223, %v1302
        %v1330 = vadd.f32 %v1224, %v1303
        %v1331 = vadd.f32 %v1225, %v1304
        %v1332 = vadd.f32 %v1226, %v1305
        %v1333 = vsub.f32 %v402, 9.0
        %v1334 = vsub.f32 %v403, 9.0
        %v1335 = vsub.f32 %v404, 9.0
        %v1336 = vsub.f32 %v405, 9.0
        %v1337 = vsub.f32 %v406, 9.0
        %v1338 = vsub.f32 %v407, 9.0
        %v1339 = vsub.f32 %v408, 9.0
        %v1340 = vsub.f32 %v409, 9.0
        %v1341 = vsub.f32 %v410, 9.0
        %v1342 = vand.u32 2147483647, %v1333
        %v1343 = vand.u32 2147483647, %v1334
        %v1344 = vand.u32 2147483647, %v1335
        %v1345 = vand.u32 2147483647, %v1336
        %v1346 = vand.u32 2147483647, %v1337
        %v1347 = vand.u32 2147483647, %v1338
        %v1348 = vand.u32 2147483647, %v1339
        %v1349 = vand.u32 2147483647, %v1340
        %v1350 = vand.u32 2147483647, %v1341
        %v1351 = vsub.f32 1.0, %v1342
        %v1352 = vsub.f32 1.0, %v1343
        %v1353 = vsub.f32 1.0, %v1344
        %v1354 = vsub.f32 1.0, %v1345
        %v1355 = vsub.f32 1.0, %v1346
        %v1356 = vsub.f32 1.0, %v1347
        %v1357 = vsub.f32 1.0, %v1348
        %v1358 = vsub.f32 1.0, %v1349
        %v1359 = vsub.f32 1.0, %v1350
        %v1360 = vmax.f32 %v1351, 0.0
        %v1361 = vmax.f32 %v1352, 0.0
        %v1362 = vmax.f32 %v1353, 0.0
        %v1363 = vmax.f32 %v1354, 0.0
        %v1364 = vmax.f32 %v1355, 0.0
        %v1365 = vmax.f32 %v1356, 0.0
        %v1366 = vmax.f32 %v1357, 0.0
        %v1367 = vmax.f32 %v1358, 0.0
        %v1368 = vmax.f32 %v1359, 0.0
        %s1369 = scalar_lea.vmem %s352, 216 [#allocation2]
        %v1370 = vld [vmem:[%s1369] sm:$0xff]
        %v1371 = vld [vmem:[%s1369 + $0x8] sm:$0xff]
        %v1372 = vld [vmem:[%s1369 + $0x10] sm:$0xf]
        %v1373 = vcvt.s32.f32 %v1370
        %v1374 = vcvt.s32.f32 %v1371
        %v1375 = vcvt.s32.f32 %v1372
        %v1376 = vperm.slane %v1360, 1
        %v1377 = vperm.slane %v1361, 1
        %v1378 = vperm.slane %v1362, 1
        %v1379 = vperm.slane %v1363, 1
        %v1380 = vperm.slane %v1364, 1
        %v1381 = vperm.slane %v1365, 1
        %v1382 = vperm.slane %v1366, 1
        %v1383 = vperm.slane %v1367, 1
        %v1384 = vperm.slane %v1368, 1
        %v1385 = vmul.f32 %v1376, %v1373
        %v1386 = vmul.f32 %v1376, %v1374
        %v1387 = vmul.f32 %v1376, %v1375
        %v1388 = vmul.f32 %v1377, %v1373
        %v1389 = vmul.f32 %v1377, %v1374
        %v1390 = vmul.f32 %v1377, %v1375
        %v1391 = vmul.f32 %v1378, %v1373
        %v1392 = vmul.f32 %v1378, %v1374
        %v1393 = vmul.f32 %v1378, %v1375
        %v1394 = vmul.f32 %v1379, %v1373
        %v1395 = vmul.f32 %v1379, %v1374
        %v1396 = vmul.f32 %v1379, %v1375
        %v1397 = vmul.f32 %v1380, %v1373
        %v1398 = vmul.f32 %v1380, %v1374
        %v1399 = vmul.f32 %v1380, %v1375
        %v1400 = vmul.f32 %v1381, %v1373
        %v1401 = vmul.f32 %v1381, %v1374
        %v1402 = vmul.f32 %v1381, %v1375
        %v1403 = vmul.f32 %v1382, %v1373
        %v1404 = vmul.f32 %v1382, %v1374
        %v1405 = vmul.f32 %v1382, %v1375
        %v1406 = vmul.f32 %v1383, %v1373
        %v1407 = vmul.f32 %v1383, %v1374
        %v1408 = vmul.f32 %v1383, %v1375
        %v1409 = vmul.f32 %v1384, %v1373
        %v1410 = vmul.f32 %v1384, %v1374
        %v1411 = vmul.f32 %v1384, %v1375
        %v1412 = vadd.f32 %v1306, %v1385
        %v1413 = vadd.f32 %v1307, %v1386
        %v1414 = vadd.f32 %v1308, %v1387
        %v1415 = vadd.f32 %v1309, %v1388
        %v1416 = vadd.f32 %v1310, %v1389
        %v1417 = vadd.f32 %v1311, %v1390
        %v1418 = vadd.f32 %v1312, %v1391
        %v1419 = vadd.f32 %v1313, %v1392
        %v1420 = vadd.f32 %v1314, %v1393
        %v1421 = vadd.f32 %v1315, %v1394
        %v1422 = vadd.f32 %v1316, %v1395
        %v1423 = vadd.f32 %v1317, %v1396
        %v1424 = vadd.f32 %v1318, %v1397
        %v1425 = vadd.f32 %v1319, %v1398
        %v1426 = vadd.f32 %v1320, %v1399
        %v1427 = vadd.f32 %v1321, %v1400
        %v1428 = vadd.f32 %v1322, %v1401
        %v1429 = vadd.f32 %v1323, %v1402
        %v1430 = vadd.f32 %v1324, %v1403
        %v1431 = vadd.f32 %v1325, %v1404
        %v1432 = vadd.f32 %v1326, %v1405
        %v1433 = vadd.f32 %v1327, %v1406
        %v1434 = vadd.f32 %v1328, %v1407
        %v1435 = vadd.f32 %v1329, %v1408
        %v1436 = vadd.f32 %v1330, %v1409
        %v1437 = vadd.f32 %v1331, %v1410
        %v1438 = vadd.f32 %v1332, %v1411
        %v1439 = vsub.f32 %v402, 10.0
        %v1440 = vsub.f32 %v403, 10.0
        %v1441 = vsub.f32 %v404, 10.0
        %v1442 = vsub.f32 %v405, 10.0
        %v1443 = vsub.f32 %v406, 10.0
        %v1444 = vsub.f32 %v407, 10.0
        %v1445 = vsub.f32 %v408, 10.0
        %v1446 = vsub.f32 %v409, 10.0
        %v1447 = vsub.f32 %v410, 10.0
        %v1448 = vand.u32 2147483647, %v1439
        %v1449 = vand.u32 2147483647, %v1440
        %v1450 = vand.u32 2147483647, %v1441
        %v1451 = vand.u32 2147483647, %v1442
        %v1452 = vand.u32 2147483647, %v1443
        %v1453 = vand.u32 2147483647, %v1444
        %v1454 = vand.u32 2147483647, %v1445
        %v1455 = vand.u32 2147483647, %v1446
        %v1456 = vand.u32 2147483647, %v1447
        %v1457 = vsub.f32 1.0, %v1448
        %v1458 = vsub.f32 1.0, %v1449
        %v1459 = vsub.f32 1.0, %v1450
        %v1460 = vsub.f32 1.0, %v1451
        %v1461 = vsub.f32 1.0, %v1452
        %v1462 = vsub.f32 1.0, %v1453
        %v1463 = vsub.f32 1.0, %v1454
        %v1464 = vsub.f32 1.0, %v1455
        %v1465 = vsub.f32 1.0, %v1456
        %v1466 = vmax.f32 %v1457, 0.0
        %v1467 = vmax.f32 %v1458, 0.0
        %v1468 = vmax.f32 %v1459, 0.0
        %v1469 = vmax.f32 %v1460, 0.0
        %v1470 = vmax.f32 %v1461, 0.0
        %v1471 = vmax.f32 %v1462, 0.0
        %v1472 = vmax.f32 %v1463, 0.0
        %v1473 = vmax.f32 %v1464, 0.0
        %v1474 = vmax.f32 %v1465, 0.0
        %s1475 = scalar_lea.vmem %s352, 240 [#allocation2]
        %v1476 = vld [vmem:[%s1475] sm:$0xff]
        %v1477 = vld [vmem:[%s1475 + $0x8] sm:$0xff]
        %v1478 = vld [vmem:[%s1475 + $0x10] sm:$0xf]
        %v1479 = vcvt.s32.f32 %v1476
        %v1480 = vcvt.s32.f32 %v1477
        %v1481 = vcvt.s32.f32 %v1478
        %v1482 = vperm.slane %v1466, 1
        %v1483 = vperm.slane %v1467, 1
        %v1484 = vperm.slane %v1468, 1
        %v1485 = vperm.slane %v1469, 1
        %v1486 = vperm.slane %v1470, 1
        %v1487 = vperm.slane %v1471, 1
        %v1488 = vperm.slane %v1472, 1
        %v1489 = vperm.slane %v1473, 1
        %v1490 = vperm.slane %v1474, 1
        %v1491 = vmul.f32 %v1482, %v1479
        %v1492 = vmul.f32 %v1482, %v1480
        %v1493 = vmul.f32 %v1482, %v1481
        %v1494 = vmul.f32 %v1483, %v1479
        %v1495 = vmul.f32 %v1483, %v1480
        %v1496 = vmul.f32 %v1483, %v1481
        %v1497 = vmul.f32 %v1484, %v1479
        %v1498 = vmul.f32 %v1484, %v1480
        %v1499 = vmul.f32 %v1484, %v1481
        %v1500 = vmul.f32 %v1485, %v1479
        %v1501 = vmul.f32 %v1485, %v1480
        %v1502 = vmul.f32 %v1485, %v1481
        %v1503 = vmul.f32 %v1486, %v1479
        %v1504 = vmul.f32 %v1486, %v1480
        %v1505 = vmul.f32 %v1486, %v1481
        %v1506 = vmul.f32 %v1487, %v1479
        %v1507 = vmul.f32 %v1487, %v1480
        %v1508 = vmul.f32 %v1487, %v1481
        %v1509 = vmul.f32 %v1488, %v1479
        %v1510 = vmul.f32 %v1488, %v1480
        %v1511 = vmul.f32 %v1488, %v1481
        %v1512 = vmul.f32 %v1489, %v1479
        %v1513 = vmul.f32 %v1489, %v1480
        %v1514 = vmul.f32 %v1489, %v1481
        %v1515 = vmul.f32 %v1490, %v1479
        %v1516 = vmul.f32 %v1490, %v1480
        %v1517 = vmul.f32 %v1490, %v1481
        %v1518 = vadd.f32 %v1412, %v1491
        %v1519 = vadd.f32 %v1413, %v1492
        %v1520 = vadd.f32 %v1414, %v1493
        %v1521 = vadd.f32 %v1415, %v1494
        %v1522 = vadd.f32 %v1416, %v1495
        %v1523 = vadd.f32 %v1417, %v1496
        %v1524 = vadd.f32 %v1418, %v1497
        %v1525 = vadd.f32 %v1419, %v1498
        %v1526 = vadd.f32 %v1420, %v1499
        %v1527 = vadd.f32 %v1421, %v1500
        %v1528 = vadd.f32 %v1422, %v1501
        %v1529 = vadd.f32 %v1423, %v1502
        %v1530 = vadd.f32 %v1424, %v1503
        %v1531 = vadd.f32 %v1425, %v1504
        %v1532 = vadd.f32 %v1426, %v1505
        %v1533 = vadd.f32 %v1427, %v1506
        %v1534 = vadd.f32 %v1428, %v1507
        %v1535 = vadd.f32 %v1429, %v1508
        %v1536 = vadd.f32 %v1430, %v1509
        %v1537 = vadd.f32 %v1431, %v1510
        %v1538 = vadd.f32 %v1432, %v1511
        %v1539 = vadd.f32 %v1433, %v1512
        %v1540 = vadd.f32 %v1434, %v1513
        %v1541 = vadd.f32 %v1435, %v1514
        %v1542 = vadd.f32 %v1436, %v1515
        %v1543 = vadd.f32 %v1437, %v1516
        %v1544 = vadd.f32 %v1438, %v1517
        %v1545 = vsub.f32 %v402, 11.0
        %v1546 = vsub.f32 %v403, 11.0
        %v1547 = vsub.f32 %v404, 11.0
        %v1548 = vsub.f32 %v405, 11.0
        %v1549 = vsub.f32 %v406, 11.0
        %v1550 = vsub.f32 %v407, 11.0
        %v1551 = vsub.f32 %v408, 11.0
        %v1552 = vsub.f32 %v409, 11.0
        %v1553 = vsub.f32 %v410, 11.0
        %v1554 = vand.u32 2147483647, %v1545
        %v1555 = vand.u32 2147483647, %v1546
        %v1556 = vand.u32 2147483647, %v1547
        %v1557 = vand.u32 2147483647, %v1548
        %v1558 = vand.u32 2147483647, %v1549
        %v1559 = vand.u32 2147483647, %v1550
        %v1560 = vand.u32 2147483647, %v1551
        %v1561 = vand.u32 2147483647, %v1552
        %v1562 = vand.u32 2147483647, %v1553
        %v1563 = vsub.f32 1.0, %v1554
        %v1564 = vsub.f32 1.0, %v1555
        %v1565 = vsub.f32 1.0, %v1556
        %v1566 = vsub.f32 1.0, %v1557
        %v1567 = vsub.f32 1.0, %v1558
        %v1568 = vsub.f32 1.0, %v1559
        %v1569 = vsub.f32 1.0, %v1560
        %v1570 = vsub.f32 1.0, %v1561
        %v1571 = vsub.f32 1.0, %v1562
        %v1572 = vmax.f32 %v1563, 0.0
        %v1573 = vmax.f32 %v1564, 0.0
        %v1574 = vmax.f32 %v1565, 0.0
        %v1575 = vmax.f32 %v1566, 0.0
        %v1576 = vmax.f32 %v1567, 0.0
        %v1577 = vmax.f32 %v1568, 0.0
        %v1578 = vmax.f32 %v1569, 0.0
        %v1579 = vmax.f32 %v1570, 0.0
        %v1580 = vmax.f32 %v1571, 0.0
        %s1581 = scalar_lea.vmem %s352, 264 [#allocation2]
        %v1582 = vld [vmem:[%s1581] sm:$0xff]
        %v1583 = vld [vmem:[%s1581 + $0x8] sm:$0xff]
        %v1584 = vld [vmem:[%s1581 + $0x10] sm:$0xf]
        %v1585 = vcvt.s32.f32 %v1582
        %v1586 = vcvt.s32.f32 %v1583
        %v1587 = vcvt.s32.f32 %v1584
        %v1588 = vperm.slane %v1572, 1
        %v1589 = vperm.slane %v1573, 1
        %v1590 = vperm.slane %v1574, 1
        %v1591 = vperm.slane %v1575, 1
        %v1592 = vperm.slane %v1576, 1
        %v1593 = vperm.slane %v1577, 1
        %v1594 = vperm.slane %v1578, 1
        %v1595 = vperm.slane %v1579, 1
        %v1596 = vperm.slane %v1580, 1
        %v1597 = vmul.f32 %v1588, %v1585
        %v1598 = vmul.f32 %v1588, %v1586
        %v1599 = vmul.f32 %v1588, %v1587
        %v1600 = vmul.f32 %v1589, %v1585
        %v1601 = vmul.f32 %v1589, %v1586
        %v1602 = vmul.f32 %v1589, %v1587
        %v1603 = vmul.f32 %v1590, %v1585
        %v1604 = vmul.f32 %v1590, %v1586
        %v1605 = vmul.f32 %v1590, %v1587
        %v1606 = vmul.f32 %v1591, %v1585
        %v1607 = vmul.f32 %v1591, %v1586
        %v1608 = vmul.f32 %v1591, %v1587
        %v1609 = vmul.f32 %v1592, %v1585
        %v1610 = vmul.f32 %v1592, %v1586
        %v1611 = vmul.f32 %v1592, %v1587
        %v1612 = vmul.f32 %v1593, %v1585
        %v1613 = vmul.f32 %v1593, %v1586
        %v1614 = vmul.f32 %v1593, %v1587
        %v1615 = vmul.f32 %v1594, %v1585
        %v1616 = vmul.f32 %v1594, %v1586
        %v1617 = vmul.f32 %v1594, %v1587
        %v1618 = vmul.f32 %v1595, %v1585
        %v1619 = vmul.f32 %v1595, %v1586
        %v1620 = vmul.f32 %v1595, %v1587
        %v1621 = vmul.f32 %v1596, %v1585
        %v1622 = vmul.f32 %v1596, %v1586
        %v1623 = vmul.f32 %v1596, %v1587
        %v1624 = vadd.f32 %v1518, %v1597
        %v1625 = vadd.f32 %v1519, %v1598
        %v1626 = vadd.f32 %v1520, %v1599
        %v1627 = vadd.f32 %v1521, %v1600
        %v1628 = vadd.f32 %v1522, %v1601
        %v1629 = vadd.f32 %v1523, %v1602
        %v1630 = vadd.f32 %v1524, %v1603
        %v1631 = vadd.f32 %v1525, %v1604
        %v1632 = vadd.f32 %v1526, %v1605
        %v1633 = vadd.f32 %v1527, %v1606
        %v1634 = vadd.f32 %v1528, %v1607
        %v1635 = vadd.f32 %v1529, %v1608
        %v1636 = vadd.f32 %v1530, %v1609
        %v1637 = vadd.f32 %v1531, %v1610
        %v1638 = vadd.f32 %v1532, %v1611
        %v1639 = vadd.f32 %v1533, %v1612
        %v1640 = vadd.f32 %v1534, %v1613
        %v1641 = vadd.f32 %v1535, %v1614
        %v1642 = vadd.f32 %v1536, %v1615
        %v1643 = vadd.f32 %v1537, %v1616
        %v1644 = vadd.f32 %v1538, %v1617
        %v1645 = vadd.f32 %v1539, %v1618
        %v1646 = vadd.f32 %v1540, %v1619
        %v1647 = vadd.f32 %v1541, %v1620
        %v1648 = vadd.f32 %v1542, %v1621
        %v1649 = vadd.f32 %v1543, %v1622
        %v1650 = vadd.f32 %v1544, %v1623
        %v1651 = vsub.f32 %v402, 12.0
        %v1652 = vsub.f32 %v403, 12.0
        %v1653 = vsub.f32 %v404, 12.0
        %v1654 = vsub.f32 %v405, 12.0
        %v1655 = vsub.f32 %v406, 12.0
        %v1656 = vsub.f32 %v407, 12.0
        %v1657 = vsub.f32 %v408, 12.0
        %v1658 = vsub.f32 %v409, 12.0
        %v1659 = vsub.f32 %v410, 12.0
        %v1660 = vand.u32 2147483647, %v1651
        %v1661 = vand.u32 2147483647, %v1652
        %v1662 = vand.u32 2147483647, %v1653
        %v1663 = vand.u32 2147483647, %v1654
        %v1664 = vand.u32 2147483647, %v1655
        %v1665 = vand.u32 2147483647, %v1656
        %v1666 = vand.u32 2147483647, %v1657
        %v1667 = vand.u32 2147483647, %v1658
        %v1668 = vand.u32 2147483647, %v1659
        %v1669 = vsub.f32 1.0, %v1660
        %v1670 = vsub.f32 1.0, %v1661
        %v1671 = vsub.f32 1.0, %v1662
        %v1672 = vsub.f32 1.0, %v1663
        %v1673 = vsub.f32 1.0, %v1664
        %v1674 = vsub.f32 1.0, %v1665
        %v1675 = vsub.f32 1.0, %v1666
        %v1676 = vsub.f32 1.0, %v1667
        %v1677 = vsub.f32 1.0, %v1668
        %v1678 = vmax.f32 %v1669, 0.0
        %v1679 = vmax.f32 %v1670, 0.0
        %v1680 = vmax.f32 %v1671, 0.0
        %v1681 = vmax.f32 %v1672, 0.0
        %v1682 = vmax.f32 %v1673, 0.0
        %v1683 = vmax.f32 %v1674, 0.0
        %v1684 = vmax.f32 %v1675, 0.0
        %v1685 = vmax.f32 %v1676, 0.0
        %v1686 = vmax.f32 %v1677, 0.0
        %s1687 = scalar_lea.vmem %s352, 288 [#allocation2]
        %v1688 = vld [vmem:[%s1687] sm:$0xff]
        %v1689 = vld [vmem:[%s1687 + $0x8] sm:$0xff]
        %v1690 = vld [vmem:[%s1687 + $0x10] sm:$0xf]
        %v1691 = vcvt.s32.f32 %v1688
        %v1692 = vcvt.s32.f32 %v1689
        %v1693 = vcvt.s32.f32 %v1690
        %v1694 = vperm.slane %v1678, 1
        %v1695 = vperm.slane %v1679, 1
        %v1696 = vperm.slane %v1680, 1
        %v1697 = vperm.slane %v1681, 1
        %v1698 = vperm.slane %v1682, 1
        %v1699 = vperm.slane %v1683, 1
        %v1700 = vperm.slane %v1684, 1
        %v1701 = vperm.slane %v1685, 1
        %v1702 = vperm.slane %v1686, 1
        %v1703 = vmul.f32 %v1694, %v1691
        %v1704 = vmul.f32 %v1694, %v1692
        %v1705 = vmul.f32 %v1694, %v1693
        %v1706 = vmul.f32 %v1695, %v1691
        %v1707 = vmul.f32 %v1695, %v1692
        %v1708 = vmul.f32 %v1695, %v1693
        %v1709 = vmul.f32 %v1696, %v1691
        %v1710 = vmul.f32 %v1696, %v1692
        %v1711 = vmul.f32 %v1696, %v1693
        %v1712 = vmul.f32 %v1697, %v1691
        %v1713 = vmul.f32 %v1697, %v1692
        %v1714 = vmul.f32 %v1697, %v1693
        %v1715 = vmul.f32 %v1698, %v1691
        %v1716 = vmul.f32 %v1698, %v1692
        %v1717 = vmul.f32 %v1698, %v1693
        %v1718 = vmul.f32 %v1699, %v1691
        %v1719 = vmul.f32 %v1699, %v1692
        %v1720 = vmul.f32 %v1699, %v1693
        %v1721 = vmul.f32 %v1700, %v1691
        %v1722 = vmul.f32 %v1700, %v1692
        %v1723 = vmul.f32 %v1700, %v1693
        %v1724 = vmul.f32 %v1701, %v1691
        %v1725 = vmul.f32 %v1701, %v1692
        %v1726 = vmul.f32 %v1701, %v1693
        %v1727 = vmul.f32 %v1702, %v1691
        %v1728 = vmul.f32 %v1702, %v1692
        %v1729 = vmul.f32 %v1702, %v1693
        %v1730 = vadd.f32 %v1624, %v1703
        %v1731 = vadd.f32 %v1625, %v1704
        %v1732 = vadd.f32 %v1626, %v1705
        %v1733 = vadd.f32 %v1627, %v1706
        %v1734 = vadd.f32 %v1628, %v1707
        %v1735 = vadd.f32 %v1629, %v1708
        %v1736 = vadd.f32 %v1630, %v1709
        %v1737 = vadd.f32 %v1631, %v1710
        %v1738 = vadd.f32 %v1632, %v1711
        %v1739 = vadd.f32 %v1633, %v1712
        %v1740 = vadd.f32 %v1634, %v1713
        %v1741 = vadd.f32 %v1635, %v1714
        %v1742 = vadd.f32 %v1636, %v1715
        %v1743 = vadd.f32 %v1637, %v1716
        %v1744 = vadd.f32 %v1638, %v1717
        %v1745 = vadd.f32 %v1639, %v1718
        %v1746 = vadd.f32 %v1640, %v1719
        %v1747 = vadd.f32 %v1641, %v1720
        %v1748 = vadd.f32 %v1642, %v1721
        %v1749 = vadd.f32 %v1643, %v1722
        %v1750 = vadd.f32 %v1644, %v1723
        %v1751 = vadd.f32 %v1645, %v1724
        %v1752 = vadd.f32 %v1646, %v1725
        %v1753 = vadd.f32 %v1647, %v1726
        %v1754 = vadd.f32 %v1648, %v1727
        %v1755 = vadd.f32 %v1649, %v1728
        %v1756 = vadd.f32 %v1650, %v1729
        %v1757 = vsub.f32 %v402, 13.0
        %v1758 = vsub.f32 %v403, 13.0
        %v1759 = vsub.f32 %v404, 13.0
        %v1760 = vsub.f32 %v405, 13.0
        %v1761 = vsub.f32 %v406, 13.0
        %v1762 = vsub.f32 %v407, 13.0
        %v1763 = vsub.f32 %v408, 13.0
        %v1764 = vsub.f32 %v409, 13.0
        %v1765 = vsub.f32 %v410, 13.0
        %v1766 = vand.u32 2147483647, %v1757
        %v1767 = vand.u32 2147483647, %v1758
        %v1768 = vand.u32 2147483647, %v1759
        %v1769 = vand.u32 2147483647, %v1760
        %v1770 = vand.u32 2147483647, %v1761
        %v1771 = vand.u32 2147483647, %v1762
        %v1772 = vand.u32 2147483647, %v1763
        %v1773 = vand.u32 2147483647, %v1764
        %v1774 = vand.u32 2147483647, %v1765
        %v1775 = vsub.f32 1.0, %v1766
        %v1776 = vsub.f32 1.0, %v1767
        %v1777 = vsub.f32 1.0, %v1768
        %v1778 = vsub.f32 1.0, %v1769
        %v1779 = vsub.f32 1.0, %v1770
        %v1780 = vsub.f32 1.0, %v1771
        %v1781 = vsub.f32 1.0, %v1772
        %v1782 = vsub.f32 1.0, %v1773
        %v1783 = vsub.f32 1.0, %v1774
        %v1784 = vmax.f32 %v1775, 0.0
        %v1785 = vmax.f32 %v1776, 0.0
        %v1786 = vmax.f32 %v1777, 0.0
        %v1787 = vmax.f32 %v1778, 0.0
        %v1788 = vmax.f32 %v1779, 0.0
        %v1789 = vmax.f32 %v1780, 0.0
        %v1790 = vmax.f32 %v1781, 0.0
        %v1791 = vmax.f32 %v1782, 0.0
        %v1792 = vmax.f32 %v1783, 0.0
        %s1793 = scalar_lea.vmem %s352, 312 [#allocation2]
        %v1794 = vld [vmem:[%s1793] sm:$0xff]
        %v1795 = vld [vmem:[%s1793 + $0x8] sm:$0xff]
        %v1796 = vld [vmem:[%s1793 + $0x10] sm:$0xf]
        %v1797 = vcvt.s32.f32 %v1794
        %v1798 = vcvt.s32.f32 %v1795
        %v1799 = vcvt.s32.f32 %v1796
        %v1800 = vperm.slane %v1784, 1
        %v1801 = vperm.slane %v1785, 1
        %v1802 = vperm.slane %v1786, 1
        %v1803 = vperm.slane %v1787, 1
        %v1804 = vperm.slane %v1788, 1
        %v1805 = vperm.slane %v1789, 1
        %v1806 = vperm.slane %v1790, 1
        %v1807 = vperm.slane %v1791, 1
        %v1808 = vperm.slane %v1792, 1
        %v1809 = vmul.f32 %v1800, %v1797
        %v1810 = vmul.f32 %v1800, %v1798
        %v1811 = vmul.f32 %v1800, %v1799
        %v1812 = vmul.f32 %v1801, %v1797
        %v1813 = vmul.f32 %v1801, %v1798
        %v1814 = vmul.f32 %v1801, %v1799
        %v1815 = vmul.f32 %v1802, %v1797
        %v1816 = vmul.f32 %v1802, %v1798
        %v1817 = vmul.f32 %v1802, %v1799
        %v1818 = vmul.f32 %v1803, %v1797
        %v1819 = vmul.f32 %v1803, %v1798
        %v1820 = vmul.f32 %v1803, %v1799
        %v1821 = vmul.f32 %v1804, %v1797
        %v1822 = vmul.f32 %v1804, %v1798
        %v1823 = vmul.f32 %v1804, %v1799
        %v1824 = vmul.f32 %v1805, %v1797
        %v1825 = vmul.f32 %v1805, %v1798
        %v1826 = vmul.f32 %v1805, %v1799
        %v1827 = vmul.f32 %v1806, %v1797
        %v1828 = vmul.f32 %v1806, %v1798
        %v1829 = vmul.f32 %v1806, %v1799
        %v1830 = vmul.f32 %v1807, %v1797
        %v1831 = vmul.f32 %v1807, %v1798
        %v1832 = vmul.f32 %v1807, %v1799
        %v1833 = vmul.f32 %v1808, %v1797
        %v1834 = vmul.f32 %v1808, %v1798
        %v1835 = vmul.f32 %v1808, %v1799
        %v1836 = vadd.f32 %v1730, %v1809
        %v1837 = vadd.f32 %v1731, %v1810
        %v1838 = vadd.f32 %v1732, %v1811
        %v1839 = vadd.f32 %v1733, %v1812
        %v1840 = vadd.f32 %v1734, %v1813
        %v1841 = vadd.f32 %v1735, %v1814
        %v1842 = vadd.f32 %v1736, %v1815
        %v1843 = vadd.f32 %v1737, %v1816
        %v1844 = vadd.f32 %v1738, %v1817
        %v1845 = vadd.f32 %v1739, %v1818
        %v1846 = vadd.f32 %v1740, %v1819
        %v1847 = vadd.f32 %v1741, %v1820
        %v1848 = vadd.f32 %v1742, %v1821
        %v1849 = vadd.f32 %v1743, %v1822
        %v1850 = vadd.f32 %v1744, %v1823
        %v1851 = vadd.f32 %v1745, %v1824
        %v1852 = vadd.f32 %v1746, %v1825
        %v1853 = vadd.f32 %v1747, %v1826
        %v1854 = vadd.f32 %v1748, %v1827
        %v1855 = vadd.f32 %v1749, %v1828
        %v1856 = vadd.f32 %v1750, %v1829
        %v1857 = vadd.f32 %v1751, %v1830
        %v1858 = vadd.f32 %v1752, %v1831
        %v1859 = vadd.f32 %v1753, %v1832
        %v1860 = vadd.f32 %v1754, %v1833
        %v1861 = vadd.f32 %v1755, %v1834
        %v1862 = vadd.f32 %v1756, %v1835
        %v1863 = vsub.f32 %v402, 14.0
        %v1864 = vsub.f32 %v403, 14.0
        %v1865 = vsub.f32 %v404, 14.0
        %v1866 = vsub.f32 %v405, 14.0
        %v1867 = vsub.f32 %v406, 14.0
        %v1868 = vsub.f32 %v407, 14.0
        %v1869 = vsub.f32 %v408, 14.0
        %v1870 = vsub.f32 %v409, 14.0
        %v1871 = vsub.f32 %v410, 14.0
        %v1872 = vand.u32 2147483647, %v1863
        %v1873 = vand.u32 2147483647, %v1864
        %v1874 = vand.u32 2147483647, %v1865
        %v1875 = vand.u32 2147483647, %v1866
        %v1876 = vand.u32 2147483647, %v1867
        %v1877 = vand.u32 2147483647, %v1868
        %v1878 = vand.u32 2147483647, %v1869
        %v1879 = vand.u32 2147483647, %v1870
        %v1880 = vand.u32 2147483647, %v1871
        %v1881 = vsub.f32 1.0, %v1872
        %v1882 = vsub.f32 1.0, %v1873
        %v1883 = vsub.f32 1.0, %v1874
        %v1884 = vsub.f32 1.0, %v1875
        %v1885 = vsub.f32 1.0, %v1876
        %v1886 = vsub.f32 1.0, %v1877
        %v1887 = vsub.f32 1.0, %v1878
        %v1888 = vsub.f32 1.0, %v1879
        %v1889 = vsub.f32 1.0, %v1880
        %v1890 = vmax.f32 %v1881, 0.0
        %v1891 = vmax.f32 %v1882, 0.0
        %v1892 = vmax.f32 %v1883, 0.0
        %v1893 = vmax.f32 %v1884, 0.0
        %v1894 = vmax.f32 %v1885, 0.0
        %v1895 = vmax.f32 %v1886, 0.0
        %v1896 = vmax.f32 %v1887, 0.0
        %v1897 = vmax.f32 %v1888, 0.0
        %v1898 = vmax.f32 %v1889, 0.0
        %s1899 = scalar_lea.vmem %s352, 336 [#allocation2]
        %v1900 = vld [vmem:[%s1899] sm:$0xff]
        %v1901 = vld [vmem:[%s1899 + $0x8] sm:$0xff]
        %v1902 = vld [vmem:[%s1899 + $0x10] sm:$0xf]
        %v1903 = vcvt.s32.f32 %v1900
        %v1904 = vcvt.s32.f32 %v1901
        %v1905 = vcvt.s32.f32 %v1902
        %v1906 = vperm.slane %v1890, 1
        %v1907 = vperm.slane %v1891, 1
        %v1908 = vperm.slane %v1892, 1
        %v1909 = vperm.slane %v1893, 1
        %v1910 = vperm.slane %v1894, 1
        %v1911 = vperm.slane %v1895, 1
        %v1912 = vperm.slane %v1896, 1
        %v1913 = vperm.slane %v1897, 1
        %v1914 = vperm.slane %v1898, 1
        %v1915 = vmul.f32 %v1906, %v1903
        %v1916 = vmul.f32 %v1906, %v1904
        %v1917 = vmul.f32 %v1906, %v1905
        %v1918 = vmul.f32 %v1907, %v1903
        %v1919 = vmul.f32 %v1907, %v1904
        %v1920 = vmul.f32 %v1907, %v1905
        %v1921 = vmul.f32 %v1908, %v1903
        %v1922 = vmul.f32 %v1908, %v1904
        %v1923 = vmul.f32 %v1908, %v1905
        %v1924 = vmul.f32 %v1909, %v1903
        %v1925 = vmul.f32 %v1909, %v1904
        %v1926 = vmul.f32 %v1909, %v1905
        %v1927 = vmul.f32 %v1910, %v1903
        %v1928 = vmul.f32 %v1910, %v1904
        %v1929 = vmul.f32 %v1910, %v1905
        %v1930 = vmul.f32 %v1911, %v1903
        %v1931 = vmul.f32 %v1911, %v1904
        %v1932 = vmul.f32 %v1911, %v1905
        %v1933 = vmul.f32 %v1912, %v1903
        %v1934 = vmul.f32 %v1912, %v1904
        %v1935 = vmul.f32 %v1912, %v1905
        %v1936 = vmul.f32 %v1913, %v1903
        %v1937 = vmul.f32 %v1913, %v1904
        %v1938 = vmul.f32 %v1913, %v1905
        %v1939 = vmul.f32 %v1914, %v1903
        %v1940 = vmul.f32 %v1914, %v1904
        %v1941 = vmul.f32 %v1914, %v1905
        %v1942 = vadd.f32 %v1836, %v1915
        %v1943 = vadd.f32 %v1837, %v1916
        %v1944 = vadd.f32 %v1838, %v1917
        %v1945 = vadd.f32 %v1839, %v1918
        %v1946 = vadd.f32 %v1840, %v1919
        %v1947 = vadd.f32 %v1841, %v1920
        %v1948 = vadd.f32 %v1842, %v1921
        %v1949 = vadd.f32 %v1843, %v1922
        %v1950 = vadd.f32 %v1844, %v1923
        %v1951 = vadd.f32 %v1845, %v1924
        %v1952 = vadd.f32 %v1846, %v1925
        %v1953 = vadd.f32 %v1847, %v1926
        %v1954 = vadd.f32 %v1848, %v1927
        %v1955 = vadd.f32 %v1849, %v1928
        %v1956 = vadd.f32 %v1850, %v1929
        %v1957 = vadd.f32 %v1851, %v1930
        %v1958 = vadd.f32 %v1852, %v1931
        %v1959 = vadd.f32 %v1853, %v1932
        %v1960 = vadd.f32 %v1854, %v1933
        %v1961 = vadd.f32 %v1855, %v1934
        %v1962 = vadd.f32 %v1856, %v1935
        %v1963 = vadd.f32 %v1857, %v1936
        %v1964 = vadd.f32 %v1858, %v1937
        %v1965 = vadd.f32 %v1859, %v1938
        %v1966 = vadd.f32 %v1860, %v1939
        %v1967 = vadd.f32 %v1861, %v1940
        %v1968 = vadd.f32 %v1862, %v1941
        %v1969 = vsub.f32 %v402, 15.0
        %v1970 = vsub.f32 %v403, 15.0
        %v1971 = vsub.f32 %v404, 15.0
        %v1972 = vsub.f32 %v405, 15.0
        %v1973 = vsub.f32 %v406, 15.0
        %v1974 = vsub.f32 %v407, 15.0
        %v1975 = vsub.f32 %v408, 15.0
        %v1976 = vsub.f32 %v409, 15.0
        %v1977 = vsub.f32 %v410, 15.0
        %v1978 = vand.u32 2147483647, %v1969
        %v1979 = vand.u32 2147483647, %v1970
        %v1980 = vand.u32 2147483647, %v1971
        %v1981 = vand.u32 2147483647, %v1972
        %v1982 = vand.u32 2147483647, %v1973
        %v1983 = vand.u32 2147483647, %v1974
        %v1984 = vand.u32 2147483647, %v1975
        %v1985 = vand.u32 2147483647, %v1976
        %v1986 = vand.u32 2147483647, %v1977
        %v1987 = vsub.f32 1.0, %v1978
        %v1988 = vsub.f32 1.0, %v1979
        %v1989 = vsub.f32 1.0, %v1980
        %v1990 = vsub.f32 1.0, %v1981
        %v1991 = vsub.f32 1.0, %v1982
        %v1992 = vsub.f32 1.0, %v1983
        %v1993 = vsub.f32 1.0, %v1984
        %v1994 = vsub.f32 1.0, %v1985
        %v1995 = vsub.f32 1.0, %v1986
        %v1996 = vmax.f32 %v1987, 0.0
        %v1997 = vmax.f32 %v1988, 0.0
        %v1998 = vmax.f32 %v1989, 0.0
        %v1999 = vmax.f32 %v1990, 0.0
        %v2000 = vmax.f32 %v1991, 0.0
        %v2001 = vmax.f32 %v1992, 0.0
        %v2002 = vmax.f32 %v1993, 0.0
        %v2003 = vmax.f32 %v1994, 0.0
        %v2004 = vmax.f32 %v1995, 0.0
        %s2005 = scalar_lea.vmem %s352, 360 [#allocation2]
        %v2006 = vld [vmem:[%s2005] sm:$0xff]
        %v2007 = vld [vmem:[%s2005 + $0x8] sm:$0xff]
        %v2008 = vld [vmem:[%s2005 + $0x10] sm:$0xf]
        %v2009 = vcvt.s32.f32 %v2006
        %v2010 = vcvt.s32.f32 %v2007
        %v2011 = vcvt.s32.f32 %v2008
        %v2012 = vperm.slane %v1996, 1
        %v2013 = vperm.slane %v1997, 1
        %v2014 = vperm.slane %v1998, 1
        %v2015 = vperm.slane %v1999, 1
        %v2016 = vperm.slane %v2000, 1
        %v2017 = vperm.slane %v2001, 1
        %v2018 = vperm.slane %v2002, 1
        %v2019 = vperm.slane %v2003, 1
        %v2020 = vperm.slane %v2004, 1
        %v2021 = vmul.f32 %v2012, %v2009
        %v2022 = vmul.f32 %v2012, %v2010
        %v2023 = vmul.f32 %v2012, %v2011
        %v2024 = vmul.f32 %v2013, %v2009
        %v2025 = vmul.f32 %v2013, %v2010
        %v2026 = vmul.f32 %v2013, %v2011
        %v2027 = vmul.f32 %v2014, %v2009
        %v2028 = vmul.f32 %v2014, %v2010
        %v2029 = vmul.f32 %v2014, %v2011
        %v2030 = vmul.f32 %v2015, %v2009
        %v2031 = vmul.f32 %v2015, %v2010
        %v2032 = vmul.f32 %v2015, %v2011
        %v2033 = vmul.f32 %v2016, %v2009
        %v2034 = vmul.f32 %v2016, %v2010
        %v2035 = vmul.f32 %v2016, %v2011
        %v2036 = vmul.f32 %v2017, %v2009
        %v2037 = vmul.f32 %v2017, %v2010
        %v2038 = vmul.f32 %v2017, %v2011
        %v2039 = vmul.f32 %v2018, %v2009
        %v2040 = vmul.f32 %v2018, %v2010
        %v2041 = vmul.f32 %v2018, %v2011
        %v2042 = vmul.f32 %v2019, %v2009
        %v2043 = vmul.f32 %v2019, %v2010
        %v2044 = vmul.f32 %v2019, %v2011
        %v2045 = vmul.f32 %v2020, %v2009
        %v2046 = vmul.f32 %v2020, %v2010
        %v2047 = vmul.f32 %v2020, %v2011
        %v2048 = vadd.f32 %v1942, %v2021
        %v2049 = vadd.f32 %v1943, %v2022
        %v2050 = vadd.f32 %v1944, %v2023
        %v2051 = vadd.f32 %v1945, %v2024
        %v2052 = vadd.f32 %v1946, %v2025
        %v2053 = vadd.f32 %v1947, %v2026
        %v2054 = vadd.f32 %v1948, %v2027
        %v2055 = vadd.f32 %v1949, %v2028
        %v2056 = vadd.f32 %v1950, %v2029
        %v2057 = vadd.f32 %v1951, %v2030
        %v2058 = vadd.f32 %v1952, %v2031
        %v2059 = vadd.f32 %v1953, %v2032
        %v2060 = vadd.f32 %v1954, %v2033
        %v2061 = vadd.f32 %v1955, %v2034
        %v2062 = vadd.f32 %v1956, %v2035
        %v2063 = vadd.f32 %v1957, %v2036
        %v2064 = vadd.f32 %v1958, %v2037
        %v2065 = vadd.f32 %v1959, %v2038
        %v2066 = vadd.f32 %v1960, %v2039
        %v2067 = vadd.f32 %v1961, %v2040
        %v2068 = vadd.f32 %v1962, %v2041
        %v2069 = vadd.f32 %v1963, %v2042
        %v2070 = vadd.f32 %v1964, %v2043
        %v2071 = vadd.f32 %v1965, %v2044
        %v2072 = vadd.f32 %v1966, %v2045
        %v2073 = vadd.f32 %v1967, %v2046
        %v2074 = vadd.f32 %v1968, %v2047
        %v2075 = vand.u32 2147483647, %v414
        %v2076 = vand.u32 2147483647, %v415
        %v2077 = vsub.f32 1.0, %v2075
        %v2078 = vsub.f32 1.0, %v2076
        %v2079 = vmax.f32 %v2077, 0.0
        %v2080 = vmax.f32 %v2078, 0.0
        %v2081 = vperm.slane %v2048, 0
        %v2082 = vperm.slane %v2051, 0
        %v2083 = vperm.slane %v2054, 0
        %v2084 = vperm.slane %v2057, 0
        %v2085 = vperm.slane %v2060, 0
        %v2086 = vperm.slane %v2063, 0
        %v2087 = vperm.slane %v2066, 0
        %v2088 = vperm.slane %v2069, 0
        %v2089 = vperm.slane %v2072, 0
        %v2090 = vmul.f32 %v2081, %v2079
        %v2091 = vmul.f32 %v2081, %v2080
        %v2092 = vmul.f32 %v2082, %v2079
        %v2093 = vmul.f32 %v2082, %v2080
        %v2094 = vmul.f32 %v2083, %v2079
        %v2095 = vmul.f32 %v2083, %v2080
        %v2096 = vmul.f32 %v2084, %v2079
        %v2097 = vmul.f32 %v2084, %v2080
        %v2098 = vmul.f32 %v2085, %v2079
        %v2099 = vmul.f32 %v2085, %v2080
        %v2100 = vmul.f32 %v2086, %v2079
        %v2101 = vmul.f32 %v2086, %v2080
        %v2102 = vmul.f32 %v2087, %v2079
        %v2103 = vmul.f32 %v2087, %v2080
        %v2104 = vmul.f32 %v2088, %v2079
        %v2105 = vmul.f32 %v2088, %v2080
        %v2106 = vmul.f32 %v2089, %v2079
        %v2107 = vmul.f32 %v2089, %v2080
        %v2108 = vsub.f32 %v414, 1.0
        %v2109 = vsub.f32 %v415, 1.0
        %v2110 = vand.u32 2147483647, %v2108
        %v2111 = vand.u32 2147483647, %v2109
        %v2112 = vsub.f32 1.0, %v2110
        %v2113 = vsub.f32 1.0, %v2111
        %v2114 = vmax.f32 %v2112, 0.0
        %v2115 = vmax.f32 %v2113, 0.0
        %v2116 = vperm.slane %v2048, 1
        %v2117 = vperm.slane %v2051, 1
        %v2118 = vperm.slane %v2054, 1
        %v2119 = vperm.slane %v2057, 1
        %v2120 = vperm.slane %v2060, 1
        %v2121 = vperm.slane %v2063, 1
        %v2122 = vperm.slane %v2066, 1
        %v2123 = vperm.slane %v2069, 1
        %v2124 = vperm.slane %v2072, 1
        %v2125 = vmul.f32 %v2116, %v2114
        %v2126 = vmul.f32 %v2116, %v2115
        %v2127 = vmul.f32 %v2117, %v2114
        %v2128 = vmul.f32 %v2117, %v2115
        %v2129 = vmul.f32 %v2118, %v2114
        %v2130 = vmul.f32 %v2118, %v2115
        %v2131 = vmul.f32 %v2119, %v2114
        %v2132 = vmul.f32 %v2119, %v2115
        %v2133 = vmul.f32 %v2120, %v2114
        %v2134 = vmul.f32 %v2120, %v2115
        %v2135 = vmul.f32 %v2121, %v2114
        %v2136 = vmul.f32 %v2121, %v2115
        %v2137 = vmul.f32 %v2122, %v2114
        %v2138 = vmul.f32 %v2122, %v2115
        %v2139 = vmul.f32 %v2123, %v2114
        %v2140 = vmul.f32 %v2123, %v2115
        %v2141 = vmul.f32 %v2124, %v2114
        %v2142 = vmul.f32 %v2124, %v2115
        %v2143 = vadd.f32 %v2090, %v2125
        %v2144 = vadd.f32 %v2091, %v2126
        %v2145 = vadd.f32 %v2092, %v2127
        %v2146 = vadd.f32 %v2093, %v2128
        %v2147 = vadd.f32 %v2094, %v2129
        %v2148 = vadd.f32 %v2095, %v2130
        %v2149 = vadd.f32 %v2096, %v2131
        %v2150 = vadd.f32 %v2097, %v2132
        %v2151 = vadd.f32 %v2098, %v2133
        %v2152 = vadd.f32 %v2099, %v2134
        %v2153 = vadd.f32 %v2100, %v2135
        %v2154 = vadd.f32 %v2101, %v2136
        %v2155 = vadd.f32 %v2102, %v2137
        %v2156 = vadd.f32 %v2103, %v2138
        %v2157 = vadd.f32 %v2104, %v2139
        %v2158 = vadd.f32 %v2105, %v2140
        %v2159 = vadd.f32 %v2106, %v2141
        %v2160 = vadd.f32 %v2107, %v2142
        %v2161 = vsub.f32 %v414, 2.0
        %v2162 = vsub.f32 %v415, 2.0
        %v2163 = vand.u32 2147483647, %v2161
        %v2164 = vand.u32 2147483647, %v2162
        %v2165 = vsub.f32 1.0, %v2163
        %v2166 = vsub.f32 1.0, %v2164
        %v2167 = vmax.f32 %v2165, 0.0
        %v2168 = vmax.f32 %v2166, 0.0
        %v2169 = vperm.slane %v2048, 2
        %v2170 = vperm.slane %v2051, 2
        %v2171 = vperm.slane %v2054, 2
        %v2172 = vperm.slane %v2057, 2
        %v2173 = vperm.slane %v2060, 2
        %v2174 = vperm.slane %v2063, 2
        %v2175 = vperm.slane %v2066, 2
        %v2176 = vperm.slane %v2069, 2
        %v2177 = vperm.slane %v2072, 2
        %v2178 = vmul.f32 %v2169, %v2167
        %v2179 = vmul.f32 %v2169, %v2168
        %v2180 = vmul.f32 %v2170, %v2167
        %v2181 = vmul.f32 %v2170, %v2168
        %v2182 = vmul.f32 %v2171, %v2167
        %v2183 = vmul.f32 %v2171, %v2168
        %v2184 = vmul.f32 %v2172, %v2167
        %v2185 = vmul.f32 %v2172, %v2168
        %v2186 = vmul.f32 %v2173, %v2167
        %v2187 = vmul.f32 %v2173, %v2168
        %v2188 = vmul.f32 %v2174, %v2167
        %v2189 = vmul.f32 %v2174, %v2168
        %v2190 = vmul.f32 %v2175, %v2167
        %v2191 = vmul.f32 %v2175, %v2168
        %v2192 = vmul.f32 %v2176, %v2167
        %v2193 = vmul.f32 %v2176, %v2168
        %v2194 = vmul.f32 %v2177, %v2167
        %v2195 = vmul.f32 %v2177, %v2168
        %v2196 = vadd.f32 %v2143, %v2178
        %v2197 = vadd.f32 %v2144, %v2179
        %v2198 = vadd.f32 %v2145, %v2180
        %v2199 = vadd.f32 %v2146, %v2181
        %v2200 = vadd.f32 %v2147, %v2182
        %v2201 = vadd.f32 %v2148, %v2183
        %v2202 = vadd.f32 %v2149, %v2184
        %v2203 = vadd.f32 %v2150, %v2185
        %v2204 = vadd.f32 %v2151, %v2186
        %v2205 = vadd.f32 %v2152, %v2187
        %v2206 = vadd.f32 %v2153, %v2188
        %v2207 = vadd.f32 %v2154, %v2189
        %v2208 = vadd.f32 %v2155, %v2190
        %v2209 = vadd.f32 %v2156, %v2191
        %v2210 = vadd.f32 %v2157, %v2192
        %v2211 = vadd.f32 %v2158, %v2193
        %v2212 = vadd.f32 %v2159, %v2194
        %v2213 = vadd.f32 %v2160, %v2195
        %v2214 = vsub.f32 %v414, 3.0
        %v2215 = vsub.f32 %v415, 3.0
        %v2216 = vand.u32 2147483647, %v2214
        %v2217 = vand.u32 2147483647, %v2215
        %v2218 = vsub.f32 1.0, %v2216
        %v2219 = vsub.f32 1.0, %v2217
        %v2220 = vmax.f32 %v2218, 0.0
        %v2221 = vmax.f32 %v2219, 0.0
        %v2222 = vperm.slane %v2048, 3
        %v2223 = vperm.slane %v2051, 3
        %v2224 = vperm.slane %v2054, 3
        %v2225 = vperm.slane %v2057, 3
        %v2226 = vperm.slane %v2060, 3
        %v2227 = vperm.slane %v2063, 3
        %v2228 = vperm.slane %v2066, 3
        %v2229 = vperm.slane %v2069, 3
        %v2230 = vperm.slane %v2072, 3
        %v2231 = vmul.f32 %v2222, %v2220
        %v2232 = vmul.f32 %v2222, %v2221
        %v2233 = vmul.f32 %v2223, %v2220
        %v2234 = vmul.f32 %v2223, %v2221
        %v2235 = vmul.f32 %v2224, %v2220
        %v2236 = vmul.f32 %v2224, %v2221
        %v2237 = vmul.f32 %v2225, %v2220
        %v2238 = vmul.f32 %v2225, %v2221
        %v2239 = vmul.f32 %v2226, %v2220
        %v2240 = vmul.f32 %v2226, %v2221
        %v2241 = vmul.f32 %v2227, %v2220
        %v2242 = vmul.f32 %v2227, %v2221
        %v2243 = vmul.f32 %v2228, %v2220
        %v2244 = vmul.f32 %v2228, %v2221
        %v2245 = vmul.f32 %v2229, %v2220
        %v2246 = vmul.f32 %v2229, %v2221
        %v2247 = vmul.f32 %v2230, %v2220
        %v2248 = vmul.f32 %v2230, %v2221
        %v2249 = vadd.f32 %v2196, %v2231
        %v2250 = vadd.f32 %v2197, %v2232
        %v2251 = vadd.f32 %v2198, %v2233
        %v2252 = vadd.f32 %v2199, %v2234
        %v2253 = vadd.f32 %v2200, %v2235
        %v2254 = vadd.f32 %v2201, %v2236
        %v2255 = vadd.f32 %v2202, %v2237
        %v2256 = vadd.f32 %v2203, %v2238
        %v2257 = vadd.f32 %v2204, %v2239
        %v2258 = vadd.f32 %v2205, %v2240
        %v2259 = vadd.f32 %v2206, %v2241
        %v2260 = vadd.f32 %v2207, %v2242
        %v2261 = vadd.f32 %v2208, %v2243
        %v2262 = vadd.f32 %v2209, %v2244
        %v2263 = vadd.f32 %v2210, %v2245
        %v2264 = vadd.f32 %v2211, %v2246
        %v2265 = vadd.f32 %v2212, %v2247
        %v2266 = vadd.f32 %v2213, %v2248
        %v2267 = vsub.f32 %v414, 4.0
        %v2268 = vsub.f32 %v415, 4.0
        %v2269 = vand.u32 2147483647, %v2267
        %v2270 = vand.u32 2147483647, %v2268
        %v2271 = vsub.f32 1.0, %v2269
        %v2272 = vsub.f32 1.0, %v2270
        %v2273 = vmax.f32 %v2271, 0.0
        %v2274 = vmax.f32 %v2272, 0.0
        %v2275 = vperm.slane %v2048, 4
        %v2276 = vperm.slane %v2051, 4
        %v2277 = vperm.slane %v2054, 4
        %v2278 = vperm.slane %v2057, 4
        %v2279 = vperm.slane %v2060, 4
        %v2280 = vperm.slane %v2063, 4
        %v2281 = vperm.slane %v2066, 4
        %v2282 = vperm.slane %v2069, 4
        %v2283 = vperm.slane %v2072, 4
        %v2284 = vmul.f32 %v2275, %v2273
        %v2285 = vmul.f32 %v2275, %v2274
        %v2286 = vmul.f32 %v2276, %v2273
        %v2287 = vmul.f32 %v2276, %v2274
        %v2288 = vmul.f32 %v2277, %v2273
        %v2289 = vmul.f32 %v2277, %v2274
        %v2290 = vmul.f32 %v2278, %v2273
        %v2291 = vmul.f32 %v2278, %v2274
        %v2292 = vmul.f32 %v2279, %v2273
        %v2293 = vmul.f32 %v2279, %v2274
        %v2294 = vmul.f32 %v2280, %v2273
        %v2295 = vmul.f32 %v2280, %v2274
        %v2296 = vmul.f32 %v2281, %v2273
        %v2297 = vmul.f32 %v2281, %v2274
        %v2298 = vmul.f32 %v2282, %v2273
        %v2299 = vmul.f32 %v2282, %v2274
        %v2300 = vmul.f32 %v2283, %v2273
        %v2301 = vmul.f32 %v2283, %v2274
        %v2302 = vadd.f32 %v2249, %v2284
        %v2303 = vadd.f32 %v2250, %v2285
        %v2304 = vadd.f32 %v2251, %v2286
        %v2305 = vadd.f32 %v2252, %v2287
        %v2306 = vadd.f32 %v2253, %v2288
        %v2307 = vadd.f32 %v2254, %v2289
        %v2308 = vadd.f32 %v2255, %v2290
        %v2309 = vadd.f32 %v2256, %v2291
        %v2310 = vadd.f32 %v2257, %v2292
        %v2311 = vadd.f32 %v2258, %v2293
        %v2312 = vadd.f32 %v2259, %v2294
        %v2313 = vadd.f32 %v2260, %v2295
        %v2314 = vadd.f32 %v2261, %v2296
        %v2315 = vadd.f32 %v2262, %v2297
        %v2316 = vadd.f32 %v2263, %v2298
        %v2317 = vadd.f32 %v2264, %v2299
        %v2318 = vadd.f32 %v2265, %v2300
        %v2319 = vadd.f32 %v2266, %v2301
        %v2320 = vsub.f32 %v414, 5.0
        %v2321 = vsub.f32 %v415, 5.0
        %v2322 = vand.u32 2147483647, %v2320
        %v2323 = vand.u32 2147483647, %v2321
        %v2324 = vsub.f32 1.0, %v2322
        %v2325 = vsub.f32 1.0, %v2323
        %v2326 = vmax.f32 %v2324, 0.0
        %v2327 = vmax.f32 %v2325, 0.0
        %v2328 = vperm.slane %v2048, 5
        %v2329 = vperm.slane %v2051, 5
        %v2330 = vperm.slane %v2054, 5
        %v2331 = vperm.slane %v2057, 5
        %v2332 = vperm.slane %v2060, 5
        %v2333 = vperm.slane %v2063, 5
        %v2334 = vperm.slane %v2066, 5
        %v2335 = vperm.slane %v2069, 5
        %v2336 = vperm.slane %v2072, 5
        %v2337 = vmul.f32 %v2328, %v2326
        %v2338 = vmul.f32 %v2328, %v2327
        %v2339 = vmul.f32 %v2329, %v2326
        %v2340 = vmul.f32 %v2329, %v2327
        %v2341 = vmul.f32 %v2330, %v2326
        %v2342 = vmul.f32 %v2330, %v2327
        %v2343 = vmul.f32 %v2331, %v2326
        %v2344 = vmul.f32 %v2331, %v2327
        %v2345 = vmul.f32 %v2332, %v2326
        %v2346 = vmul.f32 %v2332, %v2327
        %v2347 = vmul.f32 %v2333, %v2326
        %v2348 = vmul.f32 %v2333, %v2327
        %v2349 = vmul.f32 %v2334, %v2326
        %v2350 = vmul.f32 %v2334, %v2327
        %v2351 = vmul.f32 %v2335, %v2326
        %v2352 = vmul.f32 %v2335, %v2327
        %v2353 = vmul.f32 %v2336, %v2326
        %v2354 = vmul.f32 %v2336, %v2327
        %v2355 = vadd.f32 %v2302, %v2337
        %v2356 = vadd.f32 %v2303, %v2338
        %v2357 = vadd.f32 %v2304, %v2339
        %v2358 = vadd.f32 %v2305, %v2340
        %v2359 = vadd.f32 %v2306, %v2341
        %v2360 = vadd.f32 %v2307, %v2342
        %v2361 = vadd.f32 %v2308, %v2343
        %v2362 = vadd.f32 %v2309, %v2344
        %v2363 = vadd.f32 %v2310, %v2345
        %v2364 = vadd.f32 %v2311, %v2346
        %v2365 = vadd.f32 %v2312, %v2347
        %v2366 = vadd.f32 %v2313, %v2348
        %v2367 = vadd.f32 %v2314, %v2349
        %v2368 = vadd.f32 %v2315, %v2350
        %v2369 = vadd.f32 %v2316, %v2351
        %v2370 = vadd.f32 %v2317, %v2352
        %v2371 = vadd.f32 %v2318, %v2353
        %v2372 = vadd.f32 %v2319, %v2354
        %v2373 = vsub.f32 %v414, 6.0
        %v2374 = vsub.f32 %v415, 6.0
        %v2375 = vand.u32 2147483647, %v2373
        %v2376 = vand.u32 2147483647, %v2374
        %v2377 = vsub.f32 1.0, %v2375
        %v2378 = vsub.f32 1.0, %v2376
        %v2379 = vmax.f32 %v2377, 0.0
        %v2380 = vmax.f32 %v2378, 0.0
        %v2381 = vperm.slane %v2048, 6
        %v2382 = vperm.slane %v2051, 6
        %v2383 = vperm.slane %v2054, 6
        %v2384 = vperm.slane %v2057, 6
        %v2385 = vperm.slane %v2060, 6
        %v2386 = vperm.slane %v2063, 6
        %v2387 = vperm.slane %v2066, 6
        %v2388 = vperm.slane %v2069, 6
        %v2389 = vperm.slane %v2072, 6
        %v2390 = vmul.f32 %v2381, %v2379
        %v2391 = vmul.f32 %v2381, %v2380
        %v2392 = vmul.f32 %v2382, %v2379
        %v2393 = vmul.f32 %v2382, %v2380
        %v2394 = vmul.f32 %v2383, %v2379
        %v2395 = vmul.f32 %v2383, %v2380
        %v2396 = vmul.f32 %v2384, %v2379
        %v2397 = vmul.f32 %v2384, %v2380
        %v2398 = vmul.f32 %v2385, %v2379
        %v2399 = vmul.f32 %v2385, %v2380
        %v2400 = vmul.f32 %v2386, %v2379
        %v2401 = vmul.f32 %v2386, %v2380
        %v2402 = vmul.f32 %v2387, %v2379
        %v2403 = vmul.f32 %v2387, %v2380
        %v2404 = vmul.f32 %v2388, %v2379
        %v2405 = vmul.f32 %v2388, %v2380
        %v2406 = vmul.f32 %v2389, %v2379
        %v2407 = vmul.f32 %v2389, %v2380
        %v2408 = vadd.f32 %v2355, %v2390
        %v2409 = vadd.f32 %v2356, %v2391
        %v2410 = vadd.f32 %v2357, %v2392
        %v2411 = vadd.f32 %v2358, %v2393
        %v2412 = vadd.f32 %v2359, %v2394
        %v2413 = vadd.f32 %v2360, %v2395
        %v2414 = vadd.f32 %v2361, %v2396
        %v2415 = vadd.f32 %v2362, %v2397
        %v2416 = vadd.f32 %v2363, %v2398
        %v2417 = vadd.f32 %v2364, %v2399
        %v2418 = vadd.f32 %v2365, %v2400
        %v2419 = vadd.f32 %v2366, %v2401
        %v2420 = vadd.f32 %v2367, %v2402
        %v2421 = vadd.f32 %v2368, %v2403
        %v2422 = vadd.f32 %v2369, %v2404
        %v2423 = vadd.f32 %v2370, %v2405
        %v2424 = vadd.f32 %v2371, %v2406
        %v2425 = vadd.f32 %v2372, %v2407
        %v2426 = vsub.f32 %v414, 7.0
        %v2427 = vsub.f32 %v415, 7.0
        %v2428 = vand.u32 2147483647, %v2426
        %v2429 = vand.u32 2147483647, %v2427
        %v2430 = vsub.f32 1.0, %v2428
        %v2431 = vsub.f32 1.0, %v2429
        %v2432 = vmax.f32 %v2430, 0.0
        %v2433 = vmax.f32 %v2431, 0.0
        %v2434 = vperm.slane %v2048, 7
        %v2435 = vperm.slane %v2051, 7
        %v2436 = vperm.slane %v2054, 7
        %v2437 = vperm.slane %v2057, 7
        %v2438 = vperm.slane %v2060, 7
        %v2439 = vperm.slane %v2063, 7
        %v2440 = vperm.slane %v2066, 7
        %v2441 = vperm.slane %v2069, 7
        %v2442 = vperm.slane %v2072, 7
        %v2443 = vmul.f32 %v2434, %v2432
        %v2444 = vmul.f32 %v2434, %v2433
        %v2445 = vmul.f32 %v2435, %v2432
        %v2446 = vmul.f32 %v2435, %v2433
        %v2447 = vmul.f32 %v2436, %v2432
        %v2448 = vmul.f32 %v2436, %v2433
        %v2449 = vmul.f32 %v2437, %v2432
        %v2450 = vmul.f32 %v2437, %v2433
        %v2451 = vmul.f32 %v2438, %v2432
        %v2452 = vmul.f32 %v2438, %v2433
        %v2453 = vmul.f32 %v2439, %v2432
        %v2454 = vmul.f32 %v2439, %v2433
        %v2455 = vmul.f32 %v2440, %v2432
        %v2456 = vmul.f32 %v2440, %v2433
        %v2457 = vmul.f32 %v2441, %v2432
        %v2458 = vmul.f32 %v2441, %v2433
        %v2459 = vmul.f32 %v2442, %v2432
        %v2460 = vmul.f32 %v2442, %v2433
        %v2461 = vadd.f32 %v2408, %v2443
        %v2462 = vadd.f32 %v2409, %v2444
        %v2463 = vadd.f32 %v2410, %v2445
        %v2464 = vadd.f32 %v2411, %v2446
        %v2465 = vadd.f32 %v2412, %v2447
        %v2466 = vadd.f32 %v2413, %v2448
        %v2467 = vadd.f32 %v2414, %v2449
        %v2468 = vadd.f32 %v2415, %v2450
        %v2469 = vadd.f32 %v2416, %v2451
        %v2470 = vadd.f32 %v2417, %v2452
        %v2471 = vadd.f32 %v2418, %v2453
        %v2472 = vadd.f32 %v2419, %v2454
        %v2473 = vadd.f32 %v2420, %v2455
        %v2474 = vadd.f32 %v2421, %v2456
        %v2475 = vadd.f32 %v2422, %v2457
        %v2476 = vadd.f32 %v2423, %v2458
        %v2477 = vadd.f32 %v2424, %v2459
        %v2478 = vadd.f32 %v2425, %v2460
        %v2479 = vsub.f32 %v414, 8.0
        %v2480 = vsub.f32 %v415, 8.0
        %v2481 = vand.u32 2147483647, %v2479
        %v2482 = vand.u32 2147483647, %v2480
        %v2483 = vsub.f32 1.0, %v2481
        %v2484 = vsub.f32 1.0, %v2482
        %v2485 = vmax.f32 %v2483, 0.0
        %v2486 = vmax.f32 %v2484, 0.0
        %v2487 = vperm.slane %v2049, 0
        %v2488 = vperm.slane %v2052, 0
        %v2489 = vperm.slane %v2055, 0
        %v2490 = vperm.slane %v2058, 0
        %v2491 = vperm.slane %v2061, 0
        %v2492 = vperm.slane %v2064, 0
        %v2493 = vperm.slane %v2067, 0
        %v2494 = vperm.slane %v2070, 0
        %v2495 = vperm.slane %v2073, 0
        %v2496 = vmul.f32 %v2487, %v2485
        %v2497 = vmul.f32 %v2487, %v2486
        %v2498 = vmul.f32 %v2488, %v2485
        %v2499 = vmul.f32 %v2488, %v2486
        %v2500 = vmul.f32 %v2489, %v2485
        %v2501 = vmul.f32 %v2489, %v2486
        %v2502 = vmul.f32 %v2490, %v2485
        %v2503 = vmul.f32 %v2490, %v2486
        %v2504 = vmul.f32 %v2491, %v2485
        %v2505 = vmul.f32 %v2491, %v2486
        %v2506 = vmul.f32 %v2492, %v2485
        %v2507 = vmul.f32 %v2492, %v2486
        %v2508 = vmul.f32 %v2493, %v2485
        %v2509 = vmul.f32 %v2493, %v2486
        %v2510 = vmul.f32 %v2494, %v2485
        %v2511 = vmul.f32 %v2494, %v2486
        %v2512 = vmul.f32 %v2495, %v2485
        %v2513 = vmul.f32 %v2495, %v2486
        %v2514 = vadd.f32 %v2461, %v2496
        %v2515 = vadd.f32 %v2462, %v2497
        %v2516 = vadd.f32 %v2463, %v2498
        %v2517 = vadd.f32 %v2464, %v2499
        %v2518 = vadd.f32 %v2465, %v2500
        %v2519 = vadd.f32 %v2466, %v2501
        %v2520 = vadd.f32 %v2467, %v2502
        %v2521 = vadd.f32 %v2468, %v2503
        %v2522 = vadd.f32 %v2469, %v2504
        %v2523 = vadd.f32 %v2470, %v2505
        %v2524 = vadd.f32 %v2471, %v2506
        %v2525 = vadd.f32 %v2472, %v2507
        %v2526 = vadd.f32 %v2473, %v2508
        %v2527 = vadd.f32 %v2474, %v2509
        %v2528 = vadd.f32 %v2475, %v2510
        %v2529 = vadd.f32 %v2476, %v2511
        %v2530 = vadd.f32 %v2477, %v2512
        %v2531 = vadd.f32 %v2478, %v2513
        %v2532 = vsub.f32 %v414, 9.0
        %v2533 = vsub.f32 %v415, 9.0
        %v2534 = vand.u32 2147483647, %v2532
        %v2535 = vand.u32 2147483647, %v2533
        %v2536 = vsub.f32 1.0, %v2534
        %v2537 = vsub.f32 1.0, %v2535
        %v2538 = vmax.f32 %v2536, 0.0
        %v2539 = vmax.f32 %v2537, 0.0
        %v2540 = vperm.slane %v2049, 1
        %v2541 = vperm.slane %v2052, 1
        %v2542 = vperm.slane %v2055, 1
        %v2543 = vperm.slane %v2058, 1
        %v2544 = vperm.slane %v2061, 1
        %v2545 = vperm.slane %v2064, 1
        %v2546 = vperm.slane %v2067, 1
        %v2547 = vperm.slane %v2070, 1
        %v2548 = vperm.slane %v2073, 1
        %v2549 = vmul.f32 %v2540, %v2538
        %v2550 = vmul.f32 %v2540, %v2539
        %v2551 = vmul.f32 %v2541, %v2538
        %v2552 = vmul.f32 %v2541, %v2539
        %v2553 = vmul.f32 %v2542, %v2538
        %v2554 = vmul.f32 %v2542, %v2539
        %v2555 = vmul.f32 %v2543, %v2538
        %v2556 = vmul.f32 %v2543, %v2539
        %v2557 = vmul.f32 %v2544, %v2538
        %v2558 = vmul.f32 %v2544, %v2539
        %v2559 = vmul.f32 %v2545, %v2538
        %v2560 = vmul.f32 %v2545, %v2539
        %v2561 = vmul.f32 %v2546, %v2538
        %v2562 = vmul.f32 %v2546, %v2539
        %v2563 = vmul.f32 %v2547, %v2538
        %v2564 = vmul.f32 %v2547, %v2539
        %v2565 = vmul.f32 %v2548, %v2538
        %v2566 = vmul.f32 %v2548, %v2539
        %v2567 = vadd.f32 %v2514, %v2549
        %v2568 = vadd.f32 %v2515, %v2550
        %v2569 = vadd.f32 %v2516, %v2551
        %v2570 = vadd.f32 %v2517, %v2552
        %v2571 = vadd.f32 %v2518, %v2553
        %v2572 = vadd.f32 %v2519, %v2554
        %v2573 = vadd.f32 %v2520, %v2555
        %v2574 = vadd.f32 %v2521, %v2556
        %v2575 = vadd.f32 %v2522, %v2557
        %v2576 = vadd.f32 %v2523, %v2558
        %v2577 = vadd.f32 %v2524, %v2559
        %v2578 = vadd.f32 %v2525, %v2560
        %v2579 = vadd.f32 %v2526, %v2561
        %v2580 = vadd.f32 %v2527, %v2562
        %v2581 = vadd.f32 %v2528, %v2563
        %v2582 = vadd.f32 %v2529, %v2564
        %v2583 = vadd.f32 %v2530, %v2565
        %v2584 = vadd.f32 %v2531, %v2566
        %v2585 = vsub.f32 %v414, 10.0
        %v2586 = vsub.f32 %v415, 10.0
        %v2587 = vand.u32 2147483647, %v2585
        %v2588 = vand.u32 2147483647, %v2586
        %v2589 = vsub.f32 1.0, %v2587
        %v2590 = vsub.f32 1.0, %v2588
        %v2591 = vmax.f32 %v2589, 0.0
        %v2592 = vmax.f32 %v2590, 0.0
        %v2593 = vperm.slane %v2049, 2
        %v2594 = vperm.slane %v2052, 2
        %v2595 = vperm.slane %v2055, 2
        %v2596 = vperm.slane %v2058, 2
        %v2597 = vperm.slane %v2061, 2
        %v2598 = vperm.slane %v2064, 2
        %v2599 = vperm.slane %v2067, 2
        %v2600 = vperm.slane %v2070, 2
        %v2601 = vperm.slane %v2073, 2
        %v2602 = vmul.f32 %v2593, %v2591
        %v2603 = vmul.f32 %v2593, %v2592
        %v2604 = vmul.f32 %v2594, %v2591
        %v2605 = vmul.f32 %v2594, %v2592
        %v2606 = vmul.f32 %v2595, %v2591
        %v2607 = vmul.f32 %v2595, %v2592
        %v2608 = vmul.f32 %v2596, %v2591
        %v2609 = vmul.f32 %v2596, %v2592
        %v2610 = vmul.f32 %v2597, %v2591
        %v2611 = vmul.f32 %v2597, %v2592
        %v2612 = vmul.f32 %v2598, %v2591
        %v2613 = vmul.f32 %v2598, %v2592
        %v2614 = vmul.f32 %v2599, %v2591
        %v2615 = vmul.f32 %v2599, %v2592
        %v2616 = vmul.f32 %v2600, %v2591
        %v2617 = vmul.f32 %v2600, %v2592
        %v2618 = vmul.f32 %v2601, %v2591
        %v2619 = vmul.f32 %v2601, %v2592
        %v2620 = vadd.f32 %v2567, %v2602
        %v2621 = vadd.f32 %v2568, %v2603
        %v2622 = vadd.f32 %v2569, %v2604
        %v2623 = vadd.f32 %v2570, %v2605
        %v2624 = vadd.f32 %v2571, %v2606
        %v2625 = vadd.f32 %v2572, %v2607
        %v2626 = vadd.f32 %v2573, %v2608
        %v2627 = vadd.f32 %v2574, %v2609
        %v2628 = vadd.f32 %v2575, %v2610
        %v2629 = vadd.f32 %v2576, %v2611
        %v2630 = vadd.f32 %v2577, %v2612
        %v2631 = vadd.f32 %v2578, %v2613
        %v2632 = vadd.f32 %v2579, %v2614
        %v2633 = vadd.f32 %v2580, %v2615
        %v2634 = vadd.f32 %v2581, %v2616
        %v2635 = vadd.f32 %v2582, %v2617
        %v2636 = vadd.f32 %v2583, %v2618
        %v2637 = vadd.f32 %v2584, %v2619
        %v2638 = vsub.f32 %v414, 11.0
        %v2639 = vsub.f32 %v415, 11.0
        %v2640 = vand.u32 2147483647, %v2638
        %v2641 = vand.u32 2147483647, %v2639
        %v2642 = vsub.f32 1.0, %v2640
        %v2643 = vsub.f32 1.0, %v2641
        %v2644 = vmax.f32 %v2642, 0.0
        %v2645 = vmax.f32 %v2643, 0.0
        %v2646 = vperm.slane %v2049, 3
        %v2647 = vperm.slane %v2052, 3
        %v2648 = vperm.slane %v2055, 3
        %v2649 = vperm.slane %v2058, 3
        %v2650 = vperm.slane %v2061, 3
        %v2651 = vperm.slane %v2064, 3
        %v2652 = vperm.slane %v2067, 3
        %v2653 = vperm.slane %v2070, 3
        %v2654 = vperm.slane %v2073, 3
        %v2655 = vmul.f32 %v2646, %v2644
        %v2656 = vmul.f32 %v2646, %v2645
        %v2657 = vmul.f32 %v2647, %v2644
        %v2658 = vmul.f32 %v2647, %v2645
        %v2659 = vmul.f32 %v2648, %v2644
        %v2660 = vmul.f32 %v2648, %v2645
        %v2661 = vmul.f32 %v2649, %v2644
        %v2662 = vmul.f32 %v2649, %v2645
        %v2663 = vmul.f32 %v2650, %v2644
        %v2664 = vmul.f32 %v2650, %v2645
        %v2665 = vmul.f32 %v2651, %v2644
        %v2666 = vmul.f32 %v2651, %v2645
        %v2667 = vmul.f32 %v2652, %v2644
        %v2668 = vmul.f32 %v2652, %v2645
        %v2669 = vmul.f32 %v2653, %v2644
        %v2670 = vmul.f32 %v2653, %v2645
        %v2671 = vmul.f32 %v2654, %v2644
        %v2672 = vmul.f32 %v2654, %v2645
        %v2673 = vadd.f32 %v2620, %v2655
        %v2674 = vadd.f32 %v2621, %v2656
        %v2675 = vadd.f32 %v2622, %v2657
        %v2676 = vadd.f32 %v2623, %v2658
        %v2677 = vadd.f32 %v2624, %v2659
        %v2678 = vadd.f32 %v2625, %v2660
        %v2679 = vadd.f32 %v2626, %v2661
        %v2680 = vadd.f32 %v2627, %v2662
        %v2681 = vadd.f32 %v2628, %v2663
        %v2682 = vadd.f32 %v2629, %v2664
        %v2683 = vadd.f32 %v2630, %v2665
        %v2684 = vadd.f32 %v2631, %v2666
        %v2685 = vadd.f32 %v2632, %v2667
        %v2686 = vadd.f32 %v2633, %v2668
        %v2687 = vadd.f32 %v2634, %v2669
        %v2688 = vadd.f32 %v2635, %v2670
        %v2689 = vadd.f32 %v2636, %v2671
        %v2690 = vadd.f32 %v2637, %v2672
        %v2691 = vsub.f32 %v414, 12.0
        %v2692 = vsub.f32 %v415, 12.0
        %v2693 = vand.u32 2147483647, %v2691
        %v2694 = vand.u32 2147483647, %v2692
        %v2695 = vsub.f32 1.0, %v2693
        %v2696 = vsub.f32 1.0, %v2694
        %v2697 = vmax.f32 %v2695, 0.0
        %v2698 = vmax.f32 %v2696, 0.0
        %v2699 = vperm.slane %v2049, 4
        %v2700 = vperm.slane %v2052, 4
        %v2701 = vperm.slane %v2055, 4
        %v2702 = vperm.slane %v2058, 4
        %v2703 = vperm.slane %v2061, 4
        %v2704 = vperm.slane %v2064, 4
        %v2705 = vperm.slane %v2067, 4
        %v2706 = vperm.slane %v2070, 4
        %v2707 = vperm.slane %v2073, 4
        %v2708 = vmul.f32 %v2699, %v2697
        %v2709 = vmul.f32 %v2699, %v2698
        %v2710 = vmul.f32 %v2700, %v2697
        %v2711 = vmul.f32 %v2700, %v2698
        %v2712 = vmul.f32 %v2701, %v2697
        %v2713 = vmul.f32 %v2701, %v2698
        %v2714 = vmul.f32 %v2702, %v2697
        %v2715 = vmul.f32 %v2702, %v2698
        %v2716 = vmul.f32 %v2703, %v2697
        %v2717 = vmul.f32 %v2703, %v2698
        %v2718 = vmul.f32 %v2704, %v2697
        %v2719 = vmul.f32 %v2704, %v2698
        %v2720 = vmul.f32 %v2705, %v2697
        %v2721 = vmul.f32 %v2705, %v2698
        %v2722 = vmul.f32 %v2706, %v2697
        %v2723 = vmul.f32 %v2706, %v2698
        %v2724 = vmul.f32 %v2707, %v2697
        %v2725 = vmul.f32 %v2707, %v2698
        %v2726 = vadd.f32 %v2673, %v2708
        %v2727 = vadd.f32 %v2674, %v2709
        %v2728 = vadd.f32 %v2675, %v2710
        %v2729 = vadd.f32 %v2676, %v2711
        %v2730 = vadd.f32 %v2677, %v2712
        %v2731 = vadd.f32 %v2678, %v2713
        %v2732 = vadd.f32 %v2679, %v2714
        %v2733 = vadd.f32 %v2680, %v2715
        %v2734 = vadd.f32 %v2681, %v2716
        %v2735 = vadd.f32 %v2682, %v2717
        %v2736 = vadd.f32 %v2683, %v2718
        %v2737 = vadd.f32 %v2684, %v2719
        %v2738 = vadd.f32 %v2685, %v2720
        %v2739 = vadd.f32 %v2686, %v2721
        %v2740 = vadd.f32 %v2687, %v2722
        %v2741 = vadd.f32 %v2688, %v2723
        %v2742 = vadd.f32 %v2689, %v2724
        %v2743 = vadd.f32 %v2690, %v2725
        %v2744 = vsub.f32 %v414, 13.0
        %v2745 = vsub.f32 %v415, 13.0
        %v2746 = vand.u32 2147483647, %v2744
        %v2747 = vand.u32 2147483647, %v2745
        %v2748 = vsub.f32 1.0, %v2746
        %v2749 = vsub.f32 1.0, %v2747
        %v2750 = vmax.f32 %v2748, 0.0
        %v2751 = vmax.f32 %v2749, 0.0
        %v2752 = vperm.slane %v2049, 5
        %v2753 = vperm.slane %v2052, 5
        %v2754 = vperm.slane %v2055, 5
        %v2755 = vperm.slane %v2058, 5
        %v2756 = vperm.slane %v2061, 5
        %v2757 = vperm.slane %v2064, 5
        %v2758 = vperm.slane %v2067, 5
        %v2759 = vperm.slane %v2070, 5
        %v2760 = vperm.slane %v2073, 5
        %v2761 = vmul.f32 %v2752, %v2750
        %v2762 = vmul.f32 %v2752, %v2751
        %v2763 = vmul.f32 %v2753, %v2750
        %v2764 = vmul.f32 %v2753, %v2751
        %v2765 = vmul.f32 %v2754, %v2750
        %v2766 = vmul.f32 %v2754, %v2751
        %v2767 = vmul.f32 %v2755, %v2750
        %v2768 = vmul.f32 %v2755, %v2751
        %v2769 = vmul.f32 %v2756, %v2750
        %v2770 = vmul.f32 %v2756, %v2751
        %v2771 = vmul.f32 %v2757, %v2750
        %v2772 = vmul.f32 %v2757, %v2751
        %v2773 = vmul.f32 %v2758, %v2750
        %v2774 = vmul.f32 %v2758, %v2751
        %v2775 = vmul.f32 %v2759, %v2750
        %v2776 = vmul.f32 %v2759, %v2751
        %v2777 = vmul.f32 %v2760, %v2750
        %v2778 = vmul.f32 %v2760, %v2751
        %v2779 = vadd.f32 %v2726, %v2761
        %v2780 = vadd.f32 %v2727, %v2762
        %v2781 = vadd.f32 %v2728, %v2763
        %v2782 = vadd.f32 %v2729, %v2764
        %v2783 = vadd.f32 %v2730, %v2765
        %v2784 = vadd.f32 %v2731, %v2766
        %v2785 = vadd.f32 %v2732, %v2767
        %v2786 = vadd.f32 %v2733, %v2768
        %v2787 = vadd.f32 %v2734, %v2769
        %v2788 = vadd.f32 %v2735, %v2770
        %v2789 = vadd.f32 %v2736, %v2771
        %v2790 = vadd.f32 %v2737, %v2772
        %v2791 = vadd.f32 %v2738, %v2773
        %v2792 = vadd.f32 %v2739, %v2774
        %v2793 = vadd.f32 %v2740, %v2775
        %v2794 = vadd.f32 %v2741, %v2776
        %v2795 = vadd.f32 %v2742, %v2777
        %v2796 = vadd.f32 %v2743, %v2778
        %v2797 = vsub.f32 %v414, 14.0
        %v2798 = vsub.f32 %v415, 14.0
        %v2799 = vand.u32 2147483647, %v2797
        %v2800 = vand.u32 2147483647, %v2798
        %v2801 = vsub.f32 1.0, %v2799
        %v2802 = vsub.f32 1.0, %v2800
        %v2803 = vmax.f32 %v2801, 0.0
        %v2804 = vmax.f32 %v2802, 0.0
        %v2805 = vperm.slane %v2049, 6
        %v2806 = vperm.slane %v2052, 6
        %v2807 = vperm.slane %v2055, 6
        %v2808 = vperm.slane %v2058, 6
        %v2809 = vperm.slane %v2061, 6
        %v2810 = vperm.slane %v2064, 6
        %v2811 = vperm.slane %v2067, 6
        %v2812 = vperm.slane %v2070, 6
        %v2813 = vperm.slane %v2073, 6
        %v2814 = vmul.f32 %v2805, %v2803
        %v2815 = vmul.f32 %v2805, %v2804
        %v2816 = vmul.f32 %v2806, %v2803
        %v2817 = vmul.f32 %v2806, %v2804
        %v2818 = vmul.f32 %v2807, %v2803
        %v2819 = vmul.f32 %v2807, %v2804
        %v2820 = vmul.f32 %v2808, %v2803
        %v2821 = vmul.f32 %v2808, %v2804
        %v2822 = vmul.f32 %v2809, %v2803
        %v2823 = vmul.f32 %v2809, %v2804
        %v2824 = vmul.f32 %v2810, %v2803
        %v2825 = vmul.f32 %v2810, %v2804
        %v2826 = vmul.f32 %v2811, %v2803
        %v2827 = vmul.f32 %v2811, %v2804
        %v2828 = vmul.f32 %v2812, %v2803
        %v2829 = vmul.f32 %v2812, %v2804
        %v2830 = vmul.f32 %v2813, %v2803
        %v2831 = vmul.f32 %v2813, %v2804
        %v2832 = vadd.f32 %v2779, %v2814
        %v2833 = vadd.f32 %v2780, %v2815
        %v2834 = vadd.f32 %v2781, %v2816
        %v2835 = vadd.f32 %v2782, %v2817
        %v2836 = vadd.f32 %v2783, %v2818
        %v2837 = vadd.f32 %v2784, %v2819
        %v2838 = vadd.f32 %v2785, %v2820
        %v2839 = vadd.f32 %v2786, %v2821
        %v2840 = vadd.f32 %v2787, %v2822
        %v2841 = vadd.f32 %v2788, %v2823
        %v2842 = vadd.f32 %v2789, %v2824
        %v2843 = vadd.f32 %v2790, %v2825
        %v2844 = vadd.f32 %v2791, %v2826
        %v2845 = vadd.f32 %v2792, %v2827
        %v2846 = vadd.f32 %v2793, %v2828
        %v2847 = vadd.f32 %v2794, %v2829
        %v2848 = vadd.f32 %v2795, %v2830
        %v2849 = vadd.f32 %v2796, %v2831
        %v2850 = vsub.f32 %v414, 15.0
        %v2851 = vsub.f32 %v415, 15.0
        %v2852 = vand.u32 2147483647, %v2850
        %v2853 = vand.u32 2147483647, %v2851
        %v2854 = vsub.f32 1.0, %v2852
        %v2855 = vsub.f32 1.0, %v2853
        %v2856 = vmax.f32 %v2854, 0.0
        %v2857 = vmax.f32 %v2855, 0.0
        %v2858 = vperm.slane %v2049, 7
        %v2859 = vperm.slane %v2052, 7
        %v2860 = vperm.slane %v2055, 7
        %v2861 = vperm.slane %v2058, 7
        %v2862 = vperm.slane %v2061, 7
        %v2863 = vperm.slane %v2064, 7
        %v2864 = vperm.slane %v2067, 7
        %v2865 = vperm.slane %v2070, 7
        %v2866 = vperm.slane %v2073, 7
        %v2867 = vmul.f32 %v2858, %v2856
        %v2868 = vmul.f32 %v2858, %v2857
        %v2869 = vmul.f32 %v2859, %v2856
        %v2870 = vmul.f32 %v2859, %v2857
        %v2871 = vmul.f32 %v2860, %v2856
        %v2872 = vmul.f32 %v2860, %v2857
        %v2873 = vmul.f32 %v2861, %v2856
        %v2874 = vmul.f32 %v2861, %v2857
        %v2875 = vmul.f32 %v2862, %v2856
        %v2876 = vmul.f32 %v2862, %v2857
        %v2877 = vmul.f32 %v2863, %v2856
        %v2878 = vmul.f32 %v2863, %v2857
        %v2879 = vmul.f32 %v2864, %v2856
        %v2880 = vmul.f32 %v2864, %v2857
        %v2881 = vmul.f32 %v2865, %v2856
        %v2882 = vmul.f32 %v2865, %v2857
        %v2883 = vmul.f32 %v2866, %v2856
        %v2884 = vmul.f32 %v2866, %v2857
        %v2885 = vadd.f32 %v2832, %v2867
        %v2886 = vadd.f32 %v2833, %v2868
        %v2887 = vadd.f32 %v2834, %v2869
        %v2888 = vadd.f32 %v2835, %v2870
        %v2889 = vadd.f32 %v2836, %v2871
        %v2890 = vadd.f32 %v2837, %v2872
        %v2891 = vadd.f32 %v2838, %v2873
        %v2892 = vadd.f32 %v2839, %v2874
        %v2893 = vadd.f32 %v2840, %v2875
        %v2894 = vadd.f32 %v2841, %v2876
        %v2895 = vadd.f32 %v2842, %v2877
        %v2896 = vadd.f32 %v2843, %v2878
        %v2897 = vadd.f32 %v2844, %v2879
        %v2898 = vadd.f32 %v2845, %v2880
        %v2899 = vadd.f32 %v2846, %v2881
        %v2900 = vadd.f32 %v2847, %v2882
        %v2901 = vadd.f32 %v2848, %v2883
        %v2902 = vadd.f32 %v2849, %v2884
        %v2903 = vsub.f32 %v414, 16.0
        %v2904 = vsub.f32 %v415, 16.0
        %v2905 = vand.u32 2147483647, %v2903
        %v2906 = vand.u32 2147483647, %v2904
        %v2907 = vsub.f32 1.0, %v2905
        %v2908 = vsub.f32 1.0, %v2906
        %v2909 = vmax.f32 %v2907, 0.0
        %v2910 = vmax.f32 %v2908, 0.0
        %v2911 = vperm.slane %v2050, 0
        %v2912 = vperm.slane %v2053, 0
        %v2913 = vperm.slane %v2056, 0
        %v2914 = vperm.slane %v2059, 0
        %v2915 = vperm.slane %v2062, 0
        %v2916 = vperm.slane %v2065, 0
        %v2917 = vperm.slane %v2068, 0
        %v2918 = vperm.slane %v2071, 0
        %v2919 = vperm.slane %v2074, 0
        %v2920 = vmul.f32 %v2911, %v2909
        %v2921 = vmul.f32 %v2911, %v2910
        %v2922 = vmul.f32 %v2912, %v2909
        %v2923 = vmul.f32 %v2912, %v2910
        %v2924 = vmul.f32 %v2913, %v2909
        %v2925 = vmul.f32 %v2913, %v2910
        %v2926 = vmul.f32 %v2914, %v2909
        %v2927 = vmul.f32 %v2914, %v2910
        %v2928 = vmul.f32 %v2915, %v2909
        %v2929 = vmul.f32 %v2915, %v2910
        %v2930 = vmul.f32 %v2916, %v2909
        %v2931 = vmul.f32 %v2916, %v2910
        %v2932 = vmul.f32 %v2917, %v2909
        %v2933 = vmul.f32 %v2917, %v2910
        %v2934 = vmul.f32 %v2918, %v2909
        %v2935 = vmul.f32 %v2918, %v2910
        %v2936 = vmul.f32 %v2919, %v2909
        %v2937 = vmul.f32 %v2919, %v2910
        %v2938 = vadd.f32 %v2885, %v2920
        %v2939 = vadd.f32 %v2886, %v2921
        %v2940 = vadd.f32 %v2887, %v2922
        %v2941 = vadd.f32 %v2888, %v2923
        %v2942 = vadd.f32 %v2889, %v2924
        %v2943 = vadd.f32 %v2890, %v2925
        %v2944 = vadd.f32 %v2891, %v2926
        %v2945 = vadd.f32 %v2892, %v2927
        %v2946 = vadd.f32 %v2893, %v2928
        %v2947 = vadd.f32 %v2894, %v2929
        %v2948 = vadd.f32 %v2895, %v2930
        %v2949 = vadd.f32 %v2896, %v2931
        %v2950 = vadd.f32 %v2897, %v2932
        %v2951 = vadd.f32 %v2898, %v2933
        %v2952 = vadd.f32 %v2899, %v2934
        %v2953 = vadd.f32 %v2900, %v2935
        %v2954 = vadd.f32 %v2901, %v2936
        %v2955 = vadd.f32 %v2902, %v2937
        %v2956 = vsub.f32 %v414, 17.0
        %v2957 = vsub.f32 %v415, 17.0
        %v2958 = vand.u32 2147483647, %v2956
        %v2959 = vand.u32 2147483647, %v2957
        %v2960 = vsub.f32 1.0, %v2958
        %v2961 = vsub.f32 1.0, %v2959
        %v2962 = vmax.f32 %v2960, 0.0
        %v2963 = vmax.f32 %v2961, 0.0
        %v2964 = vperm.slane %v2050, 1
        %v2965 = vperm.slane %v2053, 1
        %v2966 = vperm.slane %v2056, 1
        %v2967 = vperm.slane %v2059, 1
        %v2968 = vperm.slane %v2062, 1
        %v2969 = vperm.slane %v2065, 1
        %v2970 = vperm.slane %v2068, 1
        %v2971 = vperm.slane %v2071, 1
        %v2972 = vperm.slane %v2074, 1
        %v2973 = vmul.f32 %v2964, %v2962
        %v2974 = vmul.f32 %v2964, %v2963
        %v2975 = vmul.f32 %v2965, %v2962
        %v2976 = vmul.f32 %v2965, %v2963
        %v2977 = vmul.f32 %v2966, %v2962
        %v2978 = vmul.f32 %v2966, %v2963
        %v2979 = vmul.f32 %v2967, %v2962
        %v2980 = vmul.f32 %v2967, %v2963
        %v2981 = vmul.f32 %v2968, %v2962
        %v2982 = vmul.f32 %v2968, %v2963
        %v2983 = vmul.f32 %v2969, %v2962
        %v2984 = vmul.f32 %v2969, %v2963
        %v2985 = vmul.f32 %v2970, %v2962
        %v2986 = vmul.f32 %v2970, %v2963
        %v2987 = vmul.f32 %v2971, %v2962
        %v2988 = vmul.f32 %v2971, %v2963
        %v2989 = vmul.f32 %v2972, %v2962
        %v2990 = vmul.f32 %v2972, %v2963
        %v2991 = vadd.f32 %v2938, %v2973
        %v2992 = vadd.f32 %v2939, %v2974
        %v2993 = vadd.f32 %v2940, %v2975
        %v2994 = vadd.f32 %v2941, %v2976
        %v2995 = vadd.f32 %v2942, %v2977
        %v2996 = vadd.f32 %v2943, %v2978
        %v2997 = vadd.f32 %v2944, %v2979
        %v2998 = vadd.f32 %v2945, %v2980
        %v2999 = vadd.f32 %v2946, %v2981
        %v3000 = vadd.f32 %v2947, %v2982
        %v3001 = vadd.f32 %v2948, %v2983
        %v3002 = vadd.f32 %v2949, %v2984
        %v3003 = vadd.f32 %v2950, %v2985
        %v3004 = vadd.f32 %v2951, %v2986
        %v3005 = vadd.f32 %v2952, %v2987
        %v3006 = vadd.f32 %v2953, %v2988
        %v3007 = vadd.f32 %v2954, %v2989
        %v3008 = vadd.f32 %v2955, %v2990
        %v3009 = vsub.f32 %v414, 18.0
        %v3010 = vsub.f32 %v415, 18.0
        %v3011 = vand.u32 2147483647, %v3009
        %v3012 = vand.u32 2147483647, %v3010
        %v3013 = vsub.f32 1.0, %v3011
        %v3014 = vsub.f32 1.0, %v3012
        %v3015 = vmax.f32 %v3013, 0.0
        %v3016 = vmax.f32 %v3014, 0.0
        %v3017 = vperm.slane %v2050, 2
        %v3018 = vperm.slane %v2053, 2
        %v3019 = vperm.slane %v2056, 2
        %v3020 = vperm.slane %v2059, 2
        %v3021 = vperm.slane %v2062, 2
        %v3022 = vperm.slane %v2065, 2
        %v3023 = vperm.slane %v2068, 2
        %v3024 = vperm.slane %v2071, 2
        %v3025 = vperm.slane %v2074, 2
        %v3026 = vmul.f32 %v3017, %v3015
        %v3027 = vmul.f32 %v3017, %v3016
        %v3028 = vmul.f32 %v3018, %v3015
        %v3029 = vmul.f32 %v3018, %v3016
        %v3030 = vmul.f32 %v3019, %v3015
        %v3031 = vmul.f32 %v3019, %v3016
        %v3032 = vmul.f32 %v3020, %v3015
        %v3033 = vmul.f32 %v3020, %v3016
        %v3034 = vmul.f32 %v3021, %v3015
        %v3035 = vmul.f32 %v3021, %v3016
        %v3036 = vmul.f32 %v3022, %v3015
        %v3037 = vmul.f32 %v3022, %v3016
        %v3038 = vmul.f32 %v3023, %v3015
        %v3039 = vmul.f32 %v3023, %v3016
        %v3040 = vmul.f32 %v3024, %v3015
        %v3041 = vmul.f32 %v3024, %v3016
        %v3042 = vmul.f32 %v3025, %v3015
        %v3043 = vmul.f32 %v3025, %v3016
        %v3044 = vadd.f32 %v2991, %v3026
        %v3045 = vadd.f32 %v2992, %v3027
        %v3046 = vadd.f32 %v2993, %v3028
        %v3047 = vadd.f32 %v2994, %v3029
        %v3048 = vadd.f32 %v2995, %v3030
        %v3049 = vadd.f32 %v2996, %v3031
        %v3050 = vadd.f32 %v2997, %v3032
        %v3051 = vadd.f32 %v2998, %v3033
        %v3052 = vadd.f32 %v2999, %v3034
        %v3053 = vadd.f32 %v3000, %v3035
        %v3054 = vadd.f32 %v3001, %v3036
        %v3055 = vadd.f32 %v3002, %v3037
        %v3056 = vadd.f32 %v3003, %v3038
        %v3057 = vadd.f32 %v3004, %v3039
        %v3058 = vadd.f32 %v3005, %v3040
        %v3059 = vadd.f32 %v3006, %v3041
        %v3060 = vadd.f32 %v3007, %v3042
        %v3061 = vadd.f32 %v3008, %v3043
        %v3062 = vsub.f32 %v414, 19.0
        %v3063 = vsub.f32 %v415, 19.0
        %v3064 = vand.u32 2147483647, %v3062
        %v3065 = vand.u32 2147483647, %v3063
        %v3066 = vsub.f32 1.0, %v3064
        %v3067 = vsub.f32 1.0, %v3065
        %v3068 = vmax.f32 %v3066, 0.0
        %v3069 = vmax.f32 %v3067, 0.0
        %v3070 = vperm.slane %v2050, 3
        %v3071 = vperm.slane %v2053, 3
        %v3072 = vperm.slane %v2056, 3
        %v3073 = vperm.slane %v2059, 3
        %v3074 = vperm.slane %v2062, 3
        %v3075 = vperm.slane %v2065, 3
        %v3076 = vperm.slane %v2068, 3
        %v3077 = vperm.slane %v2071, 3
        %v3078 = vperm.slane %v2074, 3
        %v3079 = vmul.f32 %v3070, %v3068
        %v3080 = vmul.f32 %v3070, %v3069
        %v3081 = vmul.f32 %v3071, %v3068
        %v3082 = vmul.f32 %v3071, %v3069
        %v3083 = vmul.f32 %v3072, %v3068
        %v3084 = vmul.f32 %v3072, %v3069
        %v3085 = vmul.f32 %v3073, %v3068
        %v3086 = vmul.f32 %v3073, %v3069
        %v3087 = vmul.f32 %v3074, %v3068
        %v3088 = vmul.f32 %v3074, %v3069
        %v3089 = vmul.f32 %v3075, %v3068
        %v3090 = vmul.f32 %v3075, %v3069
        %v3091 = vmul.f32 %v3076, %v3068
        %v3092 = vmul.f32 %v3076, %v3069
        %v3093 = vmul.f32 %v3077, %v3068
        %v3094 = vmul.f32 %v3077, %v3069
        %v3095 = vmul.f32 %v3078, %v3068
        %v3096 = vmul.f32 %v3078, %v3069
        %v3097 = vadd.f32 %v3044, %v3079
        %v3098 = vadd.f32 %v3045, %v3080
        %v3099 = vadd.f32 %v3046, %v3081
        %v3100 = vadd.f32 %v3047, %v3082
        %v3101 = vadd.f32 %v3048, %v3083
        %v3102 = vadd.f32 %v3049, %v3084
        %v3103 = vadd.f32 %v3050, %v3085
        %v3104 = vadd.f32 %v3051, %v3086
        %v3105 = vadd.f32 %v3052, %v3087
        %v3106 = vadd.f32 %v3053, %v3088
        %v3107 = vadd.f32 %v3054, %v3089
        %v3108 = vadd.f32 %v3055, %v3090
        %v3109 = vadd.f32 %v3056, %v3091
        %v3110 = vadd.f32 %v3057, %v3092
        %v3111 = vadd.f32 %v3058, %v3093
        %v3112 = vadd.f32 %v3059, %v3094
        %v3113 = vadd.f32 %v3060, %v3095
        %v3114 = vadd.f32 %v3061, %v3096
        %v3115 = vcvt.f32.s32.ties.to.even %v3097
        %v3116 = vcvt.f32.s32.ties.to.even %v3098
        %v3117 = vcvt.f32.s32.ties.to.even %v3099
        %v3118 = vcvt.f32.s32.ties.to.even %v3100
        %v3119 = vcvt.f32.s32.ties.to.even %v3101
        %v3120 = vcvt.f32.s32.ties.to.even %v3102
        %v3121 = vcvt.f32.s32.ties.to.even %v3103
        %v3122 = vcvt.f32.s32.ties.to.even %v3104
        %v3123 = vcvt.f32.s32.ties.to.even %v3105
        %v3124 = vcvt.f32.s32.ties.to.even %v3106
        %v3125 = vcvt.f32.s32.ties.to.even %v3107
        %v3126 = vcvt.f32.s32.ties.to.even %v3108
        %v3127 = vcvt.f32.s32.ties.to.even %v3109
        %v3128 = vcvt.f32.s32.ties.to.even %v3110
        %v3129 = vcvt.f32.s32.ties.to.even %v3111
        %v3130 = vcvt.f32.s32.ties.to.even %v3112
        %v3131 = vcvt.f32.s32.ties.to.even %v3113
        %v3132 = vcvt.f32.s32.ties.to.even %v3114
        %3133 = vst [vmem:[%s373] sm:$0xff] %v3115
        %3134 = vst [vmem:[%s373 + $0x8] sm:$0x1] %v3116
        %3135 = vst [vmem:[%s373 + $0x10] sm:$0xff] %v3117
        %3136 = vst [vmem:[%s373 + $0x18] sm:$0x1] %v3118
        %3137 = vst [vmem:[%s373 + $0x20] sm:$0xff] %v3119
        %3138 = vst [vmem:[%s373 + $0x28] sm:$0x1] %v3120
        %3139 = vst [vmem:[%s373 + $0x30] sm:$0xff] %v3121
        %3140 = vst [vmem:[%s373 + $0x38] sm:$0x1] %v3122
        %3141 = vst [vmem:[%s373 + $0x40] sm:$0xff] %v3123
        %3142 = vst [vmem:[%s373 + $0x48] sm:$0x1] %v3124
        %3143 = vst [vmem:[%s373 + $0x50] sm:$0xff] %v3125
        %3144 = vst [vmem:[%s373 + $0x58] sm:$0x1] %v3126
        %3145 = vst [vmem:[%s373 + $0x60] sm:$0xff] %v3127
        %3146 = vst [vmem:[%s373 + $0x68] sm:$0x1] %v3128
        %3147 = vst [vmem:[%s373 + $0x70] sm:$0xff] %v3129
        %3148 = vst [vmem:[%s373 + $0x78] sm:$0x1] %v3130
        %3149 = vst [vmem:[%s373 + $0x80] sm:$0xff] %v3131
        %3150 = vst [vmem:[%s373 + $0x88] sm:$0x1] %v3132
        %s3151 = sand.u32 %s73, 1
        %s3152 = sand.u32 %s73, 1
        %s3153 = smul.addr %s3152, 144
        %s3154 = scalar_lea.vmem [#allocation3], %s3153
        // Predicated region
        $region67: #{crop.1} parent=61 // pred_check
          %p3155 = pneg %p83
        $region68: #{crop.1} parent=61 // pred_check_branch
          %3157 = sbr.rel (%p3155) target = $region70
        $region69: #{crop.1} parent=61 // pred_region
          %s3158 = smul.addr %s13, 8
          %s3159 = scalar_lea.vmem %s2, %s3158
          // Predicated region
          $region71: #{crop.1} parent=69 // pred_check
            _
          $region72: #{crop.1} parent=69 // pred_check_branch
            %3161 = sbr.rel (0) target = $region74
          $region73: #{crop.1} parent=69 // pred_region
            // Predicated region
            $region75: #{crop.1} parent=73 // pred_check
              _
            $region76: #{crop.1} parent=73 // pred_check_branch
              %3163 = sbr.rel (0) target = $region78
            $region77: #{crop.1} parent=73 // pred_region
              // Predicated region
              $region90: #{crop.1} parent=77 // pred_check
                _
              $region91: #{crop.1} parent=77 // pred_check_branch
                %3213 = sbr.rel (0) target = $region93
              $region92: #{crop.1} parent=77 // pred_region
                loop: start=0, step=1, limit=1
                $region94: #{crop.1} parent=92 // loop_pre_header
                  _
                $region95: #{crop.1} parent=92 // loop_header
                  %s3215 = sphi 0, %s3219
                  %p3216 = scmp.ge.s32.totalorder %s3215, 1
                  %s3220 = sphi %s3154, %s3154
                  %s3221 = sphi %s3159, %s3159
                $region96: #{crop.1} parent=92 // loop_header_branch
                  %3218 = sbr.rel (%p3216) target = $region100
                $region97: #{crop.1} parent=92 // loop_body
                  %v3222 = vld [vmem:[%s3220] sm:$0xff]
                  %3223 = vst [vmem:[%s3221] sm:$0xff] %v3222
                  %v3224 = vld [vmem:[%s3220 + $0x8] sm:$0xff]
                  %3225 = vst [vmem:[%s3221 + $0x10] sm:$0xff] %v3224
                  %v3226 = vld [vmem:[%s3220 + $0x10] sm:$0xff]
                  %3227 = vst [vmem:[%s3221 + $0x20] sm:$0xff] %v3226
                  %v3228 = vld [vmem:[%s3220 + $0x18] sm:$0xff]
                  %3229 = vst [vmem:[%s3221 + $0x30] sm:$0xff] %v3228
                  %v3230 = vld [vmem:[%s3220 + $0x20] sm:$0xff]
                  %3231 = vst [vmem:[%s3221 + $0x40] sm:$0xff] %v3230
                  %v3232 = vld [vmem:[%s3220 + $0x28] sm:$0xff]
                  %3233 = vst [vmem:[%s3221 + $0x50] sm:$0xff] %v3232
                  %v3234 = vld [vmem:[%s3220 + $0x30] sm:$0xff]
                  %3235 = vst [vmem:[%s3221 + $0x60] sm:$0xff] %v3234
                  %v3236 = vld [vmem:[%s3220 + $0x38] sm:$0xff]
                  %3237 = vst [vmem:[%s3221 + $0x70] sm:$0xff] %v3236
                  %v3238 = vld [vmem:[%s3220 + $0x40] sm:$0xff]
                  %3239 = vst [vmem:[%s3221 + $0x80] sm:$0xff] %v3238
                  %v3240 = vld [vmem:[%s3220 + $0x48] sm:$0xff]
                  %3241 = vst [vmem:[%s3221 + $0x90] sm:$0xff] %v3240
                  %v3242 = vld [vmem:[%s3220 + $0x50] sm:$0xff]
                  %3243 = vst [vmem:[%s3221 + $0xa0] sm:$0xff] %v3242
                  %v3244 = vld [vmem:[%s3220 + $0x58] sm:$0xff]
                  %3245 = vst [vmem:[%s3221 + $0xb0] sm:$0xff] %v3244
                  %v3246 = vld [vmem:[%s3220 + $0x60] sm:$0xff]
                  %3247 = vst [vmem:[%s3221 + $0xc0] sm:$0xff] %v3246
                  %v3248 = vld [vmem:[%s3220 + $0x68] sm:$0xff]
                  %3249 = vst [vmem:[%s3221 + $0xd0] sm:$0xff] %v3248
                  %v3250 = vld [vmem:[%s3220 + $0x70] sm:$0xff]
                  %3251 = vst [vmem:[%s3221 + $0xe0] sm:$0xff] %v3250
                  %v3252 = vld [vmem:[%s3220 + $0x78] sm:$0xff]
                  %3253 = vst [vmem:[%s3221 + $0xf0] sm:$0xff] %v3252
                  %v3254 = vld [vmem:[%s3220 + $0x80] sm:$0xff]
                  %3255 = vst [vmem:[%s3221 + $0x100] sm:$0xff] %v3254
                  %v3256 = vld [vmem:[%s3220 + $0x88] sm:$0xff]
                  %3257 = vst [vmem:[%s3221 + $0x110] sm:$0xff] %v3256
                $region98: #{crop.1} parent=92 // loop_footer
                  %s3219 = sadd.s32 1, %s3215
                $region99: #{crop.1} parent=92 // loop_footer_branch
                  %3214 = sbr.rel target = $region95
                $region100: #{crop.1} parent=92 // loop_exit
                  _
              $region93: #{crop.1} parent=77 // pred_fallthru
                _
              // Predicated region
              $region101: #{crop.1} parent=77 // pred_check
                _
              $region102: #{crop.1} parent=77 // pred_check_branch
                %3259 = sbr.rel target = $region104
              $region103: #{crop.1} parent=77 // pred_region
                _
              $region104: #{crop.1} parent=77 // pred_fallthru
                _
            $region78: #{crop.1} parent=73 // pred_fallthru
              _
            // Predicated region
            $region79: #{crop.1} parent=73 // pred_check
              _
            $region80: #{crop.1} parent=73 // pred_check_branch
              %3165 = sbr.rel target = $region82
            $region81: #{crop.1} parent=73 // pred_region
              %s3167 = ssub.s32 256, 1
              loop: start=0, step=1, limit=1
              $region83: #{crop.1} parent=81 // loop_pre_header
                _
              $region84: #{crop.1} parent=81 // loop_header
                %s3169 = sphi 0, %s3173
                %p3170 = scmp.ge.s32.totalorder %s3169, 1
                %s3174 = sphi %s3154, %s3154
                %s3175 = sphi %s3159, %s3159
              $region85: #{crop.1} parent=81 // loop_header_branch
                %3172 = sbr.rel (%p3170) target = $region89
              $region86: #{crop.1} parent=81 // loop_body
                %v3176 = vld [vmem:[%s3174] sm:%s3167]
                %3177 = vst [vmem:[%s3175] sm:%s3167] %v3176
                %v3178 = vld [vmem:[%s3174 + $0x8] sm:%s3167]
                %3179 = vst [vmem:[%s3175 + $0x10] sm:%s3167] %v3178
                %v3180 = vld [vmem:[%s3174 + $0x10] sm:%s3167]
                %3181 = vst [vmem:[%s3175 + $0x20] sm:%s3167] %v3180
                %v3182 = vld [vmem:[%s3174 + $0x18] sm:%s3167]
                %3183 = vst [vmem:[%s3175 + $0x30] sm:%s3167] %v3182
                %v3184 = vld [vmem:[%s3174 + $0x20] sm:%s3167]
                %3185 = vst [vmem:[%s3175 + $0x40] sm:%s3167] %v3184
                %v3186 = vld [vmem:[%s3174 + $0x28] sm:%s3167]
                %3187 = vst [vmem:[%s3175 + $0x50] sm:%s3167] %v3186
                %v3188 = vld [vmem:[%s3174 + $0x30] sm:%s3167]
                %3189 = vst [vmem:[%s3175 + $0x60] sm:%s3167] %v3188
                %v3190 = vld [vmem:[%s3174 + $0x38] sm:%s3167]
                %3191 = vst [vmem:[%s3175 + $0x70] sm:%s3167] %v3190
                %v3192 = vld [vmem:[%s3174 + $0x40] sm:%s3167]
                %3193 = vst [vmem:[%s3175 + $0x80] sm:%s3167] %v3192
                %v3194 = vld [vmem:[%s3174 + $0x48] sm:%s3167]
                %3195 = vst [vmem:[%s3175 + $0x90] sm:%s3167] %v3194
                %v3196 = vld [vmem:[%s3174 + $0x50] sm:%s3167]
                %3197 = vst [vmem:[%s3175 + $0xa0] sm:%s3167] %v3196
                %v3198 = vld [vmem:[%s3174 + $0x58] sm:%s3167]
                %3199 = vst [vmem:[%s3175 + $0xb0] sm:%s3167] %v3198
                %v3200 = vld [vmem:[%s3174 + $0x60] sm:%s3167]
                %3201 = vst [vmem:[%s3175 + $0xc0] sm:%s3167] %v3200
                %v3202 = vld [vmem:[%s3174 + $0x68] sm:%s3167]
                %3203 = vst [vmem:[%s3175 + $0xd0] sm:%s3167] %v3202
                %v3204 = vld [vmem:[%s3174 + $0x70] sm:%s3167]
                %3205 = vst [vmem:[%s3175 + $0xe0] sm:%s3167] %v3204
                %v3206 = vld [vmem:[%s3174 + $0x78] sm:%s3167]
                %3207 = vst [vmem:[%s3175 + $0xf0] sm:%s3167] %v3206
                %v3208 = vld [vmem:[%s3174 + $0x80] sm:%s3167]
                %3209 = vst [vmem:[%s3175 + $0x100] sm:%s3167] %v3208
                %v3210 = vld [vmem:[%s3174 + $0x88] sm:%s3167]
                %3211 = vst [vmem:[%s3175 + $0x110] sm:%s3167] %v3210
              $region87: #{crop.1} parent=81 // loop_footer
                %s3173 = sadd.s32 1, %s3169
              $region88: #{crop.1} parent=81 // loop_footer_branch
                %3168 = sbr.rel target = $region84
              $region89: #{crop.1} parent=81 // loop_exit
                _
            $region82: #{crop.1} parent=73 // pred_fallthru
              _
          $region74: #{crop.1} parent=69 // pred_fallthru
            _
          %3260 = vnop
        $region70: #{crop.1} parent=61 // pred_fallthru
          _
      $region62: #{crop.1} parent=5 // pred_fallthru
        _
      %p3261 = scmp.le.s32.totalorder 2, %s8
      // Predicated region
      $region105: #{crop.1} parent=5 // pred_check
        %p3262 = pneg %p3261
      $region106: #{crop.1} parent=5 // pred_check_branch
        %3264 = sbr.rel (%p3262) target = $region108
      $region107: #{crop.1} parent=5 // pred_region
        %s3265 = ssub.s32 %s8, 2
        // Predicated region
        $region109: #{crop.1} parent=107 // pred_check
          %p3266 = pneg %p89
        $region110: #{crop.1} parent=107 // pred_check_branch
          %3268 = sbr.rel (%p3266) target = $region112
        $region111: #{crop.1} parent=107 // pred_region
          %s3269 = sand.u32 %s74, 1
          %s3270 = sand.u32 %s74, 1
          %s3271 = smul.addr %s3270, 144
          %s3272 = scalar_lea.vmem [#allocation3], %s3271
        $region112: #{crop.1} parent=107 // pred_fallthru
          _
      $region108: #{crop.1} parent=5 // pred_fallthru
        _
    $region6: #{crop.1} parent=1 // loop_footer
      %s12 = sadd.s32 1, %s8
    $region7: #{crop.1} parent=1 // loop_footer_branch
      %7 = sbr.rel target = $region3
    $region8: #{crop.1} parent=1 // loop_exit
      _

</llo_original>
